<compile_context>
chip_gen: v7x
topology: tpu7x:2x2x1
jax: 0.10.0
libtpu: 0.0.40
codegen_flags: <defaults>
</compile_context>

<pallas_src>
import jax
import jax.numpy as jnp
import numpy as np
from jax.experimental import pallas as pl
from jax.experimental.pallas import tpu as pltpu


# ---------------------------------------------------------------------------
# Pallas kernel
# ---------------------------------------------------------------------------
def make_sbca_kernel(H, W, C, BP):
    """Fused SBCA forward for BP packed batch elements, spatial (H, W), nFeat_=C."""
    HW = H * W
    L = BP * HW  # lane width per grid step (BP images concatenated along lanes)

    def kernel(x_ref, mask_ref,
               w1_ref, b1_ref, a1_ref,
               w2_ref, b2_ref, a2_ref,
               w3_ref, b3_ref,
               w1x1_ref, b1x1_ref,
               w4_ref, b4_ref, a4_ref,
               out_ref,
               patch_scr):
        f32 = jnp.float32

        # --- one 3x3 tap: a single lane-roll of the whole block + one mask mul.
        # The roll is circular over the BP concatenated images, but every pixel
        # whose source falls outside its own image (including the positions that
        # wrap across an image boundary) is zeroed by the precomputed mask.
        def shift(v, t):
            dy, dx = divmod(t, 3)
            off = (dy - 1) * W + (dx - 1)
            if off == 0:
                return v
            rolled = pltpu.roll(v, (-off) % L, axis=1)
            return rolled * mask_ref[t:t + 1, :]

        def prelu(v, a):
            return jnp.maximum(v, 0.0) + a * jnp.minimum(v, 0.0)

        def sigmoid(v):
            # 0.5*(tanh(x/2)+1): a single EUP transcendental, no VALU reciprocal.
            return 0.5 * (jnp.tanh(0.5 * v) + 1.0)

        # --- C->C 3x3 conv on the MXU: build the (9*C, L) im2col patch block in
        # VMEM (9 full-slab tap stores, one full-block read), one jnp.dot.
        # Read-before-write ordering between the two conv calls is enforced by
        # the value dependency (comb depends on the dot that consumed the first
        # patch fill) and by Pallas' program-order ref semantics.
        # TODO(synk): at production C, cast patches + weights to bf16 here for
        # the v6e/v7x MXU (keep f32 accumulation) — skipped at C=4 / f32 tols.
        def conv_cc(feat, w_ref, b_col):
            for t in range(9):
                patch_scr[t * C:(t + 1) * C, :] = shift(feat, t)
            return jnp.dot(w_ref[...], patch_scr[...],
                           preferred_element_type=f32) + b_col

        # --- hoisted scalar / small-vector loads (once per grid step) ---------
        a1 = a1_ref[0]
        a2 = a2_ref[0]
        a4 = a4_ref[0]
        b1x1 = b1x1_ref[0]

        xin = x_ref[0]                                   # (2, L): row0=lr, row1=hr

        # --- sbca_conv1 / sbca_conv2 : Conv2d(1 -> C, 3x3) + PReLU ------------
        # cin == 1, so channel mixing is just 9 (C,1)x(1,L) broadcast FMAs per
        # conv; the 9 tap shifts are shared between lr and hr (stacked input).
        lr_acc = jnp.zeros((C, L), f32)
        hr_acc = jnp.zeros((C, L), f32)
        for t in range(9):
            s = shift(xin, t)                            # (2, L)
            lr_acc = lr_acc + w1_ref[:, t:t + 1] * s[0:1, :]
            hr_acc = hr_acc + w2_ref[:, t:t + 1] * s[1:2, :]
        lr_fea = prelu(lr_acc + b1_ref[...], a1)         # (C, L)
        hr_fea = prelu(hr_acc + b2_ref[...], a2)         # (C, L)

        # --- sbca_conv1x1(hr_fea) : Conv2d(C -> 1, 1x1) + Sigmoid -------------
        s1 = sigmoid(jnp.sum(hr_fea * w1x1_ref[...], axis=0, keepdims=True) + b1x1)

        # --- sbca_conv3(lr_fea) : Conv2d(C -> C, 3x3) + Sigmoid ---------------
        s3 = sigmoid(conv_cc(lr_fea, w3_ref, b3_ref[...]))

        # --- cross-attention mix + sbca_conv4 : Conv2d(C -> C, 3x3) + PReLU ---
        comb = lr_fea * s1 + hr_fea * s3
        res = prelu(conv_cc(comb, w4_ref, b4_ref[...]), a4)   # (C, L)

        # --- lane-aligned stores: one (C, HW) slab per packed batch element ---
        for bp in range(BP):
            out_ref[0, bp] = res[:, bp * HW:(bp + 1) * HW]

    return kernel


# ---------------------------------------------------------------------------
# Host-side helpers
# ---------------------------------------------------------------------------
def _build_tap_masks(H, W, BP):
    """(9, BP*H*W) float 0/1 masks: tap t = dy*3+dx is valid iff the source
    pixel (y+dy-1, x+dx-1) lies inside the image (tiled over BP packed images)."""
    ys, xs = np.meshgrid(np.arange(H), np.arange(W), indexing="ij")
    masks = np.empty((9, BP * H * W), np.float32)
    for t in range(9):
        dy, dx = divmod(t, 3)
        sy, sx = ys + dy - 1, xs + dx - 1
        m = ((sy >= 0) & (sy < H) & (sx >= 0) & (sx < W)).astype(np.float32)
        masks[t] = np.tile(m.reshape(-1), BP)
    return jnp.asarray(masks)


def sbca_forward(lr, hr, params):
    """lr, hr: (B, 1, H, W) float32 NCHW.  Returns (B, nFeat_, H, W)."""
    B, cin, H, W = lr.shape
    assert cin == 1, "SBCA takes single-band (1-channel) inputs"
    assert hr.shape == lr.shape
    assert H >= 3 and W >= 3, "roll+mask 'same' padding assumes H, W >= 3"
    C = params["w1"].shape[0]
    HW = H * W

    # Fold 2 batch elements per grid step (packed along the lane axis) only when
    # that still leaves >= 2 "parallel" grid steps for the two v7x TensorCores.
    BP = 2 if (B % 2 == 0 and B >= 4) else 1
    G = B // BP
    L = BP * HW

    # (G, 2, L): row 0 = lr, row 1 = hr; BP consecutive batch elements side by
    # side along lanes (free reshapes + one cheap stack on the host side).
    x = jnp.stack([lr.reshape(G, L), hr.reshape(G, L)], axis=1)

    masks = _build_tap_masks(H, W, BP)                   # (9, L) f32

    # Weight layouts for the kernel:
    #  * 1->C convs: (C, 9), column = dy*3+dx
    #  * C->C convs: (C, 9*C), column = (dy*3+dx)*C + cin (tap-major, matching
    #    the im2col patch row order t*C + cin)
    #  * biases / 1x1 weights: (C, 1) columns; PReLU alphas / 1x1 bias in SMEM.
    w1 = params["w1"].reshape(C, 9)
    w2 = params["w2"].reshape(C, 9)
    w3 = params["w3"].transpose(0, 2, 3, 1).reshape(C, 9 * C)
    w4 = params["w4"].transpose(0, 2, 3, 1).reshape(C, 9 * C)
    b1 = params["b1"].reshape(C, 1)
    b2 = params["b2"].reshape(C, 1)
    b3 = params["b3"].reshape(C, 1)
    b4 = params["b4"].reshape(C, 1)
    w1x1 = params["w1x1"].reshape(C, 1)

    smem = pl.BlockSpec(memory_space=pltpu.MemorySpace.SMEM)

    def full(shape):
        return pl.BlockSpec(shape, lambda g: (0,) * len(shape))

    kernel = make_sbca_kernel(H, W, C, BP)

    # TODO(synk): for large H*W add a row-tile grid axis (1-row halo) sized so
    # the feature planes + (9C, L_tile) patch block stay well under v7x's
    # 64 MiB VMEM; at 16x16 everything fits trivially.
    out = pl.pallas_call(
        kernel,
        out_shape=jax.ShapeDtypeStruct((G, BP, C, HW), jnp.float32),
        grid=(G,),
        in_specs=[
            pl.BlockSpec((1, 2, L), lambda g: (g, 0, 0)),        # lr/hr stack
            full((9, L)),                                        # tap masks
            full((C, 9)), full((C, 1)), smem,                    # w1, b1, a1
            full((C, 9)), full((C, 1)), smem,                    # w2, b2, a2
            full((C, 9 * C)), full((C, 1)),                      # w3, b3
            full((C, 1)), smem,                                  # w1x1, b1x1
            full((C, 9 * C)), full((C, 1)), smem,                # w4, b4, a4
        ],
        out_specs=pl.BlockSpec((1, BP, C, HW), lambda g: (g, 0, 0, 0)),
        scratch_shapes=[pltpu.VMEM((9 * C, L), jnp.float32)],    # im2col patches
        compiler_params=pltpu.CompilerParams(
            dimension_semantics=("parallel",),
            vmem_limit_bytes=32 * 1024 * 1024),
    )(x, masks,
      w1, b1, params["a1"],
      w2, b2, params["a2"],
      w3, b3,
      w1x1, params["b1x1"],
      w4, b4, params["a4"])

    return out.reshape(B, C, H, W)


# ---------------------------------------------------------------------------
# Deterministic parameter initialization (PyTorch-like uniform fan-in init)
# ---------------------------------------------------------------------------
def init_params(key, nFeat):
    C = nFeat // 2
    ks = jax.random.split(key, 10)

    def u(k, shape, fan_in):
        bound = 1.0 / float(fan_in) ** 0.5
        return jax.random.uniform(k, shape, jnp.float32, -bound, bound)

    return dict(
        w1=u(ks[0], (C, 1, 3, 3), 9),      b1=u(ks[1], (C,), 9),
        a1=jnp.array([0.25], jnp.float32),                       # nn.PReLU() default
        w2=u(ks[2], (C, 1, 3, 3), 9),      b2=u(ks[3], (C,), 9),
        a2=jnp.array([0.25], jnp.float32),
        w3=u(ks[4], (C, C, 3, 3), 9 * C),  b3=u(ks[5], (C,), 9 * C),
        w4=u(ks[6], (C, C, 3, 3), 9 * C),  b4=u(ks[7], (C,), 9 * C),
        a4=jnp.array([0.25], jnp.float32),
        w1x1=u(ks[8], (1, C, 1, 1), C),    b1x1=u(ks[9], (1,), C),
    )


# ---------------------------------------------------------------------------
# Pure-JAX reference (for verification only)
# ---------------------------------------------------------------------------
def _conv_ref(x, w, b, pad):
    y = jax.lax.conv_general_dilated(
        x, w, window_strides=(1, 1), padding=[(pad, pad), (pad, pad)],
        dimension_numbers=("NCHW", "OIHW", "NCHW"))
    return y + b[None, :, None, None]


def _prelu_ref(x, a):
    return jnp.maximum(x, 0.0) + a * jnp.minimum(x, 0.0)


def sbca_reference(lr, hr, p):
    lr_fea = _prelu_ref(_conv_ref(lr, p["w1"], p["b1"], 1), p["a1"][0])
    hr_fea = _prelu_ref(_conv_ref(hr, p["w2"], p["b2"], 1), p["a2"][0])
    s1 = jax.nn.sigmoid(_conv_ref(hr_fea, p["w1x1"], p["b1x1"], 0))
    s3 = jax.nn.sigmoid(_conv_ref(lr_fea, p["w3"], p["b3"], 1))
    comb = lr_fea * s1 + hr_fea * s3
    return _prelu_ref(_conv_ref(comb, p["w4"], p["b4"], 1), p["a4"][0])


# ---------------------------------------------------------------------------
if __name__ == "__main__":
    key = jax.random.PRNGKey(0)
    k_lr, k_hr, k_p = jax.random.split(key, 3)

    nFeat = 8                 # -> nFeat_ = 4 internal channels
    B, H, W = 4, 16, 16       # 4 batch elements -> 2 packed "parallel" grid steps

    lr = jax.random.normal(k_lr, (B, 1, H, W), jnp.float32)
    hr = jax.random.normal(k_hr, (B, 1, H, W), jnp.float32)
    params = init_params(k_p, nFeat)

    out = jax.block_until_ready(sbca_forward(lr, hr, params))
    assert out.shape == (B, nFeat // 2, H, W)

    ref = sbca_reference(lr, hr, params)
    np.testing.assert_allclose(np.asarray(out), np.asarray(ref),
                               rtol=2e-4, atol=2e-4)
    print("KERNEL_OK")
</pallas_src>

<mosaic_0001>
module attributes {stable_mosaic.version = 11 : i64} {
  func.func @kernel(%arg0: i32, %arg1: memref<1x2x512xf32, #tpu.memory_space<vmem>>, %arg2: memref<9x512xf32, #tpu.memory_space<vmem>>, %arg3: memref<4x9xf32, #tpu.memory_space<vmem>>, %arg4: memref<4x1xf32, #tpu.memory_space<vmem>>, %arg5: memref<1xf32, #tpu.memory_space<smem>>, %arg6: memref<4x9xf32, #tpu.memory_space<vmem>>, %arg7: memref<4x1xf32, #tpu.memory_space<vmem>>, %arg8: memref<1xf32, #tpu.memory_space<smem>>, %arg9: memref<4x36xf32, #tpu.memory_space<vmem>>, %arg10: memref<4x1xf32, #tpu.memory_space<vmem>>, %arg11: memref<4x1xf32, #tpu.memory_space<vmem>>, %arg12: memref<1xf32, #tpu.memory_space<smem>>, %arg13: memref<4x36xf32, #tpu.memory_space<vmem>>, %arg14: memref<4x1xf32, #tpu.memory_space<vmem>>, %arg15: memref<1xf32, #tpu.memory_space<smem>>, %arg16: memref<1x2x4x256xf32, #tpu.memory_space<vmem>>, %arg17: memref<36x512xf32, #tpu.memory_space<vmem>>) attributes {dimension_semantics = [#tpu.dimension_semantics<parallel>], iteration_bounds = array<i64: 2>, scalar_prefetch = 0 : i64, scratch_operands = 1 : i64, tpu.core_type = #tpu.core_type<tc>, window_params = [{transform_indices = @transform_0, window_bounds = array<i64: 1, 2, 512>}, {pipeline_mode = #tpu.pipeline_mode<synchronous>, transform_indices = @transform_1, window_bounds = array<i64: 9, 512>}, {pipeline_mode = #tpu.pipeline_mode<synchronous>, transform_indices = @transform_2, window_bounds = array<i64: 4, 9>}, {pipeline_mode = #tpu.pipeline_mode<synchronous>, transform_indices = @transform_3, window_bounds = array<i64: 4, 1>}, {transform_indices = @transform_4, window_bounds = array<i64: 1>}, {pipeline_mode = #tpu.pipeline_mode<synchronous>, transform_indices = @transform_5, window_bounds = array<i64: 4, 9>}, {pipeline_mode = #tpu.pipeline_mode<synchronous>, transform_indices = @transform_6, window_bounds = array<i64: 4, 1>}, {transform_indices = @transform_7, window_bounds = array<i64: 1>}, {pipeline_mode = #tpu.pipeline_mode<synchronous>, transform_indices = @transform_8, window_bounds = array<i64: 4, 36>}, {pipeline_mode = #tpu.pipeline_mode<synchronous>, transform_indices = @transform_9, window_bounds = array<i64: 4, 1>}, {pipeline_mode = #tpu.pipeline_mode<synchronous>, transform_indices = @transform_10, window_bounds = array<i64: 4, 1>}, {transform_indices = @transform_11, window_bounds = array<i64: 1>}, {pipeline_mode = #tpu.pipeline_mode<synchronous>, transform_indices = @transform_12, window_bounds = array<i64: 4, 36>}, {pipeline_mode = #tpu.pipeline_mode<synchronous>, transform_indices = @transform_13, window_bounds = array<i64: 4, 1>}, {transform_indices = @transform_14, window_bounds = array<i64: 1>}, {transform_indices = @transform_15, window_bounds = array<i64: 1, 2, 4, 256>}]} {
    %c0 = arith.constant 0 : index
    %0 = memref.load %arg5[%c0] : memref<1xf32, #tpu.memory_space<smem>>
    %c0_0 = arith.constant 0 : index
    %1 = memref.load %arg8[%c0_0] : memref<1xf32, #tpu.memory_space<smem>>
    %c0_1 = arith.constant 0 : index
    %2 = memref.load %arg15[%c0_1] : memref<1xf32, #tpu.memory_space<smem>>
    %c0_2 = arith.constant 0 : index
    %3 = memref.load %arg12[%c0_2] : memref<1xf32, #tpu.memory_space<smem>>
    %c0_3 = arith.constant 0 : index
    %c0_4 = arith.constant 0 : index
    %c0_5 = arith.constant 0 : index
    %4 = vector.load %arg1[%c0_3, %c0_4, %c0_5] : memref<1x2x512xf32, #tpu.memory_space<vmem>>, vector<1x2x512xf32>
    %5 = vector.shape_cast %4 : vector<1x2x512xf32> to vector<2x512xf32>
    %cst = arith.constant 0.000000e+00 : f32
    %6 = vector.broadcast %cst : f32 to vector<4x512xf32>
    %cst_6 = arith.constant 0.000000e+00 : f32
    %7 = vector.broadcast %cst_6 : f32 to vector<4x512xf32>
    %c17_i32 = arith.constant 17 : i32
    %8 = tpu.dynamic_rotate %5 by %c17_i32 dim 1 : vector<2x512xf32>, i32 -> vector<2x512xf32>
    %c0_7 = arith.constant 0 : index
    %c0_8 = arith.constant 0 : index
    %9 = vector.load %arg2[%c0_7, %c0_8] : memref<9x512xf32, #tpu.memory_space<vmem>>, vector<1x512xf32>
    %10 = vector.broadcast %9 : vector<1x512xf32> to vector<2x512xf32>
    %11 = arith.mulf %8, %10 : vector<2x512xf32>
    %c0_9 = arith.constant 0 : index
    %c0_10 = arith.constant 0 : index
    %12 = vector.load %arg3[%c0_9, %c0_10] : memref<4x9xf32, #tpu.memory_space<vmem>>, vector<4x1xf32>
    %13 = vector.extract_strided_slice %11 {offsets = [0, 0], sizes = [1, 512], strides = [1, 1]} : vector<2x512xf32> to vector<1x512xf32>
    %14 = vector.broadcast %12 : vector<4x1xf32> to vector<4x512xf32>
    %15 = vector.broadcast %13 : vector<1x512xf32> to vector<4x512xf32>
    %16 = arith.mulf %14, %15 : vector<4x512xf32>
    %17 = arith.addf %6, %16 : vector<4x512xf32>
    %c0_11 = arith.constant 0 : index
    %c0_12 = arith.constant 0 : index
    %18 = vector.load %arg6[%c0_11, %c0_12] : memref<4x9xf32, #tpu.memory_space<vmem>>, vector<4x1xf32>
    %19 = vector.extract_strided_slice %11 {offsets = [1, 0], sizes = [1, 512], strides = [1, 1]} : vector<2x512xf32> to vector<1x512xf32>
    %20 = vector.broadcast %18 : vector<4x1xf32> to vector<4x512xf32>
    %21 = vector.broadcast %19 : vector<1x512xf32> to vector<4x512xf32>
    %22 = arith.mulf %20, %21 : vector<4x512xf32>
    %23 = arith.addf %7, %22 : vector<4x512xf32>
    %c16_i32 = arith.constant 16 : i32
    %24 = tpu.dynamic_rotate %5 by %c16_i32 dim 1 : vector<2x512xf32>, i32 -> vector<2x512xf32>
    %c1 = arith.constant 1 : index
    %c0_13 = arith.constant 0 : index
    %25 = vector.load %arg2[%c1, %c0_13] : memref<9x512xf32, #tpu.memory_space<vmem>>, vector<1x512xf32>
    %26 = vector.broadcast %25 : vector<1x512xf32> to vector<2x512xf32>
    %27 = arith.mulf %24, %26 : vector<2x512xf32>
    %c0_14 = arith.constant 0 : index
    %c1_15 = arith.constant 1 : index
    %28 = vector.load %arg3[%c0_14, %c1_15] : memref<4x9xf32, #tpu.memory_space<vmem>>, vector<4x1xf32>
    %29 = vector.extract_strided_slice %27 {offsets = [0, 0], sizes = [1, 512], strides = [1, 1]} : vector<2x512xf32> to vector<1x512xf32>
    %30 = vector.broadcast %28 : vector<4x1xf32> to vector<4x512xf32>
    %31 = vector.broadcast %29 : vector<1x512xf32> to vector<4x512xf32>
    %32 = arith.mulf %30, %31 : vector<4x512xf32>
    %33 = arith.addf %17, %32 : vector<4x512xf32>
    %c0_16 = arith.constant 0 : index
    %c1_17 = arith.constant 1 : index
    %34 = vector.load %arg6[%c0_16, %c1_17] : memref<4x9xf32, #tpu.memory_space<vmem>>, vector<4x1xf32>
    %35 = vector.extract_strided_slice %27 {offsets = [1, 0], sizes = [1, 512], strides = [1, 1]} : vector<2x512xf32> to vector<1x512xf32>
    %36 = vector.broadcast %34 : vector<4x1xf32> to vector<4x512xf32>
    %37 = vector.broadcast %35 : vector<1x512xf32> to vector<4x512xf32>
    %38 = arith.mulf %36, %37 : vector<4x512xf32>
    %39 = arith.addf %23, %38 : vector<4x512xf32>
    %c15_i32 = arith.constant 15 : i32
    %40 = tpu.dynamic_rotate %5 by %c15_i32 dim 1 : vector<2x512xf32>, i32 -> vector<2x512xf32>
    %c2 = arith.constant 2 : index
    %c0_18 = arith.constant 0 : index
    %41 = vector.load %arg2[%c2, %c0_18] : memref<9x512xf32, #tpu.memory_space<vmem>>, vector<1x512xf32>
    %42 = vector.broadcast %41 : vector<1x512xf32> to vector<2x512xf32>
    %43 = arith.mulf %40, %42 : vector<2x512xf32>
    %c0_19 = arith.constant 0 : index
    %c2_20 = arith.constant 2 : index
    %44 = vector.load %arg3[%c0_19, %c2_20] : memref<4x9xf32, #tpu.memory_space<vmem>>, vector<4x1xf32>
    %45 = vector.extract_strided_slice %43 {offsets = [0, 0], sizes = [1, 512], strides = [1, 1]} : vector<2x512xf32> to vector<1x512xf32>
    %46 = vector.broadcast %44 : vector<4x1xf32> to vector<4x512xf32>
    %47 = vector.broadcast %45 : vector<1x512xf32> to vector<4x512xf32>
    %48 = arith.mulf %46, %47 : vector<4x512xf32>
    %49 = arith.addf %33, %48 : vector<4x512xf32>
    %c0_21 = arith.constant 0 : index
    %c2_22 = arith.constant 2 : index
    %50 = vector.load %arg6[%c0_21, %c2_22] : memref<4x9xf32, #tpu.memory_space<vmem>>, vector<4x1xf32>
    %51 = vector.extract_strided_slice %43 {offsets = [1, 0], sizes = [1, 512], strides = [1, 1]} : vector<2x512xf32> to vector<1x512xf32>
    %52 = vector.broadcast %50 : vector<4x1xf32> to vector<4x512xf32>
    %53 = vector.broadcast %51 : vector<1x512xf32> to vector<4x512xf32>
    %54 = arith.mulf %52, %53 : vector<4x512xf32>
    %55 = arith.addf %39, %54 : vector<4x512xf32>
    %c1_i32 = arith.constant 1 : i32
    %56 = tpu.dynamic_rotate %5 by %c1_i32 dim 1 : vector<2x512xf32>, i32 -> vector<2x512xf32>
    %c3 = arith.constant 3 : index
    %c0_23 = arith.constant 0 : index
    %57 = vector.load %arg2[%c3, %c0_23] : memref<9x512xf32, #tpu.memory_space<vmem>>, vector<1x512xf32>
    %58 = vector.broadcast %57 : vector<1x512xf32> to vector<2x512xf32>
    %59 = arith.mulf %56, %58 : vector<2x512xf32>
    %c0_24 = arith.constant 0 : index
    %c3_25 = arith.constant 3 : index
    %60 = vector.load %arg3[%c0_24, %c3_25] : memref<4x9xf32, #tpu.memory_space<vmem>>, vector<4x1xf32>
    %61 = vector.extract_strided_slice %59 {offsets = [0, 0], sizes = [1, 512], strides = [1, 1]} : vector<2x512xf32> to vector<1x512xf32>
    %62 = vector.broadcast %60 : vector<4x1xf32> to vector<4x512xf32>
    %63 = vector.broadcast %61 : vector<1x512xf32> to vector<4x512xf32>
    %64 = arith.mulf %62, %63 : vector<4x512xf32>
    %65 = arith.addf %49, %64 : vector<4x512xf32>
    %c0_26 = arith.constant 0 : index
    %c3_27 = arith.constant 3 : index
    %66 = vector.load %arg6[%c0_26, %c3_27] : memref<4x9xf32, #tpu.memory_space<vmem>>, vector<4x1xf32>
    %67 = vector.extract_strided_slice %59 {offsets = [1, 0], sizes = [1, 512], strides = [1, 1]} : vector<2x512xf32> to vector<1x512xf32>
    %68 = vector.broadcast %66 : vector<4x1xf32> to vector<4x512xf32>
    %69 = vector.broadcast %67 : vector<1x512xf32> to vector<4x512xf32>
    %70 = arith.mulf %68, %69 : vector<4x512xf32>
    %71 = arith.addf %55, %70 : vector<4x512xf32>
    %c0_28 = arith.constant 0 : index
    %c4 = arith.constant 4 : index
    %72 = vector.load %arg3[%c0_28, %c4] : memref<4x9xf32, #tpu.memory_space<vmem>>, vector<4x1xf32>
    %73 = vector.extract_strided_slice %5 {offsets = [0, 0], sizes = [1, 512], strides = [1, 1]} : vector<2x512xf32> to vector<1x512xf32>
    %74 = vector.broadcast %72 : vector<4x1xf32> to vector<4x512xf32>
    %75 = vector.broadcast %73 : vector<1x512xf32> to vector<4x512xf32>
    %76 = arith.mulf %74, %75 : vector<4x512xf32>
    %77 = arith.addf %65, %76 : vector<4x512xf32>
    %c0_29 = arith.constant 0 : index
    %c4_30 = arith.constant 4 : index
    %78 = vector.load %arg6[%c0_29, %c4_30] : memref<4x9xf32, #tpu.memory_space<vmem>>, vector<4x1xf32>
    %79 = vector.extract_strided_slice %5 {offsets = [1, 0], sizes = [1, 512], strides = [1, 1]} : vector<2x512xf32> to vector<1x512xf32>
    %80 = vector.broadcast %78 : vector<4x1xf32> to vector<4x512xf32>
    %81 = vector.broadcast %79 : vector<1x512xf32> to vector<4x512xf32>
    %82 = arith.mulf %80, %81 : vector<4x512xf32>
    %83 = arith.addf %71, %82 : vector<4x512xf32>
    %c511_i32 = arith.constant 511 : i32
    %84 = tpu.dynamic_rotate %5 by %c511_i32 dim 1 : vector<2x512xf32>, i32 -> vector<2x512xf32>
    %c5 = arith.constant 5 : index
    %c0_31 = arith.constant 0 : index
    %85 = vector.load %arg2[%c5, %c0_31] : memref<9x512xf32, #tpu.memory_space<vmem>>, vector<1x512xf32>
    %86 = vector.broadcast %85 : vector<1x512xf32> to vector<2x512xf32>
    %87 = arith.mulf %84, %86 : vector<2x512xf32>
    %c0_32 = arith.constant 0 : index
    %c5_33 = arith.constant 5 : index
    %88 = vector.load %arg3[%c0_32, %c5_33] : memref<4x9xf32, #tpu.memory_space<vmem>>, vector<4x1xf32>
    %89 = vector.extract_strided_slice %87 {offsets = [0, 0], sizes = [1, 512], strides = [1, 1]} : vector<2x512xf32> to vector<1x512xf32>
    %90 = vector.broadcast %88 : vector<4x1xf32> to vector<4x512xf32>
    %91 = vector.broadcast %89 : vector<1x512xf32> to vector<4x512xf32>
    %92 = arith.mulf %90, %91 : vector<4x512xf32>
    %93 = arith.addf %77, %92 : vector<4x512xf32>
    %c0_34 = arith.constant 0 : index
    %c5_35 = arith.constant 5 : index
    %94 = vector.load %arg6[%c0_34, %c5_35] : memref<4x9xf32, #tpu.memory_space<vmem>>, vector<4x1xf32>
    %95 = vector.extract_strided_slice %87 {offsets = [1, 0], sizes = [1, 512], strides = [1, 1]} : vector<2x512xf32> to vector<1x512xf32>
    %96 = vector.broadcast %94 : vector<4x1xf32> to vector<4x512xf32>
    %97 = vector.broadcast %95 : vector<1x512xf32> to vector<4x512xf32>
    %98 = arith.mulf %96, %97 : vector<4x512xf32>
    %99 = arith.addf %83, %98 : vector<4x512xf32>
    %c497_i32 = arith.constant 497 : i32
    %100 = tpu.dynamic_rotate %5 by %c497_i32 dim 1 : vector<2x512xf32>, i32 -> vector<2x512xf32>
    %c6 = arith.constant 6 : index
    %c0_36 = arith.constant 0 : index
    %101 = vector.load %arg2[%c6, %c0_36] : memref<9x512xf32, #tpu.memory_space<vmem>>, vector<1x512xf32>
    %102 = vector.broadcast %101 : vector<1x512xf32> to vector<2x512xf32>
    %103 = arith.mulf %100, %102 : vector<2x512xf32>
    %c0_37 = arith.constant 0 : index
    %c6_38 = arith.constant 6 : index
    %104 = vector.load %arg3[%c0_37, %c6_38] : memref<4x9xf32, #tpu.memory_space<vmem>>, vector<4x1xf32>
    %105 = vector.extract_strided_slice %103 {offsets = [0, 0], sizes = [1, 512], strides = [1, 1]} : vector<2x512xf32> to vector<1x512xf32>
    %106 = vector.broadcast %104 : vector<4x1xf32> to vector<4x512xf32>
    %107 = vector.broadcast %105 : vector<1x512xf32> to vector<4x512xf32>
    %108 = arith.mulf %106, %107 : vector<4x512xf32>
    %109 = arith.addf %93, %108 : vector<4x512xf32>
    %c0_39 = arith.constant 0 : index
    %c6_40 = arith.constant 6 : index
    %110 = vector.load %arg6[%c0_39, %c6_40] : memref<4x9xf32, #tpu.memory_space<vmem>>, vector<4x1xf32>
    %111 = vector.extract_strided_slice %103 {offsets = [1, 0], sizes = [1, 512], strides = [1, 1]} : vector<2x512xf32> to vector<1x512xf32>
    %112 = vector.broadcast %110 : vector<4x1xf32> to vector<4x512xf32>
    %113 = vector.broadcast %111 : vector<1x512xf32> to vector<4x512xf32>
    %114 = arith.mulf %112, %113 : vector<4x512xf32>
    %115 = arith.addf %99, %114 : vector<4x512xf32>
    %c496_i32 = arith.constant 496 : i32
    %116 = tpu.dynamic_rotate %5 by %c496_i32 dim 1 : vector<2x512xf32>, i32 -> vector<2x512xf32>
    %c7 = arith.constant 7 : index
    %c0_41 = arith.constant 0 : index
    %117 = vector.load %arg2[%c7, %c0_41] : memref<9x512xf32, #tpu.memory_space<vmem>>, vector<1x512xf32>
    %118 = vector.broadcast %117 : vector<1x512xf32> to vector<2x512xf32>
    %119 = arith.mulf %116, %118 : vector<2x512xf32>
    %c0_42 = arith.constant 0 : index
    %c7_43 = arith.constant 7 : index
    %120 = vector.load %arg3[%c0_42, %c7_43] : memref<4x9xf32, #tpu.memory_space<vmem>>, vector<4x1xf32>
    %121 = vector.extract_strided_slice %119 {offsets = [0, 0], sizes = [1, 512], strides = [1, 1]} : vector<2x512xf32> to vector<1x512xf32>
    %122 = vector.broadcast %120 : vector<4x1xf32> to vector<4x512xf32>
    %123 = vector.broadcast %121 : vector<1x512xf32> to vector<4x512xf32>
    %124 = arith.mulf %122, %123 : vector<4x512xf32>
    %125 = arith.addf %109, %124 : vector<4x512xf32>
    %c0_44 = arith.constant 0 : index
    %c7_45 = arith.constant 7 : index
    %126 = vector.load %arg6[%c0_44, %c7_45] : memref<4x9xf32, #tpu.memory_space<vmem>>, vector<4x1xf32>
    %127 = vector.extract_strided_slice %119 {offsets = [1, 0], sizes = [1, 512], strides = [1, 1]} : vector<2x512xf32> to vector<1x512xf32>
    %128 = vector.broadcast %126 : vector<4x1xf32> to vector<4x512xf32>
    %129 = vector.broadcast %127 : vector<1x512xf32> to vector<4x512xf32>
    %130 = arith.mulf %128, %129 : vector<4x512xf32>
    %131 = arith.addf %115, %130 : vector<4x512xf32>
    %c495_i32 = arith.constant 495 : i32
    %132 = tpu.dynamic_rotate %5 by %c495_i32 dim 1 : vector<2x512xf32>, i32 -> vector<2x512xf32>
    %c8 = arith.constant 8 : index
    %c0_46 = arith.constant 0 : index
    %133 = vector.load %arg2[%c8, %c0_46] : memref<9x512xf32, #tpu.memory_space<vmem>>, vector<1x512xf32>
    %134 = vector.broadcast %133 : vector<1x512xf32> to vector<2x512xf32>
    %135 = arith.mulf %132, %134 : vector<2x512xf32>
    %c0_47 = arith.constant 0 : index
    %c8_48 = arith.constant 8 : index
    %136 = vector.load %arg3[%c0_47, %c8_48] : memref<4x9xf32, #tpu.memory_space<vmem>>, vector<4x1xf32>
    %137 = vector.extract_strided_slice %135 {offsets = [0, 0], sizes = [1, 512], strides = [1, 1]} : vector<2x512xf32> to vector<1x512xf32>
    %138 = vector.broadcast %136 : vector<4x1xf32> to vector<4x512xf32>
    %139 = vector.broadcast %137 : vector<1x512xf32> to vector<4x512xf32>
    %140 = arith.mulf %138, %139 : vector<4x512xf32>
    %141 = arith.addf %125, %140 : vector<4x512xf32>
    %c0_49 = arith.constant 0 : index
    %c8_50 = arith.constant 8 : index
    %142 = vector.load %arg6[%c0_49, %c8_50] : memref<4x9xf32, #tpu.memory_space<vmem>>, vector<4x1xf32>
    %143 = vector.extract_strided_slice %135 {offsets = [1, 0], sizes = [1, 512], strides = [1, 1]} : vector<2x512xf32> to vector<1x512xf32>
    %144 = vector.broadcast %142 : vector<4x1xf32> to vector<4x512xf32>
    %145 = vector.broadcast %143 : vector<1x512xf32> to vector<4x512xf32>
    %146 = arith.mulf %144, %145 : vector<4x512xf32>
    %147 = arith.addf %131, %146 : vector<4x512xf32>
    %c0_51 = arith.constant 0 : index
    %c0_52 = arith.constant 0 : index
    %148 = vector.load %arg4[%c0_51, %c0_52] : memref<4x1xf32, #tpu.memory_space<vmem>>, vector<4x1xf32>
    %149 = vector.broadcast %148 : vector<4x1xf32> to vector<4x512xf32>
    %150 = arith.addf %141, %149 : vector<4x512xf32>
    %cst_53 = arith.constant 0.000000e+00 : f32
    %151 = vector.broadcast %cst_53 : f32 to vector<4x512xf32>
    %152 = arith.maximumf %150, %151 : vector<4x512xf32>
    %cst_54 = arith.constant 0.000000e+00 : f32
    %153 = vector.broadcast %cst_54 : f32 to vector<4x512xf32>
    %154 = arith.minimumf %150, %153 : vector<4x512xf32>
    %155 = vector.broadcast %0 : f32 to vector<4x512xf32>
    %156 = arith.mulf %155, %154 : vector<4x512xf32>
    %157 = arith.addf %152, %156 : vector<4x512xf32>
    %c0_55 = arith.constant 0 : index
    %c0_56 = arith.constant 0 : index
    %158 = vector.load %arg7[%c0_55, %c0_56] : memref<4x1xf32, #tpu.memory_space<vmem>>, vector<4x1xf32>
    %159 = vector.broadcast %158 : vector<4x1xf32> to vector<4x512xf32>
    %160 = arith.addf %147, %159 : vector<4x512xf32>
    %cst_57 = arith.constant 0.000000e+00 : f32
    %161 = vector.broadcast %cst_57 : f32 to vector<4x512xf32>
    %162 = arith.maximumf %160, %161 : vector<4x512xf32>
    %cst_58 = arith.constant 0.000000e+00 : f32
    %163 = vector.broadcast %cst_58 : f32 to vector<4x512xf32>
    %164 = arith.minimumf %160, %163 : vector<4x512xf32>
    %165 = vector.broadcast %1 : f32 to vector<4x512xf32>
    %166 = arith.mulf %165, %164 : vector<4x512xf32>
    %167 = arith.addf %162, %166 : vector<4x512xf32>
    %c0_59 = arith.constant 0 : index
    %c0_60 = arith.constant 0 : index
    %168 = vector.load %arg11[%c0_59, %c0_60] : memref<4x1xf32, #tpu.memory_space<vmem>>, vector<4x1xf32>
    %169 = vector.broadcast %168 : vector<4x1xf32> to vector<4x512xf32>
    %170 = arith.mulf %167, %169 : vector<4x512xf32>
    %cst_61 = arith.constant dense<0.000000e+00> : vector<512xf32>
    %171 = vector.multi_reduction <add>, %170, %cst_61 [0] : vector<4x512xf32> to vector<512xf32>
    %172 = vector.shape_cast %171 : vector<512xf32> to vector<1x512xf32>
    %173 = vector.broadcast %3 : f32 to vector<1x512xf32>
    %174 = arith.addf %172, %173 : vector<1x512xf32>
    %cst_62 = arith.constant 5.000000e-01 : f32
    %175 = vector.broadcast %cst_62 : f32 to vector<1x512xf32>
    %176 = arith.mulf %175, %174 : vector<1x512xf32>
    %177 = math.tanh %176 : vector<1x512xf32>
    %cst_63 = arith.constant 1.000000e+00 : f32
    %178 = vector.broadcast %cst_63 : f32 to vector<1x512xf32>
    %179 = arith.addf %177, %178 : vector<1x512xf32>
    %cst_64 = arith.constant 5.000000e-01 : f32
    %180 = vector.broadcast %cst_64 : f32 to vector<1x512xf32>
    %181 = arith.mulf %180, %179 : vector<1x512xf32>
    %c0_65 = arith.constant 0 : index
    %c0_66 = arith.constant 0 : index
    %182 = vector.load %arg10[%c0_65, %c0_66] : memref<4x1xf32, #tpu.memory_space<vmem>>, vector<4x1xf32>
    %c17_i32_67 = arith.constant 17 : i32
    %183 = tpu.dynamic_rotate %157 by %c17_i32_67 dim 1 : vector<4x512xf32>, i32 -> vector<4x512xf32>
    %c0_68 = arith.constant 0 : index
    %c0_69 = arith.constant 0 : index
    %184 = vector.load %arg2[%c0_68, %c0_69] : memref<9x512xf32, #tpu.memory_space<vmem>>, vector<1x512xf32>
    %185 = vector.broadcast %184 : vector<1x512xf32> to vector<4x512xf32>
    %186 = arith.mulf %183, %185 : vector<4x512xf32>
    %c0_70 = arith.constant 0 : index
    %c0_71 = arith.constant 0 : index
    %187 = vector.load %arg17[%c0_70, %c0_71] : memref<36x512xf32, #tpu.memory_space<vmem>>, vector<4x512xf32>
    tpu.vector_store %arg17[%c0_70, %c0_71], %186 {strides = array<i32>} : memref<36x512xf32, #tpu.memory_space<vmem>>, vector<4x512xf32>,
    %c16_i32_72 = arith.constant 16 : i32
    %188 = tpu.dynamic_rotate %157 by %c16_i32_72 dim 1 : vector<4x512xf32>, i32 -> vector<4x512xf32>
    %c1_73 = arith.constant 1 : index
    %c0_74 = arith.constant 0 : index
    %189 = vector.load %arg2[%c1_73, %c0_74] : memref<9x512xf32, #tpu.memory_space<vmem>>, vector<1x512xf32>
    %190 = vector.broadcast %189 : vector<1x512xf32> to vector<4x512xf32>
    %191 = arith.mulf %188, %190 : vector<4x512xf32>
    %c4_75 = arith.constant 4 : index
    %c0_76 = arith.constant 0 : index
    %192 = vector.load %arg17[%c4_75, %c0_76] : memref<36x512xf32, #tpu.memory_space<vmem>>, vector<4x512xf32>
    tpu.vector_store %arg17[%c4_75, %c0_76], %191 {strides = array<i32>} : memref<36x512xf32, #tpu.memory_space<vmem>>, vector<4x512xf32>,
    %c15_i32_77 = arith.constant 15 : i32
    %193 = tpu.dynamic_rotate %157 by %c15_i32_77 dim 1 : vector<4x512xf32>, i32 -> vector<4x512xf32>
    %c2_78 = arith.constant 2 : index
    %c0_79 = arith.constant 0 : index
    %194 = vector.load %arg2[%c2_78, %c0_79] : memref<9x512xf32, #tpu.memory_space<vmem>>, vector<1x512xf32>
    %195 = vector.broadcast %194 : vector<1x512xf32> to vector<4x512xf32>
    %196 = arith.mulf %193, %195 : vector<4x512xf32>
    %c8_80 = arith.constant 8 : index
    %c0_81 = arith.constant 0 : index
    %197 = vector.load %arg17[%c8_80, %c0_81] : memref<36x512xf32, #tpu.memory_space<vmem>>, vector<4x512xf32>
    tpu.vector_store %arg17[%c8_80, %c0_81], %196 {strides = array<i32>} : memref<36x512xf32, #tpu.memory_space<vmem>>, vector<4x512xf32>,
    %c1_i32_82 = arith.constant 1 : i32
    %198 = tpu.dynamic_rotate %157 by %c1_i32_82 dim 1 : vector<4x512xf32>, i32 -> vector<4x512xf32>
    %c3_83 = arith.constant 3 : index
    %c0_84 = arith.constant 0 : index
    %199 = vector.load %arg2[%c3_83, %c0_84] : memref<9x512xf32, #tpu.memory_space<vmem>>, vector<1x512xf32>
    %200 = vector.broadcast %199 : vector<1x512xf32> to vector<4x512xf32>
    %201 = arith.mulf %198, %200 : vector<4x512xf32>
    %c12 = arith.constant 12 : index
    %c0_85 = arith.constant 0 : index
    %202 = vector.load %arg17[%c12, %c0_85] : memref<36x512xf32, #tpu.memory_space<vmem>>, vector<4x512xf32>
    tpu.vector_store %arg17[%c12, %c0_85], %201 {strides = array<i32>} : memref<36x512xf32, #tpu.memory_space<vmem>>, vector<4x512xf32>,
    %c16 = arith.constant 16 : index
    %c0_86 = arith.constant 0 : index
    %203 = vector.load %arg17[%c16, %c0_86] : memref<36x512xf32, #tpu.memory_space<vmem>>, vector<4x512xf32>
    tpu.vector_store %arg17[%c16, %c0_86], %157 {strides = array<i32>} : memref<36x512xf32, #tpu.memory_space<vmem>>, vector<4x512xf32>,
    %c511_i32_87 = arith.constant 511 : i32
    %204 = tpu.dynamic_rotate %157 by %c511_i32_87 dim 1 : vector<4x512xf32>, i32 -> vector<4x512xf32>
    %c5_88 = arith.constant 5 : index
    %c0_89 = arith.constant 0 : index
    %205 = vector.load %arg2[%c5_88, %c0_89] : memref<9x512xf32, #tpu.memory_space<vmem>>, vector<1x512xf32>
    %206 = vector.broadcast %205 : vector<1x512xf32> to vector<4x512xf32>
    %207 = arith.mulf %204, %206 : vector<4x512xf32>
    %c20 = arith.constant 20 : index
    %c0_90 = arith.constant 0 : index
    %208 = vector.load %arg17[%c20, %c0_90] : memref<36x512xf32, #tpu.memory_space<vmem>>, vector<4x512xf32>
    tpu.vector_store %arg17[%c20, %c0_90], %207 {strides = array<i32>} : memref<36x512xf32, #tpu.memory_space<vmem>>, vector<4x512xf32>,
    %c497_i32_91 = arith.constant 497 : i32
    %209 = tpu.dynamic_rotate %157 by %c497_i32_91 dim 1 : vector<4x512xf32>, i32 -> vector<4x512xf32>
    %c6_92 = arith.constant 6 : index
    %c0_93 = arith.constant 0 : index
    %210 = vector.load %arg2[%c6_92, %c0_93] : memref<9x512xf32, #tpu.memory_space<vmem>>, vector<1x512xf32>
    %211 = vector.broadcast %210 : vector<1x512xf32> to vector<4x512xf32>
    %212 = arith.mulf %209, %211 : vector<4x512xf32>
    %c24 = arith.constant 24 : index
    %c0_94 = arith.constant 0 : index
    %213 = vector.load %arg17[%c24, %c0_94] : memref<36x512xf32, #tpu.memory_space<vmem>>, vector<4x512xf32>
    tpu.vector_store %arg17[%c24, %c0_94], %212 {strides = array<i32>} : memref<36x512xf32, #tpu.memory_space<vmem>>, vector<4x512xf32>,
    %c496_i32_95 = arith.constant 496 : i32
    %214 = tpu.dynamic_rotate %157 by %c496_i32_95 dim 1 : vector<4x512xf32>, i32 -> vector<4x512xf32>
    %c7_96 = arith.constant 7 : index
    %c0_97 = arith.constant 0 : index
    %215 = vector.load %arg2[%c7_96, %c0_97] : memref<9x512xf32, #tpu.memory_space<vmem>>, vector<1x512xf32>
    %216 = vector.broadcast %215 : vector<1x512xf32> to vector<4x512xf32>
    %217 = arith.mulf %214, %216 : vector<4x512xf32>
    %c28 = arith.constant 28 : index
    %c0_98 = arith.constant 0 : index
    %218 = vector.load %arg17[%c28, %c0_98] : memref<36x512xf32, #tpu.memory_space<vmem>>, vector<4x512xf32>
    tpu.vector_store %arg17[%c28, %c0_98], %217 {strides = array<i32>} : memref<36x512xf32, #tpu.memory_space<vmem>>, vector<4x512xf32>,
    %c495_i32_99 = arith.constant 495 : i32
    %219 = tpu.dynamic_rotate %157 by %c495_i32_99 dim 1 : vector<4x512xf32>, i32 -> vector<4x512xf32>
    %c8_100 = arith.constant 8 : index
    %c0_101 = arith.constant 0 : index
    %220 = vector.load %arg2[%c8_100, %c0_101] : memref<9x512xf32, #tpu.memory_space<vmem>>, vector<1x512xf32>
    %221 = vector.broadcast %220 : vector<1x512xf32> to vector<4x512xf32>
    %222 = arith.mulf %219, %221 : vector<4x512xf32>
    %c32 = arith.constant 32 : index
    %c0_102 = arith.constant 0 : index
    %223 = vector.load %arg17[%c32, %c0_102] : memref<36x512xf32, #tpu.memory_space<vmem>>, vector<4x512xf32>
    tpu.vector_store %arg17[%c32, %c0_102], %222 {strides = array<i32>} : memref<36x512xf32, #tpu.memory_space<vmem>>, vector<4x512xf32>,
    %c0_103 = arith.constant 0 : index
    %c0_104 = arith.constant 0 : index
    %224 = vector.load %arg9[%c0_103, %c0_104] : memref<4x36xf32, #tpu.memory_space<vmem>>, vector<4x36xf32>
    %c0_105 = arith.constant 0 : index
    %c0_106 = arith.constant 0 : index
    %225 = vector.load %arg17[%c0_105, %c0_106] : memref<36x512xf32, #tpu.memory_space<vmem>>, vector<36x512xf32>
    %cst_107 = arith.constant dense<0.000000e+00> : vector<4x512xf32>
    %226 = tpu.matmul %224, %225, %cst_107 {dimension_numbers = #tpu.dot_dimension_numbers<[1], [0], [0], [1], [0, 0, 1, 1], [], []>} : vector<4x36xf32>, vector<36x512xf32>, vector<4x512xf32> -> vector<4x512xf32>
    %227 = vector.broadcast %182 : vector<4x1xf32> to vector<4x512xf32>
    %228 = arith.addf %226, %227 : vector<4x512xf32>
    %cst_108 = arith.constant 5.000000e-01 : f32
    %229 = vector.broadcast %cst_108 : f32 to vector<4x512xf32>
    %230 = arith.mulf %229, %228 : vector<4x512xf32>
    %231 = math.tanh %230 : vector<4x512xf32>
    %cst_109 = arith.constant 1.000000e+00 : f32
    %232 = vector.broadcast %cst_109 : f32 to vector<4x512xf32>
    %233 = arith.addf %231, %232 : vector<4x512xf32>
    %cst_110 = arith.constant 5.000000e-01 : f32
    %234 = vector.broadcast %cst_110 : f32 to vector<4x512xf32>
    %235 = arith.mulf %234, %233 : vector<4x512xf32>
    %236 = vector.broadcast %181 : vector<1x512xf32> to vector<4x512xf32>
    %237 = arith.mulf %157, %236 : vector<4x512xf32>
    %238 = arith.mulf %167, %235 : vector<4x512xf32>
    %239 = arith.addf %237, %238 : vector<4x512xf32>
    %c0_111 = arith.constant 0 : index
    %c0_112 = arith.constant 0 : index
    %240 = vector.load %arg14[%c0_111, %c0_112] : memref<4x1xf32, #tpu.memory_space<vmem>>, vector<4x1xf32>
    %c17_i32_113 = arith.constant 17 : i32
    %241 = tpu.dynamic_rotate %239 by %c17_i32_113 dim 1 : vector<4x512xf32>, i32 -> vector<4x512xf32>
    %c0_114 = arith.constant 0 : index
    %c0_115 = arith.constant 0 : index
    %242 = vector.load %arg2[%c0_114, %c0_115] : memref<9x512xf32, #tpu.memory_space<vmem>>, vector<1x512xf32>
    %243 = vector.broadcast %242 : vector<1x512xf32> to vector<4x512xf32>
    %244 = arith.mulf %241, %243 : vector<4x512xf32>
    %c0_116 = arith.constant 0 : index
    %c0_117 = arith.constant 0 : index
    %245 = vector.load %arg17[%c0_116, %c0_117] : memref<36x512xf32, #tpu.memory_space<vmem>>, vector<4x512xf32>
    tpu.vector_store %arg17[%c0_116, %c0_117], %244 {strides = array<i32>} : memref<36x512xf32, #tpu.memory_space<vmem>>, vector<4x512xf32>,
    %c16_i32_118 = arith.constant 16 : i32
    %246 = tpu.dynamic_rotate %239 by %c16_i32_118 dim 1 : vector<4x512xf32>, i32 -> vector<4x512xf32>
    %c1_119 = arith.constant 1 : index
    %c0_120 = arith.constant 0 : index
    %247 = vector.load %arg2[%c1_119, %c0_120] : memref<9x512xf32, #tpu.memory_space<vmem>>, vector<1x512xf32>
    %248 = vector.broadcast %247 : vector<1x512xf32> to vector<4x512xf32>
    %249 = arith.mulf %246, %248 : vector<4x512xf32>
    %c4_121 = arith.constant 4 : index
    %c0_122 = arith.constant 0 : index
    %250 = vector.load %arg17[%c4_121, %c0_122] : memref<36x512xf32, #tpu.memory_space<vmem>>, vector<4x512xf32>
    tpu.vector_store %arg17[%c4_121, %c0_122], %249 {strides = array<i32>} : memref<36x512xf32, #tpu.memory_space<vmem>>, vector<4x512xf32>,
    %c15_i32_123 = arith.constant 15 : i32
    %251 = tpu.dynamic_rotate %239 by %c15_i32_123 dim 1 : vector<4x512xf32>, i32 -> vector<4x512xf32>
    %c2_124 = arith.constant 2 : index
    %c0_125 = arith.constant 0 : index
    %252 = vector.load %arg2[%c2_124, %c0_125] : memref<9x512xf32, #tpu.memory_space<vmem>>, vector<1x512xf32>
    %253 = vector.broadcast %252 : vector<1x512xf32> to vector<4x512xf32>
    %254 = arith.mulf %251, %253 : vector<4x512xf32>
    %c8_126 = arith.constant 8 : index
    %c0_127 = arith.constant 0 : index
    %255 = vector.load %arg17[%c8_126, %c0_127] : memref<36x512xf32, #tpu.memory_space<vmem>>, vector<4x512xf32>
    tpu.vector_store %arg17[%c8_126, %c0_127], %254 {strides = array<i32>} : memref<36x512xf32, #tpu.memory_space<vmem>>, vector<4x512xf32>,
    %c1_i32_128 = arith.constant 1 : i32
    %256 = tpu.dynamic_rotate %239 by %c1_i32_128 dim 1 : vector<4x512xf32>, i32 -> vector<4x512xf32>
    %c3_129 = arith.constant 3 : index
    %c0_130 = arith.constant 0 : index
    %257 = vector.load %arg2[%c3_129, %c0_130] : memref<9x512xf32, #tpu.memory_space<vmem>>, vector<1x512xf32>
    %258 = vector.broadcast %257 : vector<1x512xf32> to vector<4x512xf32>
    %259 = arith.mulf %256, %258 : vector<4x512xf32>
    %c12_131 = arith.constant 12 : index
    %c0_132 = arith.constant 0 : index
    %260 = vector.load %arg17[%c12_131, %c0_132] : memref<36x512xf32, #tpu.memory_space<vmem>>, vector<4x512xf32>
    tpu.vector_store %arg17[%c12_131, %c0_132], %259 {strides = array<i32>} : memref<36x512xf32, #tpu.memory_space<vmem>>, vector<4x512xf32>,
    %c16_133 = arith.constant 16 : index
    %c0_134 = arith.constant 0 : index
    %261 = vector.load %arg17[%c16_133, %c0_134] : memref<36x512xf32, #tpu.memory_space<vmem>>, vector<4x512xf32>
    tpu.vector_store %arg17[%c16_133, %c0_134], %239 {strides = array<i32>} : memref<36x512xf32, #tpu.memory_space<vmem>>, vector<4x512xf32>,
    %c511_i32_135 = arith.constant 511 : i32
    %262 = tpu.dynamic_rotate %239 by %c511_i32_135 dim 1 : vector<4x512xf32>, i32 -> vector<4x512xf32>
    %c5_136 = arith.constant 5 : index
    %c0_137 = arith.constant 0 : index
    %263 = vector.load %arg2[%c5_136, %c0_137] : memref<9x512xf32, #tpu.memory_space<vmem>>, vector<1x512xf32>
    %264 = vector.broadcast %263 : vector<1x512xf32> to vector<4x512xf32>
    %265 = arith.mulf %262, %264 : vector<4x512xf32>
    %c20_138 = arith.constant 20 : index
    %c0_139 = arith.constant 0 : index
    %266 = vector.load %arg17[%c20_138, %c0_139] : memref<36x512xf32, #tpu.memory_space<vmem>>, vector<4x512xf32>
    tpu.vector_store %arg17[%c20_138, %c0_139], %265 {strides = array<i32>} : memref<36x512xf32, #tpu.memory_space<vmem>>, vector<4x512xf32>,
    %c497_i32_140 = arith.constant 497 : i32
    %267 = tpu.dynamic_rotate %239 by %c497_i32_140 dim 1 : vector<4x512xf32>, i32 -> vector<4x512xf32>
    %c6_141 = arith.constant 6 : index
    %c0_142 = arith.constant 0 : index
    %268 = vector.load %arg2[%c6_141, %c0_142] : memref<9x512xf32, #tpu.memory_space<vmem>>, vector<1x512xf32>
    %269 = vector.broadcast %268 : vector<1x512xf32> to vector<4x512xf32>
    %270 = arith.mulf %267, %269 : vector<4x512xf32>
    %c24_143 = arith.constant 24 : index
    %c0_144 = arith.constant 0 : index
    %271 = vector.load %arg17[%c24_143, %c0_144] : memref<36x512xf32, #tpu.memory_space<vmem>>, vector<4x512xf32>
    tpu.vector_store %arg17[%c24_143, %c0_144], %270 {strides = array<i32>} : memref<36x512xf32, #tpu.memory_space<vmem>>, vector<4x512xf32>,
    %c496_i32_145 = arith.constant 496 : i32
    %272 = tpu.dynamic_rotate %239 by %c496_i32_145 dim 1 : vector<4x512xf32>, i32 -> vector<4x512xf32>
    %c7_146 = arith.constant 7 : index
    %c0_147 = arith.constant 0 : index
    %273 = vector.load %arg2[%c7_146, %c0_147] : memref<9x512xf32, #tpu.memory_space<vmem>>, vector<1x512xf32>
    %274 = vector.broadcast %273 : vector<1x512xf32> to vector<4x512xf32>
    %275 = arith.mulf %272, %274 : vector<4x512xf32>
    %c28_148 = arith.constant 28 : index
    %c0_149 = arith.constant 0 : index
    %276 = vector.load %arg17[%c28_148, %c0_149] : memref<36x512xf32, #tpu.memory_space<vmem>>, vector<4x512xf32>
    tpu.vector_store %arg17[%c28_148, %c0_149], %275 {strides = array<i32>} : memref<36x512xf32, #tpu.memory_space<vmem>>, vector<4x512xf32>,
    %c495_i32_150 = arith.constant 495 : i32
    %277 = tpu.dynamic_rotate %239 by %c495_i32_150 dim 1 : vector<4x512xf32>, i32 -> vector<4x512xf32>
    %c8_151 = arith.constant 8 : index
    %c0_152 = arith.constant 0 : index
    %278 = vector.load %arg2[%c8_151, %c0_152] : memref<9x512xf32, #tpu.memory_space<vmem>>, vector<1x512xf32>
    %279 = vector.broadcast %278 : vector<1x512xf32> to vector<4x512xf32>
    %280 = arith.mulf %277, %279 : vector<4x512xf32>
    %c32_153 = arith.constant 32 : index
    %c0_154 = arith.constant 0 : index
    %281 = vector.load %arg17[%c32_153, %c0_154] : memref<36x512xf32, #tpu.memory_space<vmem>>, vector<4x512xf32>
    tpu.vector_store %arg17[%c32_153, %c0_154], %280 {strides = array<i32>} : memref<36x512xf32, #tpu.memory_space<vmem>>, vector<4x512xf32>,
    %c0_155 = arith.constant 0 : index
    %c0_156 = arith.constant 0 : index
    %282 = vector.load %arg13[%c0_155, %c0_156] : memref<4x36xf32, #tpu.memory_space<vmem>>, vector<4x36xf32>
    %c0_157 = arith.constant 0 : index
    %c0_158 = arith.constant 0 : index
    %283 = vector.load %arg17[%c0_157, %c0_158] : memref<36x512xf32, #tpu.memory_space<vmem>>, vector<36x512xf32>
    %cst_159 = arith.constant dense<0.000000e+00> : vector<4x512xf32>
    %284 = tpu.matmul %282, %283, %cst_159 {dimension_numbers = #tpu.dot_dimension_numbers<[1], [0], [0], [1], [0, 0, 1, 1], [], []>} : vector<4x36xf32>, vector<36x512xf32>, vector<4x512xf32> -> vector<4x512xf32>
    %285 = vector.broadcast %240 : vector<4x1xf32> to vector<4x512xf32>
    %286 = arith.addf %284, %285 : vector<4x512xf32>
    %cst_160 = arith.constant 0.000000e+00 : f32
    %287 = vector.broadcast %cst_160 : f32 to vector<4x512xf32>
    %288 = arith.maximumf %286, %287 : vector<4x512xf32>
    %cst_161 = arith.constant 0.000000e+00 : f32
    %289 = vector.broadcast %cst_161 : f32 to vector<4x512xf32>
    %290 = arith.minimumf %286, %289 : vector<4x512xf32>
    %291 = vector.broadcast %2 : f32 to vector<4x512xf32>
    %292 = arith.mulf %291, %290 : vector<4x512xf32>
    %293 = arith.addf %288, %292 : vector<4x512xf32>
    %294 = vector.extract_strided_slice %293 {offsets = [0, 0], sizes = [4, 256], strides = [1, 1]} : vector<4x512xf32> to vector<4x256xf32>
    %c0_162 = arith.constant 0 : index
    %c0_163 = arith.constant 0 : index
    %c0_164 = arith.constant 0 : index
    %c0_165 = arith.constant 0 : index
    %295 = vector.load %arg16[%c0_162, %c0_163, %c0_164, %c0_165] : memref<1x2x4x256xf32, #tpu.memory_space<vmem>>, vector<1x1x4x256xf32>
    %296 = vector.shape_cast %295 : vector<1x1x4x256xf32> to vector<4x256xf32>
    %297 = vector.shape_cast %294 : vector<4x256xf32> to vector<1x1x4x256xf32>
    tpu.vector_store %arg16[%c0_162, %c0_163, %c0_164, %c0_165], %297 {strides = array<i32>} : memref<1x2x4x256xf32, #tpu.memory_space<vmem>>, vector<1x1x4x256xf32>,
    %298 = vector.extract_strided_slice %293 {offsets = [0, 256], sizes = [4, 256], strides = [1, 1]} : vector<4x512xf32> to vector<4x256xf32>
    %c0_166 = arith.constant 0 : index
    %c1_167 = arith.constant 1 : index
    %c0_168 = arith.constant 0 : index
    %c0_169 = arith.constant 0 : index
    %299 = vector.load %arg16[%c0_166, %c1_167, %c0_168, %c0_169] : memref<1x2x4x256xf32, #tpu.memory_space<vmem>>, vector<1x1x4x256xf32>
    %300 = vector.shape_cast %299 : vector<1x1x4x256xf32> to vector<4x256xf32>
    %301 = vector.shape_cast %298 : vector<4x256xf32> to vector<1x1x4x256xf32>
    tpu.vector_store %arg16[%c0_166, %c1_167, %c0_168, %c0_169], %301 {strides = array<i32>} : memref<1x2x4x256xf32, #tpu.memory_space<vmem>>, vector<1x1x4x256xf32>,
    return
  }
  func.func @transform_0(%arg0: i32) -> (i32, i32, i32) {
    %c0_i32 = arith.constant 0 : i32
    %c0_i32_0 = arith.constant 0 : i32
    %c0_i32_1 = arith.constant 0 : i32
    return %arg0, %c0_i32, %c0_i32_0 : i32, i32, i32
  }
  func.func @transform_1(%arg0: i32) -> (i32, i32) {
    %c0_i32 = arith.constant 0 : i32
    %c0_i32_0 = arith.constant 0 : i32
    %c0_i32_1 = arith.constant 0 : i32
    return %c0_i32, %c0_i32_0 : i32, i32
  }
  func.func @transform_2(%arg0: i32) -> (i32, i32) {
    %c0_i32 = arith.constant 0 : i32
    %c0_i32_0 = arith.constant 0 : i32
    %c0_i32_1 = arith.constant 0 : i32
    return %c0_i32, %c0_i32_0 : i32, i32
  }
  func.func @transform_3(%arg0: i32) -> (i32, i32) {
    %c0_i32 = arith.constant 0 : i32
    %c0_i32_0 = arith.constant 0 : i32
    %c0_i32_1 = arith.constant 0 : i32
    return %c0_i32, %c0_i32_0 : i32, i32
  }
  func.func @transform_4(%arg0: i32) -> i32 {
    %c0_i32 = arith.constant 0 : i32
    %c0_i32_0 = arith.constant 0 : i32
    return %c0_i32 : i32
  }
  func.func @transform_5(%arg0: i32) -> (i32, i32) {
    %c0_i32 = arith.constant 0 : i32
    %c0_i32_0 = arith.constant 0 : i32
    %c0_i32_1 = arith.constant 0 : i32
    return %c0_i32, %c0_i32_0 : i32, i32
  }
  func.func @transform_6(%arg0: i32) -> (i32, i32) {
    %c0_i32 = arith.constant 0 : i32
    %c0_i32_0 = arith.constant 0 : i32
    %c0_i32_1 = arith.constant 0 : i32
    return %c0_i32, %c0_i32_0 : i32, i32
  }
  func.func @transform_7(%arg0: i32) -> i32 {
    %c0_i32 = arith.constant 0 : i32
    %c0_i32_0 = arith.constant 0 : i32
    return %c0_i32 : i32
  }
  func.func @transform_8(%arg0: i32) -> (i32, i32) {
    %c0_i32 = arith.constant 0 : i32
    %c0_i32_0 = arith.constant 0 : i32
    %c0_i32_1 = arith.constant 0 : i32
    return %c0_i32, %c0_i32_0 : i32, i32
  }
  func.func @transform_9(%arg0: i32) -> (i32, i32) {
    %c0_i32 = arith.constant 0 : i32
    %c0_i32_0 = arith.constant 0 : i32
    %c0_i32_1 = arith.constant 0 : i32
    return %c0_i32, %c0_i32_0 : i32, i32
  }
  func.func @transform_10(%arg0: i32) -> (i32, i32) {
    %c0_i32 = arith.constant 0 : i32
    %c0_i32_0 = arith.constant 0 : i32
    %c0_i32_1 = arith.constant 0 : i32
    return %c0_i32, %c0_i32_0 : i32, i32
  }
  func.func @transform_11(%arg0: i32) -> i32 {
    %c0_i32 = arith.constant 0 : i32
    %c0_i32_0 = arith.constant 0 : i32
    return %c0_i32 : i32
  }
  func.func @transform_12(%arg0: i32) -> (i32, i32) {
    %c0_i32 = arith.constant 0 : i32
    %c0_i32_0 = arith.constant 0 : i32
    %c0_i32_1 = arith.constant 0 : i32
    return %c0_i32, %c0_i32_0 : i32, i32
  }
  func.func @transform_13(%arg0: i32) -> (i32, i32) {
    %c0_i32 = arith.constant 0 : i32
    %c0_i32_0 = arith.constant 0 : i32
    %c0_i32_1 = arith.constant 0 : i32
    return %c0_i32, %c0_i32_0 : i32, i32
  }
  func.func @transform_14(%arg0: i32) -> i32 {
    %c0_i32 = arith.constant 0 : i32
    %c0_i32_0 = arith.constant 0 : i32
    return %c0_i32 : i32
  }
  func.func @transform_15(%arg0: i32) -> (i32, i32, i32, i32) {
    %c0_i32 = arith.constant 0 : i32
    %c0_i32_0 = arith.constant 0 : i32
    %c0_i32_1 = arith.constant 0 : i32
    %c0_i32_2 = arith.constant 0 : i32
    return %arg0, %c0_i32, %c0_i32_0, %c0_i32_1 : i32, i32, i32, i32
  }
}

</mosaic_0001>

<llo_original>
// kernel: tpu_custom_call.1
$region0: #{tpu_custom_call.1}
  #allocation0 [shape = 'u32[]', space=smem, size = 0x4, offset = 0x4, fixed_abs, tag = 'smem constant byte address 0x4 - core index']
  #allocation1 [shape = 'u32[144,128]{1,0:T(1,128)}', space=vmem, size = 0x12000, scoped, tag = 'internal scratch']
  #allocation2 [shape = 'f32[36,512]{1,0:T(8,128)}', space=vmem, size = 0x14000, scoped, tag = 'scratch operand']
  #allocation3 [shape = 'f32[1]{0:T(128)S(6)}', space=smem, size = 0x200, scoped, tag = 'scoped memory for tpu_custom_call.1']
  #allocation4 [shape = 'f32[1]{0:T(128)S(6)}', space=smem, size = 0x200, scoped, tag = 'scoped memory for tpu_custom_call.1']
  #allocation5 [shape = 'f32[1]{0:T(128)S(6)}', space=smem, size = 0x200, scoped, tag = 'scoped memory for tpu_custom_call.1']
  #allocation6 [shape = 'f32[1]{0:T(128)S(6)}', space=smem, size = 0x200, scoped, tag = 'scoped memory for tpu_custom_call.1']
  %s0 = inlined_call_operand.vmem [shape: f32[2,2,512], index: 0, kind: input, shape index: {}]
  %s1 = inlined_call_operand.hbm [shape: f32[9,512], index: 1, kind: input, shape index: {}]
  %s2 = inlined_call_operand.vmem [shape: f32[4,9], index: 2, kind: input, shape index: {}]
  %s3 = inlined_call_operand.vmem [shape: f32[4,1], index: 3, kind: input, shape index: {}]
  %s4 = inlined_call_operand.<no memory space> [shape: f32[1], index: 4, kind: input, shape index: {}]
  %s5 = inlined_call_operand.vmem [shape: f32[4,9], index: 5, kind: input, shape index: {}]
  %s6 = inlined_call_operand.vmem [shape: f32[4,1], index: 6, kind: input, shape index: {}]
  %s7 = inlined_call_operand.<no memory space> [shape: f32[1], index: 7, kind: input, shape index: {}]
  %s8 = inlined_call_operand.vmem [shape: f32[4,36], index: 8, kind: input, shape index: {}]
  %s9 = inlined_call_operand.vmem [shape: f32[4,1], index: 9, kind: input, shape index: {}]
  %s10 = inlined_call_operand.vmem [shape: f32[4,1], index: 10, kind: input, shape index: {}]
  %s11 = inlined_call_operand.<no memory space> [shape: f32[1], index: 11, kind: input, shape index: {}]
  %s12 = inlined_call_operand.vmem [shape: f32[4,36], index: 12, kind: input, shape index: {}]
  %s13 = inlined_call_operand.vmem [shape: f32[4,1], index: 13, kind: input, shape index: {}]
  %s14 = inlined_call_operand.<no memory space> [shape: f32[1], index: 14, kind: input, shape index: {}]
  %s15 = inlined_call_operand.hbm [shape: f32[2,2,4,256], index: 15, kind: output, shape index: {}]
  %s16 = sld [smem:[#allocation0]]
  $region97: #{tpu_custom_call.1} parent=0
    _
  %s18 = ssub.s32 1, %s16
  %s19 = scalar_select 0, %s18, %s16
  %20 = sst [smem:[#allocation3]] %s4
  %21 = sst [smem:[#allocation4]] %s7
  %22 = sst [smem:[#allocation5]] %s11
  %23 = sst [smem:[#allocation6]] %s14
  $region1: #{tpu_custom_call.1} parent=0
    #allocation7 [shape = 'u8[32768]{0}', space=vmem, size = 0x8000, scoped, tag = 'input window, operand 1, single buffered']
    #allocation8 [shape = 's32[2]{0}', space=sflag, size = 0x8, scoped, tag = 'scoped memory for tpu_custom_call.1']
    #allocation9 [shape = 's32[2]{0}', space=sflag, size = 0x8, scoped, tag = 'scoped memory for tpu_custom_call.1']
    #allocation10 [shape = 'u8[16384]{0}', space=vmem, size = 0x4000, scoped, tag = 'output window, operand 0']
    %24 = vsyncpa [#allocation8], 0
    %25 = vsyncpa [#allocation9], 0
    %s26 = scalar_lea.sflag [#allocation9], 1
    %27 = vsyncpa %s26, 0
    loop: start=0, step=1, limit=4
    $region2: #{tpu_custom_call.1} parent=1 // loop_pre_header
      _
    $region3: #{tpu_custom_call.1} parent=1 // loop_header
      %s29 = sphi 0, %s33
      %p30 = scmp.ge.s32.totalorder %s29, 4
      %s39 = sphi 0, %s41
      %s42 = sphi 0, %s39
      %s43 = sphi 0, %s42
      %s59 = sphi 0, %s43
      %s63 = sphi 0, %s63
      %s65 = sphi 0, %s63
      %s66 = sphi 0, %s65
      %s80 = sphi 0, %s66
      %s84 = sphi 0, %s84
      %s86 = sphi 0, %s84
      %s87 = sphi 0, %s86
      %s101 = sphi 0, %s87
      %s105 = sphi 0, %s105
      %s107 = sphi 0, %s105
      %s108 = sphi 0, %s107
      %s122 = sphi 0, %s108
      %s126 = sphi 0, %s126
      %s128 = sphi 0, %s126
      %s129 = sphi 0, %s128
      %s143 = sphi 0, %s129
      %s147 = sphi 0, %s147
      %s149 = sphi 0, %s147
      %s150 = sphi 0, %s149
      %s164 = sphi 0, %s150
      %s168 = sphi 0, %s168
      %s170 = sphi 0, %s168
      %s171 = sphi 0, %s170
      %s185 = sphi 0, %s171
      %s189 = sphi 0, %s189
      %s191 = sphi 0, %s189
      %s192 = sphi 0, %s191
      %s206 = sphi 0, %s192
      %s210 = sphi 0, %s210
      %s212 = sphi 0, %s210
      %s213 = sphi 0, %s212
      %s227 = sphi 0, %s213
      %s231 = sphi 0, %s231
      %s233 = sphi 0, %s231
      %s234 = sphi 0, %s233
      %s248 = sphi 0, %s234
      %s252 = sphi 0, %s252
      %s254 = sphi 0, %s252
      %s255 = sphi 0, %s254
      %s269 = sphi 0, %s255
      %s273 = sphi 0, %s273
      %s275 = sphi 0, %s273
      %s276 = sphi 0, %s275
      %s290 = sphi 0, %s276
      %s294 = sphi 0, %s294
      %s296 = sphi 0, %s294
      %s297 = sphi 0, %s296
      %s311 = sphi 0, %s297
      %s315 = sphi 0, %s315
      %s317 = sphi 0, %s315
      %s318 = sphi 0, %s317
      %s332 = sphi 0, %s318
      %s336 = sphi 0, %s336
      %s338 = sphi 0, %s336
      %s339 = sphi 0, %s338
      %s353 = sphi 0, %s339
      %s359 = sphi 0, %s361
      %s362 = sphi 0, %s359
      %s363 = sphi 0, %s362
      %s379 = sphi 0, %s363
    $region4: #{tpu_custom_call.1} parent=1 // loop_header_branch
      %32 = sbr.rel (%p30) target = $region8
    $region5: #{tpu_custom_call.1} parent=1 // loop_body
      %s34 = ssub.s32 %s29, 1
      %s35 = ssub.s32 %s29, 2
      %s36 = sadd.s32 %s29, 1
      %s37 = ssub.s32 %s29, %s36
      %p38 = scmp.eq.s32.totalorder %s37, 0
      %s40 = sadd.s32 %s39, 1
      %s41 = scalar_select %p38, %s39, %s40
      %p44 = pneg %p38
      %p45 = scmp.eq.s32.totalorder %s29, 1
      %p46 = por %p44, %p45
      %p47 = scmp.ne.s32.totalorder %s39, %s42
      %p48 = scmp.eq.s32.totalorder %s29, 0
      %p49 = por %p47, %p48
      %p50 = scmp.ne.s32.totalorder %s39, %s42
      %p51 = scmp.eq.s32.totalorder %s34, 1
      %p52 = por %p50, %p51
      %p53 = scmp.ne.s32.totalorder %s42, %s43
      %p54 = scmp.eq.s32.totalorder %s34, 0
      %p55 = por %p53, %p54
      %p56 = scmp.ne.s32.totalorder %s42, %s43
      %p57 = scmp.eq.s32.totalorder %s35, 1
      %p58 = por %p56, %p57
      %p60 = scmp.ne.s32.totalorder %s43, %s59
      %p61 = scmp.eq.s32.totalorder %s35, 0
      %p62 = por %p60, %p61
      %s64 = sadd.s32 %s63, 1
      %p67 = scmp.eq.s32.totalorder %s29, 1
      %p68 = scmp.ne.s32.totalorder %s63, %s65
      %p69 = scmp.eq.s32.totalorder %s29, 0
      %p70 = por %p68, %p69
      %p71 = scmp.ne.s32.totalorder %s63, %s65
      %p72 = scmp.eq.s32.totalorder %s34, 1
      %p73 = por %p71, %p72
      %p74 = scmp.ne.s32.totalorder %s65, %s66
      %p75 = scmp.eq.s32.totalorder %s34, 0
      %p76 = por %p74, %p75
      %p77 = scmp.ne.s32.totalorder %s65, %s66
      %p78 = scmp.eq.s32.totalorder %s35, 1
      %p79 = por %p77, %p78
      %p81 = scmp.ne.s32.totalorder %s66, %s80
      %p82 = scmp.eq.s32.totalorder %s35, 0
      %p83 = por %p81, %p82
      %s85 = sadd.s32 %s84, 1
      %p88 = scmp.eq.s32.totalorder %s29, 1
      %p89 = scmp.ne.s32.totalorder %s84, %s86
      %p90 = scmp.eq.s32.totalorder %s29, 0
      %p91 = por %p89, %p90
      %p92 = scmp.ne.s32.totalorder %s84, %s86
      %p93 = scmp.eq.s32.totalorder %s34, 1
      %p94 = por %p92, %p93
      %p95 = scmp.ne.s32.totalorder %s86, %s87
      %p96 = scmp.eq.s32.totalorder %s34, 0
      %p97 = por %p95, %p96
      %p98 = scmp.ne.s32.totalorder %s86, %s87
      %p99 = scmp.eq.s32.totalorder %s35, 1
      %p100 = por %p98, %p99
      %p102 = scmp.ne.s32.totalorder %s87, %s101
      %p103 = scmp.eq.s32.totalorder %s35, 0
      %p104 = por %p102, %p103
      %s106 = sadd.s32 %s105, 1
      %p109 = scmp.eq.s32.totalorder %s29, 1
      %p110 = scmp.ne.s32.totalorder %s105, %s107
      %p111 = scmp.eq.s32.totalorder %s29, 0
      %p112 = por %p110, %p111
      %p113 = scmp.ne.s32.totalorder %s105, %s107
      %p114 = scmp.eq.s32.totalorder %s34, 1
      %p115 = por %p113, %p114
      %p116 = scmp.ne.s32.totalorder %s107, %s108
      %p117 = scmp.eq.s32.totalorder %s34, 0
      %p118 = por %p116, %p117
      %p119 = scmp.ne.s32.totalorder %s107, %s108
      %p120 = scmp.eq.s32.totalorder %s35, 1
      %p121 = por %p119, %p120
      %p123 = scmp.ne.s32.totalorder %s108, %s122
      %p124 = scmp.eq.s32.totalorder %s35, 0
      %p125 = por %p123, %p124
      %s127 = sadd.s32 %s126, 1
      %p130 = scmp.eq.s32.totalorder %s29, 1
      %p131 = scmp.ne.s32.totalorder %s126, %s128
      %p132 = scmp.eq.s32.totalorder %s29, 0
      %p133 = por %p131, %p132
      %p134 = scmp.ne.s32.totalorder %s126, %s128
      %p135 = scmp.eq.s32.totalorder %s34, 1
      %p136 = por %p134, %p135
      %p137 = scmp.ne.s32.totalorder %s128, %s129
      %p138 = scmp.eq.s32.totalorder %s34, 0
      %p139 = por %p137, %p138
      %p140 = scmp.ne.s32.totalorder %s128, %s129
      %p141 = scmp.eq.s32.totalorder %s35, 1
      %p142 = por %p140, %p141
      %p144 = scmp.ne.s32.totalorder %s129, %s143
      %p145 = scmp.eq.s32.totalorder %s35, 0
      %p146 = por %p144, %p145
      %s148 = sadd.s32 %s147, 1
      %p151 = scmp.eq.s32.totalorder %s29, 1
      %p152 = scmp.ne.s32.totalorder %s147, %s149
      %p153 = scmp.eq.s32.totalorder %s29, 0
      %p154 = por %p152, %p153
      %p155 = scmp.ne.s32.totalorder %s147, %s149
      %p156 = scmp.eq.s32.totalorder %s34, 1
      %p157 = por %p155, %p156
      %p158 = scmp.ne.s32.totalorder %s149, %s150
      %p159 = scmp.eq.s32.totalorder %s34, 0
      %p160 = por %p158, %p159
      %p161 = scmp.ne.s32.totalorder %s149, %s150
      %p162 = scmp.eq.s32.totalorder %s35, 1
      %p163 = por %p161, %p162
      %p165 = scmp.ne.s32.totalorder %s150, %s164
      %p166 = scmp.eq.s32.totalorder %s35, 0
      %p167 = por %p165, %p166
      %s169 = sadd.s32 %s168, 1
      %p172 = scmp.eq.s32.totalorder %s29, 1
      %p173 = scmp.ne.s32.totalorder %s168, %s170
      %p174 = scmp.eq.s32.totalorder %s29, 0
      %p175 = por %p173, %p174
      %p176 = scmp.ne.s32.totalorder %s168, %s170
      %p177 = scmp.eq.s32.totalorder %s34, 1
      %p178 = por %p176, %p177
      %p179 = scmp.ne.s32.totalorder %s170, %s171
      %p180 = scmp.eq.s32.totalorder %s34, 0
      %p181 = por %p179, %p180
      %p182 = scmp.ne.s32.totalorder %s170, %s171
      %p183 = scmp.eq.s32.totalorder %s35, 1
      %p184 = por %p182, %p183
      %p186 = scmp.ne.s32.totalorder %s171, %s185
      %p187 = scmp.eq.s32.totalorder %s35, 0
      %p188 = por %p186, %p187
      %s190 = sadd.s32 %s189, 1
      %p193 = scmp.eq.s32.totalorder %s29, 1
      %p194 = scmp.ne.s32.totalorder %s189, %s191
      %p195 = scmp.eq.s32.totalorder %s29, 0
      %p196 = por %p194, %p195
      %p197 = scmp.ne.s32.totalorder %s189, %s191
      %p198 = scmp.eq.s32.totalorder %s34, 1
      %p199 = por %p197, %p198
      %p200 = scmp.ne.s32.totalorder %s191, %s192
      %p201 = scmp.eq.s32.totalorder %s34, 0
      %p202 = por %p200, %p201
      %p203 = scmp.ne.s32.totalorder %s191, %s192
      %p204 = scmp.eq.s32.totalorder %s35, 1
      %p205 = por %p203, %p204
      %p207 = scmp.ne.s32.totalorder %s192, %s206
      %p208 = scmp.eq.s32.totalorder %s35, 0
      %p209 = por %p207, %p208
      %s211 = sadd.s32 %s210, 1
      %p214 = scmp.eq.s32.totalorder %s29, 1
      %p215 = scmp.ne.s32.totalorder %s210, %s212
      %p216 = scmp.eq.s32.totalorder %s29, 0
      %p217 = por %p215, %p216
      %p218 = scmp.ne.s32.totalorder %s210, %s212
      %p219 = scmp.eq.s32.totalorder %s34, 1
      %p220 = por %p218, %p219
      %p221 = scmp.ne.s32.totalorder %s212, %s213
      %p222 = scmp.eq.s32.totalorder %s34, 0
      %p223 = por %p221, %p222
      %p224 = scmp.ne.s32.totalorder %s212, %s213
      %p225 = scmp.eq.s32.totalorder %s35, 1
      %p226 = por %p224, %p225
      %p228 = scmp.ne.s32.totalorder %s213, %s227
      %p229 = scmp.eq.s32.totalorder %s35, 0
      %p230 = por %p228, %p229
      %s232 = sadd.s32 %s231, 1
      %p235 = scmp.eq.s32.totalorder %s29, 1
      %p236 = scmp.ne.s32.totalorder %s231, %s233
      %p237 = scmp.eq.s32.totalorder %s29, 0
      %p238 = por %p236, %p237
      %p239 = scmp.ne.s32.totalorder %s231, %s233
      %p240 = scmp.eq.s32.totalorder %s34, 1
      %p241 = por %p239, %p240
      %p242 = scmp.ne.s32.totalorder %s233, %s234
      %p243 = scmp.eq.s32.totalorder %s34, 0
      %p244 = por %p242, %p243
      %p245 = scmp.ne.s32.totalorder %s233, %s234
      %p246 = scmp.eq.s32.totalorder %s35, 1
      %p247 = por %p245, %p246
      %p249 = scmp.ne.s32.totalorder %s234, %s248
      %p250 = scmp.eq.s32.totalorder %s35, 0
      %p251 = por %p249, %p250
      %s253 = sadd.s32 %s252, 1
      %p256 = scmp.eq.s32.totalorder %s29, 1
      %p257 = scmp.ne.s32.totalorder %s252, %s254
      %p258 = scmp.eq.s32.totalorder %s29, 0
      %p259 = por %p257, %p258
      %p260 = scmp.ne.s32.totalorder %s252, %s254
      %p261 = scmp.eq.s32.totalorder %s34, 1
      %p262 = por %p260, %p261
      %p263 = scmp.ne.s32.totalorder %s254, %s255
      %p264 = scmp.eq.s32.totalorder %s34, 0
      %p265 = por %p263, %p264
      %p266 = scmp.ne.s32.totalorder %s254, %s255
      %p267 = scmp.eq.s32.totalorder %s35, 1
      %p268 = por %p266, %p267
      %p270 = scmp.ne.s32.totalorder %s255, %s269
      %p271 = scmp.eq.s32.totalorder %s35, 0
      %p272 = por %p270, %p271
      %s274 = sadd.s32 %s273, 1
      %p277 = scmp.eq.s32.totalorder %s29, 1
      %p278 = scmp.ne.s32.totalorder %s273, %s275
      %p279 = scmp.eq.s32.totalorder %s29, 0
      %p280 = por %p278, %p279
      %p281 = scmp.ne.s32.totalorder %s273, %s275
      %p282 = scmp.eq.s32.totalorder %s34, 1
      %p283 = por %p281, %p282
      %p284 = scmp.ne.s32.totalorder %s275, %s276
      %p285 = scmp.eq.s32.totalorder %s34, 0
      %p286 = por %p284, %p285
      %p287 = scmp.ne.s32.totalorder %s275, %s276
      %p288 = scmp.eq.s32.totalorder %s35, 1
      %p289 = por %p287, %p288
      %p291 = scmp.ne.s32.totalorder %s276, %s290
      %p292 = scmp.eq.s32.totalorder %s35, 0
      %p293 = por %p291, %p292
      %s295 = sadd.s32 %s294, 1
      %p298 = scmp.eq.s32.totalorder %s29, 1
      %p299 = scmp.ne.s32.totalorder %s294, %s296
      %p300 = scmp.eq.s32.totalorder %s29, 0
      %p301 = por %p299, %p300
      %p302 = scmp.ne.s32.totalorder %s294, %s296
      %p303 = scmp.eq.s32.totalorder %s34, 1
      %p304 = por %p302, %p303
      %p305 = scmp.ne.s32.totalorder %s296, %s297
      %p306 = scmp.eq.s32.totalorder %s34, 0
      %p307 = por %p305, %p306
      %p308 = scmp.ne.s32.totalorder %s296, %s297
      %p309 = scmp.eq.s32.totalorder %s35, 1
      %p310 = por %p308, %p309
      %p312 = scmp.ne.s32.totalorder %s297, %s311
      %p313 = scmp.eq.s32.totalorder %s35, 0
      %p314 = por %p312, %p313
      %s316 = sadd.s32 %s315, 1
      %p319 = scmp.eq.s32.totalorder %s29, 1
      %p320 = scmp.ne.s32.totalorder %s315, %s317
      %p321 = scmp.eq.s32.totalorder %s29, 0
      %p322 = por %p320, %p321
      %p323 = scmp.ne.s32.totalorder %s315, %s317
      %p324 = scmp.eq.s32.totalorder %s34, 1
      %p325 = por %p323, %p324
      %p326 = scmp.ne.s32.totalorder %s317, %s318
      %p327 = scmp.eq.s32.totalorder %s34, 0
      %p328 = por %p326, %p327
      %p329 = scmp.ne.s32.totalorder %s317, %s318
      %p330 = scmp.eq.s32.totalorder %s35, 1
      %p331 = por %p329, %p330
      %p333 = scmp.ne.s32.totalorder %s318, %s332
      %p334 = scmp.eq.s32.totalorder %s35, 0
      %p335 = por %p333, %p334
      %s337 = sadd.s32 %s336, 1
      %p340 = scmp.eq.s32.totalorder %s29, 1
      %p341 = scmp.ne.s32.totalorder %s336, %s338
      %p342 = scmp.eq.s32.totalorder %s29, 0
      %p343 = por %p341, %p342
      %p344 = scmp.ne.s32.totalorder %s336, %s338
      %p345 = scmp.eq.s32.totalorder %s34, 1
      %p346 = por %p344, %p345
      %p347 = scmp.ne.s32.totalorder %s338, %s339
      %p348 = scmp.eq.s32.totalorder %s34, 0
      %p349 = por %p347, %p348
      %p350 = scmp.ne.s32.totalorder %s338, %s339
      %p351 = scmp.eq.s32.totalorder %s35, 1
      %p352 = por %p350, %p351
      %p354 = scmp.ne.s32.totalorder %s339, %s353
      %p355 = scmp.eq.s32.totalorder %s35, 0
      %p356 = por %p354, %p355
      %s357 = ssub.s32 %s29, %s36
      %p358 = scmp.eq.s32.totalorder %s357, 0
      %s360 = sadd.s32 %s359, 1
      %s361 = scalar_select %p358, %s359, %s360
      %p364 = pneg %p358
      %p365 = scmp.eq.s32.totalorder %s29, 1
      %p366 = por %p364, %p365
      %p367 = scmp.ne.s32.totalorder %s359, %s362
      %p368 = scmp.eq.s32.totalorder %s29, 0
      %p369 = por %p367, %p368
      %p370 = scmp.ne.s32.totalorder %s359, %s362
      %p371 = scmp.eq.s32.totalorder %s34, 1
      %p372 = por %p370, %p371
      %p373 = scmp.ne.s32.totalorder %s362, %s363
      %p374 = scmp.eq.s32.totalorder %s34, 0
      %p375 = por %p373, %p374
      %p376 = scmp.ne.s32.totalorder %s362, %s363
      %p377 = scmp.eq.s32.totalorder %s35, 1
      %p378 = por %p376, %p377
      %p380 = scmp.ne.s32.totalorder %s363, %s379
      %p381 = scmp.eq.s32.totalorder %s35, 0
      %p382 = por %p380, %p381
      %p383 = scmp.le.s32.totalorder 1, %s29
      %p384 = scmp.lt.s32.totalorder %s29, 3
      %p385 = pnand %p383, %p384
      %p386 = pneg %p385
      // Predicated region
      $region9: #{tpu_custom_call.1} parent=5 // pred_check
        _
      $region10: #{tpu_custom_call.1} parent=5 // pred_check_branch
        %388 = sbr.rel (%p385) target = $region12
      $region11: #{tpu_custom_call.1} parent=5 // pred_region
        %s389 = ssub.s32 %s29, 1
        // Predicated region
        $region13: #{tpu_custom_call.1} parent=11 // pred_check
          %p390 = pneg %p76
        $region14: #{tpu_custom_call.1} parent=11 // pred_check_branch
          %392 = sbr.rel (%p390) target = $region16
        $region15: #{tpu_custom_call.1} parent=11 // pred_region
          %s394 = ssub.s32 1024, 1024
          %395 = vsyncadd [#allocation8], %s394
          %s396 = sshll.u32 [#allocation7], 4
          %s397 = int_to_ptr.vmem [resolvable:$true] %s396
          %402 = dma.hbm_to_vmem [thread:$0]  %s1, 1024, %s397, [#allocation8], 512, 512, 32
        $region16: #{tpu_custom_call.1} parent=11 // pred_fallthru
          _
        // Predicated region
        $region17: #{tpu_custom_call.1} parent=11 // pred_check
          %p403 = pneg %p97
        $region18: #{tpu_custom_call.1} parent=11 // pred_check_branch
          %405 = sbr.rel (%p403) target = $region20
        $region19: #{tpu_custom_call.1} parent=11 // pred_region
          _
        $region20: #{tpu_custom_call.1} parent=11 // pred_fallthru
          _
        // Predicated region
        $region21: #{tpu_custom_call.1} parent=11 // pred_check
          %p406 = pneg %p118
        $region22: #{tpu_custom_call.1} parent=11 // pred_check_branch
          %408 = sbr.rel (%p406) target = $region24
        $region23: #{tpu_custom_call.1} parent=11 // pred_region
          _
        $region24: #{tpu_custom_call.1} parent=11 // pred_fallthru
          _
        // Predicated region
        $region25: #{tpu_custom_call.1} parent=11 // pred_check
          %p409 = pneg %p139
        $region26: #{tpu_custom_call.1} parent=11 // pred_check_branch
          %411 = sbr.rel (%p409) target = $region28
        $region27: #{tpu_custom_call.1} parent=11 // pred_region
          _
        $region28: #{tpu_custom_call.1} parent=11 // pred_fallthru
          _
        // Predicated region
        $region29: #{tpu_custom_call.1} parent=11 // pred_check
          %p412 = pneg %p160
        $region30: #{tpu_custom_call.1} parent=11 // pred_check_branch
          %414 = sbr.rel (%p412) target = $region32
        $region31: #{tpu_custom_call.1} parent=11 // pred_region
          _
        $region32: #{tpu_custom_call.1} parent=11 // pred_fallthru
          _
        // Predicated region
        $region33: #{tpu_custom_call.1} parent=11 // pred_check
          %p415 = pneg %p181
        $region34: #{tpu_custom_call.1} parent=11 // pred_check_branch
          %417 = sbr.rel (%p415) target = $region36
        $region35: #{tpu_custom_call.1} parent=11 // pred_region
          _
        $region36: #{tpu_custom_call.1} parent=11 // pred_fallthru
          _
        // Predicated region
        $region37: #{tpu_custom_call.1} parent=11 // pred_check
          %p418 = pneg %p202
        $region38: #{tpu_custom_call.1} parent=11 // pred_check_branch
          %420 = sbr.rel (%p418) target = $region40
        $region39: #{tpu_custom_call.1} parent=11 // pred_region
          _
        $region40: #{tpu_custom_call.1} parent=11 // pred_fallthru
          _
        // Predicated region
        $region41: #{tpu_custom_call.1} parent=11 // pred_check
          %p421 = pneg %p223
        $region42: #{tpu_custom_call.1} parent=11 // pred_check_branch
          %423 = sbr.rel (%p421) target = $region44
        $region43: #{tpu_custom_call.1} parent=11 // pred_region
          _
        $region44: #{tpu_custom_call.1} parent=11 // pred_fallthru
          _
        // Predicated region
        $region45: #{tpu_custom_call.1} parent=11 // pred_check
          %p424 = pneg %p244
        $region46: #{tpu_custom_call.1} parent=11 // pred_check_branch
          %426 = sbr.rel (%p424) target = $region48
        $region47: #{tpu_custom_call.1} parent=11 // pred_region
          _
        $region48: #{tpu_custom_call.1} parent=11 // pred_fallthru
          _
        // Predicated region
        $region49: #{tpu_custom_call.1} parent=11 // pred_check
          %p427 = pneg %p265
        $region50: #{tpu_custom_call.1} parent=11 // pred_check_branch
          %429 = sbr.rel (%p427) target = $region52
        $region51: #{tpu_custom_call.1} parent=11 // pred_region
          _
        $region52: #{tpu_custom_call.1} parent=11 // pred_fallthru
          _
        // Predicated region
        $region53: #{tpu_custom_call.1} parent=11 // pred_check
          %p430 = pneg %p286
        $region54: #{tpu_custom_call.1} parent=11 // pred_check_branch
          %432 = sbr.rel (%p430) target = $region56
        $region55: #{tpu_custom_call.1} parent=11 // pred_region
          _
        $region56: #{tpu_custom_call.1} parent=11 // pred_fallthru
          _
        // Predicated region
        $region57: #{tpu_custom_call.1} parent=11 // pred_check
          %p433 = pneg %p307
        $region58: #{tpu_custom_call.1} parent=11 // pred_check_branch
          %435 = sbr.rel (%p433) target = $region60
        $region59: #{tpu_custom_call.1} parent=11 // pred_region
          _
        $region60: #{tpu_custom_call.1} parent=11 // pred_fallthru
          _
        // Predicated region
        $region61: #{tpu_custom_call.1} parent=11 // pred_check
          %p436 = pneg %p328
        $region62: #{tpu_custom_call.1} parent=11 // pred_check_branch
          %438 = sbr.rel (%p436) target = $region64
        $region63: #{tpu_custom_call.1} parent=11 // pred_region
          _
        $region64: #{tpu_custom_call.1} parent=11 // pred_fallthru
          _
        // Predicated region
        $region65: #{tpu_custom_call.1} parent=11 // pred_check
          %p439 = pneg %p349
        $region66: #{tpu_custom_call.1} parent=11 // pred_check_branch
          %441 = sbr.rel (%p439) target = $region68
        $region67: #{tpu_custom_call.1} parent=11 // pred_region
          _
        $region68: #{tpu_custom_call.1} parent=11 // pred_fallthru
          _
      $region12: #{tpu_custom_call.1} parent=5 // pred_fallthru
        _
      %p442 = scmp.lt.s32.totalorder %s29, 2
      // Predicated region
      $region69: #{tpu_custom_call.1} parent=5 // pred_check
        %p443 = pneg %p442
      $region70: #{tpu_custom_call.1} parent=5 // pred_check_branch
        %445 = sbr.rel (%p443) target = $region72
      $region71: #{tpu_custom_call.1} parent=5 // pred_region
        // Predicated region
        $region73: #{tpu_custom_call.1} parent=71 // pred_check
          %p446 = pneg %p49
        $region74: #{tpu_custom_call.1} parent=71 // pred_check_branch
          %448 = sbr.rel (%p446) target = $region76
        $region75: #{tpu_custom_call.1} parent=71 // pred_region
          %p449 = scmp.lt.s32.totalorder %s29, 1
          %s450 = scalar_select %p449, %s29, 1
          %s451 = smul.addr %s450, 4
          %s452 = smul.addr %s451, 2
          %s453 = scalar_lea.vmem %s0, %s452
        $region76: #{tpu_custom_call.1} parent=71 // pred_fallthru
          _
      $region72: #{tpu_custom_call.1} parent=5 // pred_fallthru
        _
      %p454 = scmp.le.s32.totalorder 1, %s29
      %p455 = scmp.lt.s32.totalorder %s29, 3
      %p456 = pnand %p454, %p455
      %p457 = pneg %p456
      // Predicated region
      $region77: #{tpu_custom_call.1} parent=5 // pred_check
        _
      $region78: #{tpu_custom_call.1} parent=5 // pred_check_branch
        %459 = sbr.rel (%p456) target = $region80
      $region79: #{tpu_custom_call.1} parent=5 // pred_region
        %s460 = ssub.s32 %s29, 1
        // Predicated region
        $region81: #{tpu_custom_call.1} parent=79 // pred_check
          %p461 = pneg %p76
        $region82: #{tpu_custom_call.1} parent=79 // pred_check_branch
          %463 = sbr.rel (%p461) target = $region84
        $region83: #{tpu_custom_call.1} parent=79 // pred_region
          %464 = dma.done [#allocation8], 1024
        $region84: #{tpu_custom_call.1} parent=79 // pred_fallthru
          _
        %p465 = scmp.lt.s32.totalorder %s34, 1
        %s466 = scalar_select %p465, %s34, 1
        %s467 = smul.addr %s466, 4
        %s468 = smul.addr %s467, 2
        %s469 = scalar_lea.vmem %s0, %s468
        %p470 = pneg %p55
        %p471 = pneg %p52
        %p472 = pneg %p76
        %p473 = pneg %p73
        %p474 = pneg %p97
        %p475 = pneg %p94
        %p476 = pneg %p118
        %p477 = pneg %p115
        %p478 = pneg %p139
        %p479 = pneg %p136
        %p480 = pneg %p160
        %p481 = pneg %p157
        %p482 = pneg %p181
        %p483 = pneg %p178
        %p484 = pneg %p202
        %p485 = pneg %p199
        %p486 = pneg %p223
        %p487 = pneg %p220
        %p488 = pneg %p244
        %p489 = pneg %p241
        %p490 = pneg %p265
        %p491 = pneg %p262
        %p492 = pneg %p286
        %p493 = pneg %p283
        %p494 = pneg %p307
        %p495 = pneg %p304
        %p496 = pneg %p328
        %p497 = pneg %p325
        %p498 = pneg %p349
        %p499 = pneg %p346
        %p500 = pneg %p375
        %p501 = pneg %p372
        %s502 = sand.u32 %s362, 1
        %s503 = scalar_lea.sflag [#allocation9], %s502
        %s504 = sand.u32 %s362, 1
        %s505 = smul.addr %s504, 16
        %s506 = scalar_lea.vmem [#allocation10], %s505
        %p507 = scmp.lt.s32.totalorder %s34, 1
        %s508 = scalar_select %p507, %s34, 1
        %s509 = smul.addr %s508, 4
        %s510 = smul.addr %s509, 2
        %s511 = scalar_lea.vmem %s0, %s510
        %s512 = sld [smem:[#allocation3]]
        %s513 = sld [smem:[#allocation4]]
        %s514 = sld [smem:[#allocation6]]
        %s515 = sld [smem:[#allocation5]]
        %v516 = vld [vmem:[%s511] sm:$0xff]
        %v518 = vcombine.high %v516, %v516
        %v520 = vunpack.c.l.s4 1983009808
        %v521 = vunpack.c.0.s8 %v520
        %v522 = vlaneseq
        %v523 = vshrl.u32 %v522, 7
        %v524 = vsub.s32 %v521, %v523
        %v525 = vrot.slane %v516, %v524
        %v527 = vunpack.c.l.s4 1983009808
        %v528 = vunpack.c.0.s8 %v527
        %v529 = vlaneseq
        %v530 = vshrl.u32 %v529, 7
        %v531 = vsub.s32 %v528, %v530
        %v532 = vrot.slane %v518, %v531
        %v533 = vcombine.high %v525, %v525
        %v534 = vcombine.high %v532, %v532
        %539 = vrot.lane.b32.xlu0 %v525, 17
        %v540 = vpop.permute.xlu0 %539
        %541 = vrot.lane.b32.xlu0 %v533, 17
        %v542 = vpop.permute.xlu0 %541
        %543 = vrot.lane.b32.xlu0 %v532, 17
        %v544 = vpop.permute.xlu0 %543
        %545 = vrot.lane.b32.xlu0 %v534, 17
        %v546 = vpop.permute.xlu0 %545
        %v547 = vlaneseq
        %v548 = vand.u32 %v547, 127
        %vm549 = vcmp.lt.s32.totalorder %v548, 17
        %v550 = vsel %vm549, %v544, %v546
        %v551 = vsel %vm549, %v542, %v544
        %v552 = vsel %vm549, %v540, %v542
        %v553 = vsel %vm549, %v546, %v540
        %v554 = vld [vmem:[#allocation7] ss:$8 sm:$0xf]
        %v556 = vlaneseq
        %v557 = vshrl.u32 %v556, 7
        %v558 = vsub.s32 0, %v557
        %v559 = vrot.slane %v554, %v558
        %v560 = vlaneseq
        %v561 = vshrl.u32 %v560, 7
        %v562 = vsub.s32 1, %v561
        %v563 = vrot.slane %v554, %v562
        %v564 = vlaneseq
        %v565 = vshrl.u32 %v564, 7
        %v566 = vsub.s32 2, %v565
        %v567 = vrot.slane %v554, %v566
        %v568 = vlaneseq
        %v569 = vshrl.u32 %v568, 7
        %v570 = vsub.s32 3, %v569
        %v571 = vrot.slane %v554, %v570
        %v576 = vmul.f32 %v553, %v559
        %v577 = vmul.f32 %v552, %v563
        %v578 = vmul.f32 %v551, %v567
        %v579 = vmul.f32 %v550, %v571
        %v580 = vld [vmem:[%s2] sm:$0xf]
        %582 = vset.pattern.permute.xlu0 0
        %583 = vperm.xlu0 %582, %v580
        %v584 = vpop.permute.xlu0 %583
        %v586 = vlaneseq
        %v587 = vshrl.u32 %v586, 7
        %v588 = vsub.s32 0, %v587
        %v589 = vrot.slane %v576, %v588
        %v590 = vlaneseq
        %v591 = vshrl.u32 %v590, 7
        %v592 = vsub.s32 0, %v591
        %v593 = vrot.slane %v577, %v592
        %v594 = vlaneseq
        %v595 = vshrl.u32 %v594, 7
        %v596 = vsub.s32 0, %v595
        %v597 = vrot.slane %v578, %v596
        %v598 = vlaneseq
        %v599 = vshrl.u32 %v598, 7
        %v600 = vsub.s32 0, %v599
        %v601 = vrot.slane %v579, %v600
        %v602 = vmul.f32 %v584, %v589
        %v603 = vmul.f32 %v584, %v593
        %v604 = vmul.f32 %v584, %v597
        %v605 = vmul.f32 %v584, %v601
        %v606 = vadd.f32 %v602, 0.0
        %v607 = vadd.f32 %v603, 0.0
        %v608 = vadd.f32 %v604, 0.0
        %v609 = vadd.f32 %v605, 0.0
        %v610 = vld [vmem:[%s5] sm:$0xf]
        %612 = vset.pattern.permute.xlu0 0
        %613 = vperm.xlu0 %612, %v610
        %v614 = vpop.permute.xlu0 %613
        %v616 = vlaneseq
        %v617 = vshrl.u32 %v616, 7
        %v618 = vsub.s32 1, %v617
        %v619 = vrot.slane %v576, %v618
        %v620 = vlaneseq
        %v621 = vshrl.u32 %v620, 7
        %v622 = vsub.s32 1, %v621
        %v623 = vrot.slane %v577, %v622
        %v624 = vlaneseq
        %v625 = vshrl.u32 %v624, 7
        %v626 = vsub.s32 1, %v625
        %v627 = vrot.slane %v578, %v626
        %v628 = vlaneseq
        %v629 = vshrl.u32 %v628, 7
        %v630 = vsub.s32 1, %v629
        %v631 = vrot.slane %v579, %v630
        %v632 = vmul.f32 %v614, %v619
        %v633 = vmul.f32 %v614, %v623
        %v634 = vmul.f32 %v614, %v627
        %v635 = vmul.f32 %v614, %v631
        %v636 = vadd.f32 %v632, 0.0
        %v637 = vadd.f32 %v633, 0.0
        %v638 = vadd.f32 %v634, 0.0
        %v639 = vadd.f32 %v635, 0.0
        %640 = vrot.lane.b32.xlu0 %v525, 16
        %v641 = vpop.permute.xlu0 %640
        %642 = vrot.lane.b32.xlu0 %v533, 16
        %v643 = vpop.permute.xlu0 %642
        %644 = vrot.lane.b32.xlu0 %v532, 16
        %v645 = vpop.permute.xlu0 %644
        %646 = vrot.lane.b32.xlu0 %v534, 16
        %v647 = vpop.permute.xlu0 %646
        %vm648 = vcmp.lt.s32.totalorder %v548, 16
        %v649 = vsel %vm648, %v645, %v647
        %v650 = vsel %vm648, %v643, %v645
        %v651 = vsel %vm648, %v641, %v643
        %v652 = vsel %vm648, %v647, %v641
        %s653 = scalar_lea.vmem [#allocation7], 1
        %v654 = vld [vmem:[%s653] ss:$8 sm:$0xf]
        %v656 = vlaneseq
        %v657 = vshrl.u32 %v656, 7
        %v658 = vsub.s32 0, %v657
        %v659 = vrot.slane %v654, %v658
        %v660 = vlaneseq
        %v661 = vshrl.u32 %v660, 7
        %v662 = vsub.s32 1, %v661
        %v663 = vrot.slane %v654, %v662
        %v664 = vlaneseq
        %v665 = vshrl.u32 %v664, 7
        %v666 = vsub.s32 2, %v665
        %v667 = vrot.slane %v654, %v666
        %v668 = vlaneseq
        %v669 = vshrl.u32 %v668, 7
        %v670 = vsub.s32 3, %v669
        %v671 = vrot.slane %v654, %v670
        %v676 = vmul.f32 %v652, %v659
        %v677 = vmul.f32 %v651, %v663
        %v678 = vmul.f32 %v650, %v667
        %v679 = vmul.f32 %v649, %v671
        %v680 = vld [vmem:[%s2] sm:$0xf]
        %682 = vset.pattern.permute.xlu0 1
        %683 = vperm.xlu0 %682, %v680
        %v684 = vpop.permute.xlu0 %683
        %v686 = vlaneseq
        %v687 = vshrl.u32 %v686, 7
        %v688 = vsub.s32 0, %v687
        %v689 = vrot.slane %v676, %v688
        %v690 = vlaneseq
        %v691 = vshrl.u32 %v690, 7
        %v692 = vsub.s32 0, %v691
        %v693 = vrot.slane %v677, %v692
        %v694 = vlaneseq
        %v695 = vshrl.u32 %v694, 7
        %v696 = vsub.s32 0, %v695
        %v697 = vrot.slane %v678, %v696
        %v698 = vlaneseq
        %v699 = vshrl.u32 %v698, 7
        %v700 = vsub.s32 0, %v699
        %v701 = vrot.slane %v679, %v700
        %v702 = vmul.f32 %v684, %v689
        %v703 = vmul.f32 %v684, %v693
        %v704 = vmul.f32 %v684, %v697
        %v705 = vmul.f32 %v684, %v701
        %v706 = vadd.f32 %v606, %v702
        %v707 = vadd.f32 %v607, %v703
        %v708 = vadd.f32 %v608, %v704
        %v709 = vadd.f32 %v609, %v705
        %v710 = vld [vmem:[%s5] sm:$0xf]
        %712 = vset.pattern.permute.xlu0 1
        %713 = vperm.xlu0 %712, %v710
        %v714 = vpop.permute.xlu0 %713
        %v716 = vlaneseq
        %v717 = vshrl.u32 %v716, 7
        %v718 = vsub.s32 1, %v717
        %v719 = vrot.slane %v676, %v718
        %v720 = vlaneseq
        %v721 = vshrl.u32 %v720, 7
        %v722 = vsub.s32 1, %v721
        %v723 = vrot.slane %v677, %v722
        %v724 = vlaneseq
        %v725 = vshrl.u32 %v724, 7
        %v726 = vsub.s32 1, %v725
        %v727 = vrot.slane %v678, %v726
        %v728 = vlaneseq
        %v729 = vshrl.u32 %v728, 7
        %v730 = vsub.s32 1, %v729
        %v731 = vrot.slane %v679, %v730
        %v732 = vmul.f32 %v714, %v719
        %v733 = vmul.f32 %v714, %v723
        %v734 = vmul.f32 %v714, %v727
        %v735 = vmul.f32 %v714, %v731
        %v736 = vadd.f32 %v636, %v732
        %v737 = vadd.f32 %v637, %v733
        %v738 = vadd.f32 %v638, %v734
        %v739 = vadd.f32 %v639, %v735
        %740 = vrot.lane.b32.xlu0 %v525, 15
        %v741 = vpop.permute.xlu0 %740
        %742 = vrot.lane.b32.xlu0 %v533, 15
        %v743 = vpop.permute.xlu0 %742
        %744 = vrot.lane.b32.xlu0 %v532, 15
        %v745 = vpop.permute.xlu0 %744
        %746 = vrot.lane.b32.xlu0 %v534, 15
        %v747 = vpop.permute.xlu0 %746
        %vm748 = vcmp.lt.s32.totalorder %v548, 15
        %v749 = vsel %vm748, %v745, %v747
        %v750 = vsel %vm748, %v743, %v745
        %v751 = vsel %vm748, %v741, %v743
        %v752 = vsel %vm748, %v747, %v741
        %s753 = scalar_lea.vmem [#allocation7], 2
        %v754 = vld [vmem:[%s753] ss:$8 sm:$0xf]
        %v756 = vlaneseq
        %v757 = vshrl.u32 %v756, 7
        %v758 = vsub.s32 0, %v757
        %v759 = vrot.slane %v754, %v758
        %v760 = vlaneseq
        %v761 = vshrl.u32 %v760, 7
        %v762 = vsub.s32 1, %v761
        %v763 = vrot.slane %v754, %v762
        %v764 = vlaneseq
        %v765 = vshrl.u32 %v764, 7
        %v766 = vsub.s32 2, %v765
        %v767 = vrot.slane %v754, %v766
        %v768 = vlaneseq
        %v769 = vshrl.u32 %v768, 7
        %v770 = vsub.s32 3, %v769
        %v771 = vrot.slane %v754, %v770
        %v776 = vmul.f32 %v752, %v759
        %v777 = vmul.f32 %v751, %v763
        %v778 = vmul.f32 %v750, %v767
        %v779 = vmul.f32 %v749, %v771
        %v780 = vld [vmem:[%s2] sm:$0xf]
        %782 = vset.pattern.permute.xlu0 2
        %783 = vperm.xlu0 %782, %v780
        %v784 = vpop.permute.xlu0 %783
        %v786 = vlaneseq
        %v787 = vshrl.u32 %v786, 7
        %v788 = vsub.s32 0, %v787
        %v789 = vrot.slane %v776, %v788
        %v790 = vlaneseq
        %v791 = vshrl.u32 %v790, 7
        %v792 = vsub.s32 0, %v791
        %v793 = vrot.slane %v777, %v792
        %v794 = vlaneseq
        %v795 = vshrl.u32 %v794, 7
        %v796 = vsub.s32 0, %v795
        %v797 = vrot.slane %v778, %v796
        %v798 = vlaneseq
        %v799 = vshrl.u32 %v798, 7
        %v800 = vsub.s32 0, %v799
        %v801 = vrot.slane %v779, %v800
        %v802 = vmul.f32 %v784, %v789
        %v803 = vmul.f32 %v784, %v793
        %v804 = vmul.f32 %v784, %v797
        %v805 = vmul.f32 %v784, %v801
        %v806 = vadd.f32 %v706, %v802
        %v807 = vadd.f32 %v707, %v803
        %v808 = vadd.f32 %v708, %v804
        %v809 = vadd.f32 %v709, %v805
        %v810 = vld [vmem:[%s5] sm:$0xf]
        %812 = vset.pattern.permute.xlu0 2
        %813 = vperm.xlu0 %812, %v810
        %v814 = vpop.permute.xlu0 %813
        %v816 = vlaneseq
        %v817 = vshrl.u32 %v816, 7
        %v818 = vsub.s32 1, %v817
        %v819 = vrot.slane %v776, %v818
        %v820 = vlaneseq
        %v821 = vshrl.u32 %v820, 7
        %v822 = vsub.s32 1, %v821
        %v823 = vrot.slane %v777, %v822
        %v824 = vlaneseq
        %v825 = vshrl.u32 %v824, 7
        %v826 = vsub.s32 1, %v825
        %v827 = vrot.slane %v778, %v826
        %v828 = vlaneseq
        %v829 = vshrl.u32 %v828, 7
        %v830 = vsub.s32 1, %v829
        %v831 = vrot.slane %v779, %v830
        %v832 = vmul.f32 %v814, %v819
        %v833 = vmul.f32 %v814, %v823
        %v834 = vmul.f32 %v814, %v827
        %v835 = vmul.f32 %v814, %v831
        %v836 = vadd.f32 %v736, %v832
        %v837 = vadd.f32 %v737, %v833
        %v838 = vadd.f32 %v738, %v834
        %v839 = vadd.f32 %v739, %v835
        %840 = vrot.lane.b32.xlu0 %v525, 1
        %v841 = vpop.permute.xlu0 %840
        %842 = vrot.lane.b32.xlu0 %v533, 1
        %v843 = vpop.permute.xlu0 %842
        %844 = vrot.lane.b32.xlu0 %v532, 1
        %v845 = vpop.permute.xlu0 %844
        %846 = vrot.lane.b32.xlu0 %v534, 1
        %v847 = vpop.permute.xlu0 %846
        %vm848 = vcmp.lt.s32.totalorder %v548, 1
        %v849 = vsel %vm848, %v845, %v847
        %v850 = vsel %vm848, %v843, %v845
        %v851 = vsel %vm848, %v841, %v843
        %v852 = vsel %vm848, %v847, %v841
        %s853 = scalar_lea.vmem [#allocation7], 3
        %v854 = vld [vmem:[%s853] ss:$8 sm:$0xf]
        %v856 = vlaneseq
        %v857 = vshrl.u32 %v856, 7
        %v858 = vsub.s32 0, %v857
        %v859 = vrot.slane %v854, %v858
        %v860 = vlaneseq
        %v861 = vshrl.u32 %v860, 7
        %v862 = vsub.s32 1, %v861
        %v863 = vrot.slane %v854, %v862
        %v864 = vlaneseq
        %v865 = vshrl.u32 %v864, 7
        %v866 = vsub.s32 2, %v865
        %v867 = vrot.slane %v854, %v866
        %v868 = vlaneseq
        %v869 = vshrl.u32 %v868, 7
        %v870 = vsub.s32 3, %v869
        %v871 = vrot.slane %v854, %v870
        %v876 = vmul.f32 %v852, %v859
        %v877 = vmul.f32 %v851, %v863
        %v878 = vmul.f32 %v850, %v867
        %v879 = vmul.f32 %v849, %v871
        %v880 = vld [vmem:[%s2] sm:$0xf]
        %882 = vset.pattern.permute.xlu0 3
        %883 = vperm.xlu0 %882, %v880
        %v884 = vpop.permute.xlu0 %883
        %v886 = vlaneseq
        %v887 = vshrl.u32 %v886, 7
        %v888 = vsub.s32 0, %v887
        %v889 = vrot.slane %v876, %v888
        %v890 = vlaneseq
        %v891 = vshrl.u32 %v890, 7
        %v892 = vsub.s32 0, %v891
        %v893 = vrot.slane %v877, %v892
        %v894 = vlaneseq
        %v895 = vshrl.u32 %v894, 7
        %v896 = vsub.s32 0, %v895
        %v897 = vrot.slane %v878, %v896
        %v898 = vlaneseq
        %v899 = vshrl.u32 %v898, 7
        %v900 = vsub.s32 0, %v899
        %v901 = vrot.slane %v879, %v900
        %v902 = vmul.f32 %v884, %v889
        %v903 = vmul.f32 %v884, %v893
        %v904 = vmul.f32 %v884, %v897
        %v905 = vmul.f32 %v884, %v901
        %v906 = vadd.f32 %v806, %v902
        %v907 = vadd.f32 %v807, %v903
        %v908 = vadd.f32 %v808, %v904
        %v909 = vadd.f32 %v809, %v905
        %v910 = vld [vmem:[%s5] sm:$0xf]
        %912 = vset.pattern.permute.xlu0 3
        %913 = vperm.xlu0 %912, %v910
        %v914 = vpop.permute.xlu0 %913
        %v916 = vlaneseq
        %v917 = vshrl.u32 %v916, 7
        %v918 = vsub.s32 1, %v917
        %v919 = vrot.slane %v876, %v918
        %v920 = vlaneseq
        %v921 = vshrl.u32 %v920, 7
        %v922 = vsub.s32 1, %v921
        %v923 = vrot.slane %v877, %v922
        %v924 = vlaneseq
        %v925 = vshrl.u32 %v924, 7
        %v926 = vsub.s32 1, %v925
        %v927 = vrot.slane %v878, %v926
        %v928 = vlaneseq
        %v929 = vshrl.u32 %v928, 7
        %v930 = vsub.s32 1, %v929
        %v931 = vrot.slane %v879, %v930
        %v932 = vmul.f32 %v914, %v919
        %v933 = vmul.f32 %v914, %v923
        %v934 = vmul.f32 %v914, %v927
        %v935 = vmul.f32 %v914, %v931
        %v936 = vadd.f32 %v836, %v932
        %v937 = vadd.f32 %v837, %v933
        %v938 = vadd.f32 %v838, %v934
        %v939 = vadd.f32 %v839, %v935
        %940 = vset.pattern.permute.xlu0 4
        %941 = vperm.xlu0 %940, %v880
        %v942 = vpop.permute.xlu0 %941
        %v944 = vlaneseq
        %v945 = vshrl.u32 %v944, 7
        %v946 = vsub.s32 0, %v945
        %v947 = vrot.slane %v516, %v946
        %v948 = vlaneseq
        %v949 = vshrl.u32 %v948, 7
        %v950 = vsub.s32 2, %v949
        %v951 = vrot.slane %v516, %v950
        %v952 = vlaneseq
        %v953 = vshrl.u32 %v952, 7
        %v954 = vsub.s32 4, %v953
        %v955 = vrot.slane %v516, %v954
        %v956 = vlaneseq
        %v957 = vshrl.u32 %v956, 7
        %v958 = vsub.s32 6, %v957
        %v959 = vrot.slane %v516, %v958
        %v964 = vlaneseq
        %v965 = vshrl.u32 %v964, 7
        %v966 = vsub.s32 0, %v965
        %v967 = vrot.slane %v947, %v966
        %v968 = vlaneseq
        %v969 = vshrl.u32 %v968, 7
        %v970 = vsub.s32 0, %v969
        %v971 = vrot.slane %v951, %v970
        %v972 = vlaneseq
        %v973 = vshrl.u32 %v972, 7
        %v974 = vsub.s32 0, %v973
        %v975 = vrot.slane %v955, %v974
        %v976 = vlaneseq
        %v977 = vshrl.u32 %v976, 7
        %v978 = vsub.s32 0, %v977
        %v979 = vrot.slane %v959, %v978
        %v980 = vmul.f32 %v942, %v967
        %v981 = vmul.f32 %v942, %v971
        %v982 = vmul.f32 %v942, %v975
        %v983 = vmul.f32 %v942, %v979
        %v984 = vadd.f32 %v906, %v980
        %v985 = vadd.f32 %v907, %v981
        %v986 = vadd.f32 %v908, %v982
        %v987 = vadd.f32 %v909, %v983
        %988 = vset.pattern.permute.xlu0 4
        %989 = vperm.xlu0 %988, %v910
        %v990 = vpop.permute.xlu0 %989
        %v992 = vlaneseq
        %v993 = vshrl.u32 %v992, 7
        %v994 = vsub.s32 1, %v993
        %v995 = vrot.slane %v516, %v994
        %v996 = vlaneseq
        %v997 = vshrl.u32 %v996, 7
        %v998 = vsub.s32 3, %v997
        %v999 = vrot.slane %v516, %v998
        %v1000 = vlaneseq
        %v1001 = vshrl.u32 %v1000, 7
        %v1002 = vsub.s32 5, %v1001
        %v1003 = vrot.slane %v516, %v1002
        %v1004 = vlaneseq
        %v1005 = vshrl.u32 %v1004, 7
        %v1006 = vsub.s32 7, %v1005
        %v1007 = vrot.slane %v516, %v1006
        %v1012 = vlaneseq
        %v1013 = vshrl.u32 %v1012, 7
        %v1014 = vsub.s32 1, %v1013
        %v1015 = vrot.slane %v995, %v1014
        %v1016 = vlaneseq
        %v1017 = vshrl.u32 %v1016, 7
        %v1018 = vsub.s32 1, %v1017
        %v1019 = vrot.slane %v999, %v1018
        %v1020 = vlaneseq
        %v1021 = vshrl.u32 %v1020, 7
        %v1022 = vsub.s32 1, %v1021
        %v1023 = vrot.slane %v1003, %v1022
        %v1024 = vlaneseq
        %v1025 = vshrl.u32 %v1024, 7
        %v1026 = vsub.s32 1, %v1025
        %v1027 = vrot.slane %v1007, %v1026
        %v1028 = vmul.f32 %v990, %v1015
        %v1029 = vmul.f32 %v990, %v1019
        %v1030 = vmul.f32 %v990, %v1023
        %v1031 = vmul.f32 %v990, %v1027
        %v1032 = vadd.f32 %v936, %v1028
        %v1033 = vadd.f32 %v937, %v1029
        %v1034 = vadd.f32 %v938, %v1030
        %v1035 = vadd.f32 %v939, %v1031
        %1036 = vrot.lane.b32.xlu0 %v525, 127
        %v1037 = vpop.permute.xlu0 %1036
        %1038 = vrot.lane.b32.xlu0 %v533, 127
        %v1039 = vpop.permute.xlu0 %1038
        %1040 = vrot.lane.b32.xlu0 %v532, 127
        %v1041 = vpop.permute.xlu0 %1040
        %1042 = vrot.lane.b32.xlu0 %v534, 127
        %v1043 = vpop.permute.xlu0 %1042
        %vm1044 = vcmp.lt.s32.totalorder %v548, 127
        %v1045 = vsel %vm1044, %v1041, %v1043
        %v1046 = vsel %vm1044, %v1039, %v1041
        %v1047 = vsel %vm1044, %v1037, %v1039
        %v1048 = vsel %vm1044, %v1043, %v1037
        %s1049 = scalar_lea.vmem [#allocation7], 5
        %v1050 = vld [vmem:[%s1049] ss:$8 sm:$0xf]
        %v1052 = vlaneseq
        %v1053 = vshrl.u32 %v1052, 7
        %v1054 = vsub.s32 0, %v1053
        %v1055 = vrot.slane %v1050, %v1054
        %v1056 = vlaneseq
        %v1057 = vshrl.u32 %v1056, 7
        %v1058 = vsub.s32 1, %v1057
        %v1059 = vrot.slane %v1050, %v1058
        %v1060 = vlaneseq
        %v1061 = vshrl.u32 %v1060, 7
        %v1062 = vsub.s32 2, %v1061
        %v1063 = vrot.slane %v1050, %v1062
        %v1064 = vlaneseq
        %v1065 = vshrl.u32 %v1064, 7
        %v1066 = vsub.s32 3, %v1065
        %v1067 = vrot.slane %v1050, %v1066
        %v1072 = vmul.f32 %v1047, %v1055
        %v1073 = vmul.f32 %v1046, %v1059
        %v1074 = vmul.f32 %v1045, %v1063
        %v1075 = vmul.f32 %v1048, %v1067
        %v1076 = vld [vmem:[%s2] sm:$0xf]
        %1078 = vset.pattern.permute.xlu0 5
        %1079 = vperm.xlu0 %1078, %v1076
        %v1080 = vpop.permute.xlu0 %1079
        %v1082 = vlaneseq
        %v1083 = vshrl.u32 %v1082, 7
        %v1084 = vsub.s32 0, %v1083
        %v1085 = vrot.slane %v1072, %v1084
        %v1086 = vlaneseq
        %v1087 = vshrl.u32 %v1086, 7
        %v1088 = vsub.s32 0, %v1087
        %v1089 = vrot.slane %v1073, %v1088
        %v1090 = vlaneseq
        %v1091 = vshrl.u32 %v1090, 7
        %v1092 = vsub.s32 0, %v1091
        %v1093 = vrot.slane %v1074, %v1092
        %v1094 = vlaneseq
        %v1095 = vshrl.u32 %v1094, 7
        %v1096 = vsub.s32 0, %v1095
        %v1097 = vrot.slane %v1075, %v1096
        %v1098 = vmul.f32 %v1080, %v1085
        %v1099 = vmul.f32 %v1080, %v1089
        %v1100 = vmul.f32 %v1080, %v1093
        %v1101 = vmul.f32 %v1080, %v1097
        %v1102 = vadd.f32 %v984, %v1098
        %v1103 = vadd.f32 %v985, %v1099
        %v1104 = vadd.f32 %v986, %v1100
        %v1105 = vadd.f32 %v987, %v1101
        %v1106 = vld [vmem:[%s5] sm:$0xf]
        %1108 = vset.pattern.permute.xlu0 5
        %1109 = vperm.xlu0 %1108, %v1106
        %v1110 = vpop.permute.xlu0 %1109
        %v1112 = vlaneseq
        %v1113 = vshrl.u32 %v1112, 7
        %v1114 = vsub.s32 1, %v1113
        %v1115 = vrot.slane %v1072, %v1114
        %v1116 = vlaneseq
        %v1117 = vshrl.u32 %v1116, 7
        %v1118 = vsub.s32 1, %v1117
        %v1119 = vrot.slane %v1073, %v1118
        %v1120 = vlaneseq
        %v1121 = vshrl.u32 %v1120, 7
        %v1122 = vsub.s32 1, %v1121
        %v1123 = vrot.slane %v1074, %v1122
        %v1124 = vlaneseq
        %v1125 = vshrl.u32 %v1124, 7
        %v1126 = vsub.s32 1, %v1125
        %v1127 = vrot.slane %v1075, %v1126
        %v1128 = vmul.f32 %v1110, %v1115
        %v1129 = vmul.f32 %v1110, %v1119
        %v1130 = vmul.f32 %v1110, %v1123
        %v1131 = vmul.f32 %v1110, %v1127
        %v1132 = vadd.f32 %v1032, %v1128
        %v1133 = vadd.f32 %v1033, %v1129
        %v1134 = vadd.f32 %v1034, %v1130
        %v1135 = vadd.f32 %v1035, %v1131
        %1136 = vrot.lane.b32.xlu0 %v525, 113
        %v1137 = vpop.permute.xlu0 %1136
        %1138 = vrot.lane.b32.xlu0 %v533, 113
        %v1139 = vpop.permute.xlu0 %1138
        %1140 = vrot.lane.b32.xlu0 %v532, 113
        %v1141 = vpop.permute.xlu0 %1140
        %1142 = vrot.lane.b32.xlu0 %v534, 113
        %v1143 = vpop.permute.xlu0 %1142
        %vm1144 = vcmp.lt.s32.totalorder %v548, 113
        %v1145 = vsel %vm1144, %v1141, %v1143
        %v1146 = vsel %vm1144, %v1139, %v1141
        %v1147 = vsel %vm1144, %v1137, %v1139
        %v1148 = vsel %vm1144, %v1143, %v1137
        %s1149 = scalar_lea.vmem [#allocation7], 6
        %v1150 = vld [vmem:[%s1149] ss:$8 sm:$0xf]
        %v1152 = vlaneseq
        %v1153 = vshrl.u32 %v1152, 7
        %v1154 = vsub.s32 0, %v1153
        %v1155 = vrot.slane %v1150, %v1154
        %v1156 = vlaneseq
        %v1157 = vshrl.u32 %v1156, 7
        %v1158 = vsub.s32 1, %v1157
        %v1159 = vrot.slane %v1150, %v1158
        %v1160 = vlaneseq
        %v1161 = vshrl.u32 %v1160, 7
        %v1162 = vsub.s32 2, %v1161
        %v1163 = vrot.slane %v1150, %v1162
        %v1164 = vlaneseq
        %v1165 = vshrl.u32 %v1164, 7
        %v1166 = vsub.s32 3, %v1165
        %v1167 = vrot.slane %v1150, %v1166
        %v1172 = vmul.f32 %v1147, %v1155
        %v1173 = vmul.f32 %v1146, %v1159
        %v1174 = vmul.f32 %v1145, %v1163
        %v1175 = vmul.f32 %v1148, %v1167
        %v1176 = vld [vmem:[%s2] sm:$0xf]
        %1178 = vset.pattern.permute.xlu0 6
        %1179 = vperm.xlu0 %1178, %v1176
        %v1180 = vpop.permute.xlu0 %1179
        %v1182 = vlaneseq
        %v1183 = vshrl.u32 %v1182, 7
        %v1184 = vsub.s32 0, %v1183
        %v1185 = vrot.slane %v1172, %v1184
        %v1186 = vlaneseq
        %v1187 = vshrl.u32 %v1186, 7
        %v1188 = vsub.s32 0, %v1187
        %v1189 = vrot.slane %v1173, %v1188
        %v1190 = vlaneseq
        %v1191 = vshrl.u32 %v1190, 7
        %v1192 = vsub.s32 0, %v1191
        %v1193 = vrot.slane %v1174, %v1192
        %v1194 = vlaneseq
        %v1195 = vshrl.u32 %v1194, 7
        %v1196 = vsub.s32 0, %v1195
        %v1197 = vrot.slane %v1175, %v1196
        %v1198 = vmul.f32 %v1180, %v1185
        %v1199 = vmul.f32 %v1180, %v1189
        %v1200 = vmul.f32 %v1180, %v1193
        %v1201 = vmul.f32 %v1180, %v1197
        %v1202 = vadd.f32 %v1102, %v1198
        %v1203 = vadd.f32 %v1103, %v1199
        %v1204 = vadd.f32 %v1104, %v1200
        %v1205 = vadd.f32 %v1105, %v1201
        %v1206 = vld [vmem:[%s5] sm:$0xf]
        %1208 = vset.pattern.permute.xlu0 6
        %1209 = vperm.xlu0 %1208, %v1206
        %v1210 = vpop.permute.xlu0 %1209
        %v1212 = vlaneseq
        %v1213 = vshrl.u32 %v1212, 7
        %v1214 = vsub.s32 1, %v1213
        %v1215 = vrot.slane %v1172, %v1214
        %v1216 = vlaneseq
        %v1217 = vshrl.u32 %v1216, 7
        %v1218 = vsub.s32 1, %v1217
        %v1219 = vrot.slane %v1173, %v1218
        %v1220 = vlaneseq
        %v1221 = vshrl.u32 %v1220, 7
        %v1222 = vsub.s32 1, %v1221
        %v1223 = vrot.slane %v1174, %v1222
        %v1224 = vlaneseq
        %v1225 = vshrl.u32 %v1224, 7
        %v1226 = vsub.s32 1, %v1225
        %v1227 = vrot.slane %v1175, %v1226
        %v1228 = vmul.f32 %v1210, %v1215
        %v1229 = vmul.f32 %v1210, %v1219
        %v1230 = vmul.f32 %v1210, %v1223
        %v1231 = vmul.f32 %v1210, %v1227
        %v1232 = vadd.f32 %v1132, %v1228
        %v1233 = vadd.f32 %v1133, %v1229
        %v1234 = vadd.f32 %v1134, %v1230
        %v1235 = vadd.f32 %v1135, %v1231
        %1236 = vrot.lane.b32.xlu0 %v525, 112
        %v1237 = vpop.permute.xlu0 %1236
        %1238 = vrot.lane.b32.xlu0 %v533, 112
        %v1239 = vpop.permute.xlu0 %1238
        %1240 = vrot.lane.b32.xlu0 %v532, 112
        %v1241 = vpop.permute.xlu0 %1240
        %1242 = vrot.lane.b32.xlu0 %v534, 112
        %v1243 = vpop.permute.xlu0 %1242
        %vm1244 = vcmp.lt.s32.totalorder %v548, 112
        %v1245 = vsel %vm1244, %v1241, %v1243
        %v1246 = vsel %vm1244, %v1239, %v1241
        %v1247 = vsel %vm1244, %v1237, %v1239
        %v1248 = vsel %vm1244, %v1243, %v1237
        %s1249 = scalar_lea.vmem [#allocation7], 7
        %v1250 = vld [vmem:[%s1249] ss:$8 sm:$0xf]
        %v1252 = vlaneseq
        %v1253 = vshrl.u32 %v1252, 7
        %v1254 = vsub.s32 0, %v1253
        %v1255 = vrot.slane %v1250, %v1254
        %v1256 = vlaneseq
        %v1257 = vshrl.u32 %v1256, 7
        %v1258 = vsub.s32 1, %v1257
        %v1259 = vrot.slane %v1250, %v1258
        %v1260 = vlaneseq
        %v1261 = vshrl.u32 %v1260, 7
        %v1262 = vsub.s32 2, %v1261
        %v1263 = vrot.slane %v1250, %v1262
        %v1264 = vlaneseq
        %v1265 = vshrl.u32 %v1264, 7
        %v1266 = vsub.s32 3, %v1265
        %v1267 = vrot.slane %v1250, %v1266
        %v1272 = vmul.f32 %v1247, %v1255
        %v1273 = vmul.f32 %v1246, %v1259
        %v1274 = vmul.f32 %v1245, %v1263
        %v1275 = vmul.f32 %v1248, %v1267
        %v1276 = vld [vmem:[%s2] sm:$0xf]
        %1278 = vset.pattern.permute.xlu0 7
        %1279 = vperm.xlu0 %1278, %v1276
        %v1280 = vpop.permute.xlu0 %1279
        %v1282 = vlaneseq
        %v1283 = vshrl.u32 %v1282, 7
        %v1284 = vsub.s32 0, %v1283
        %v1285 = vrot.slane %v1272, %v1284
        %v1286 = vlaneseq
        %v1287 = vshrl.u32 %v1286, 7
        %v1288 = vsub.s32 0, %v1287
        %v1289 = vrot.slane %v1273, %v1288
        %v1290 = vlaneseq
        %v1291 = vshrl.u32 %v1290, 7
        %v1292 = vsub.s32 0, %v1291
        %v1293 = vrot.slane %v1274, %v1292
        %v1294 = vlaneseq
        %v1295 = vshrl.u32 %v1294, 7
        %v1296 = vsub.s32 0, %v1295
        %v1297 = vrot.slane %v1275, %v1296
        %v1298 = vmul.f32 %v1280, %v1285
        %v1299 = vmul.f32 %v1280, %v1289
        %v1300 = vmul.f32 %v1280, %v1293
        %v1301 = vmul.f32 %v1280, %v1297
        %v1302 = vadd.f32 %v1202, %v1298
        %v1303 = vadd.f32 %v1203, %v1299
        %v1304 = vadd.f32 %v1204, %v1300
        %v1305 = vadd.f32 %v1205, %v1301
        %v1306 = vld [vmem:[%s5] sm:$0xf]
        %1308 = vset.pattern.permute.xlu0 7
        %1309 = vperm.xlu0 %1308, %v1306
        %v1310 = vpop.permute.xlu0 %1309
        %v1312 = vlaneseq
        %v1313 = vshrl.u32 %v1312, 7
        %v1314 = vsub.s32 1, %v1313
        %v1315 = vrot.slane %v1272, %v1314
        %v1316 = vlaneseq
        %v1317 = vshrl.u32 %v1316, 7
        %v1318 = vsub.s32 1, %v1317
        %v1319 = vrot.slane %v1273, %v1318
        %v1320 = vlaneseq
        %v1321 = vshrl.u32 %v1320, 7
        %v1322 = vsub.s32 1, %v1321
        %v1323 = vrot.slane %v1274, %v1322
        %v1324 = vlaneseq
        %v1325 = vshrl.u32 %v1324, 7
        %v1326 = vsub.s32 1, %v1325
        %v1327 = vrot.slane %v1275, %v1326
        %v1328 = vmul.f32 %v1310, %v1315
        %v1329 = vmul.f32 %v1310, %v1319
        %v1330 = vmul.f32 %v1310, %v1323
        %v1331 = vmul.f32 %v1310, %v1327
        %v1332 = vadd.f32 %v1232, %v1328
        %v1333 = vadd.f32 %v1233, %v1329
        %v1334 = vadd.f32 %v1234, %v1330
        %v1335 = vadd.f32 %v1235, %v1331
        %1336 = vrot.lane.b32.xlu0 %v525, 111
        %v1337 = vpop.permute.xlu0 %1336
        %1338 = vrot.lane.b32.xlu0 %v533, 111
        %v1339 = vpop.permute.xlu0 %1338
        %1340 = vrot.lane.b32.xlu0 %v532, 111
        %v1341 = vpop.permute.xlu0 %1340
        %1342 = vrot.lane.b32.xlu0 %v534, 111
        %v1343 = vpop.permute.xlu0 %1342
        %vm1344 = vcmp.lt.s32.totalorder %v548, 111
        %v1345 = vsel %vm1344, %v1341, %v1343
        %v1346 = vsel %vm1344, %v1339, %v1341
        %v1347 = vsel %vm1344, %v1337, %v1339
        %v1348 = vsel %vm1344, %v1343, %v1337
        %s1349 = scalar_lea.vmem [#allocation7], 32
        %v1350 = vld [vmem:[%s1349] ss:$8 sm:$0xf]
        %v1352 = vlaneseq
        %v1353 = vshrl.u32 %v1352, 7
        %v1354 = vsub.s32 0, %v1353
        %v1355 = vrot.slane %v1350, %v1354
        %v1356 = vlaneseq
        %v1357 = vshrl.u32 %v1356, 7
        %v1358 = vsub.s32 1, %v1357
        %v1359 = vrot.slane %v1350, %v1358
        %v1360 = vlaneseq
        %v1361 = vshrl.u32 %v1360, 7
        %v1362 = vsub.s32 2, %v1361
        %v1363 = vrot.slane %v1350, %v1362
        %v1364 = vlaneseq
        %v1365 = vshrl.u32 %v1364, 7
        %v1366 = vsub.s32 3, %v1365
        %v1367 = vrot.slane %v1350, %v1366
        %v1372 = vmul.f32 %v1347, %v1355
        %v1373 = vmul.f32 %v1346, %v1359
        %v1374 = vmul.f32 %v1345, %v1363
        %v1375 = vmul.f32 %v1348, %v1367
        %v1376 = vld [vmem:[%s2] sm:$0xf]
        %1378 = vset.pattern.permute.xlu0 8
        %1379 = vperm.xlu0 %1378, %v1376
        %v1380 = vpop.permute.xlu0 %1379
        %v1382 = vlaneseq
        %v1383 = vshrl.u32 %v1382, 7
        %v1384 = vsub.s32 0, %v1383
        %v1385 = vrot.slane %v1372, %v1384
        %v1386 = vlaneseq
        %v1387 = vshrl.u32 %v1386, 7
        %v1388 = vsub.s32 0, %v1387
        %v1389 = vrot.slane %v1373, %v1388
        %v1390 = vlaneseq
        %v1391 = vshrl.u32 %v1390, 7
        %v1392 = vsub.s32 0, %v1391
        %v1393 = vrot.slane %v1374, %v1392
        %v1394 = vlaneseq
        %v1395 = vshrl.u32 %v1394, 7
        %v1396 = vsub.s32 0, %v1395
        %v1397 = vrot.slane %v1375, %v1396
        %v1398 = vmul.f32 %v1380, %v1385
        %v1399 = vmul.f32 %v1380, %v1389
        %v1400 = vmul.f32 %v1380, %v1393
        %v1401 = vmul.f32 %v1380, %v1397
        %v1402 = vadd.f32 %v1302, %v1398
        %v1403 = vadd.f32 %v1303, %v1399
        %v1404 = vadd.f32 %v1304, %v1400
        %v1405 = vadd.f32 %v1305, %v1401
        %v1406 = vld [vmem:[%s5] sm:$0xf]
        %1408 = vset.pattern.permute.xlu0 8
        %1409 = vperm.xlu0 %1408, %v1406
        %v1410 = vpop.permute.xlu0 %1409
        %v1412 = vlaneseq
        %v1413 = vshrl.u32 %v1412, 7
        %v1414 = vsub.s32 1, %v1413
        %v1415 = vrot.slane %v1372, %v1414
        %v1416 = vlaneseq
        %v1417 = vshrl.u32 %v1416, 7
        %v1418 = vsub.s32 1, %v1417
        %v1419 = vrot.slane %v1373, %v1418
        %v1420 = vlaneseq
        %v1421 = vshrl.u32 %v1420, 7
        %v1422 = vsub.s32 1, %v1421
        %v1423 = vrot.slane %v1374, %v1422
        %v1424 = vlaneseq
        %v1425 = vshrl.u32 %v1424, 7
        %v1426 = vsub.s32 1, %v1425
        %v1427 = vrot.slane %v1375, %v1426
        %v1428 = vmul.f32 %v1410, %v1415
        %v1429 = vmul.f32 %v1410, %v1419
        %v1430 = vmul.f32 %v1410, %v1423
        %v1431 = vmul.f32 %v1410, %v1427
        %v1432 = vadd.f32 %v1332, %v1428
        %v1433 = vadd.f32 %v1333, %v1429
        %v1434 = vadd.f32 %v1334, %v1430
        %v1435 = vadd.f32 %v1335, %v1431
        %v1436 = vld [vmem:[%s3] sm:$0xf]
        %1438 = vset.pattern.permute.xlu0 0
        %1439 = vperm.xlu0 %1438, %v1436
        %v1440 = vpop.permute.xlu0 %1439
        %v1442 = vadd.f32 %v1402, %v1440
        %v1443 = vadd.f32 %v1403, %v1440
        %v1444 = vadd.f32 %v1404, %v1440
        %v1445 = vadd.f32 %v1405, %v1440
        %v1446 = vmax.f32 %v1442, 0.0
        %v1447 = vmax.f32 %v1443, 0.0
        %v1448 = vmax.f32 %v1444, 0.0
        %v1449 = vmax.f32 %v1445, 0.0
        %v1450 = vmin.f32 %v1442, 0.0
        %v1451 = vmin.f32 %v1443, 0.0
        %v1452 = vmin.f32 %v1444, 0.0
        %v1453 = vmin.f32 %v1445, 0.0
        %v1454 = vstv %s512
        %v1455 = vmul.f32 %v1454, %v1450
        %v1456 = vmul.f32 %v1454, %v1451
        %v1457 = vmul.f32 %v1454, %v1452
        %v1458 = vmul.f32 %v1454, %v1453
        %v1459 = vadd.f32 %v1446, %v1455
        %v1460 = vadd.f32 %v1447, %v1456
        %v1461 = vadd.f32 %v1448, %v1457
        %v1462 = vadd.f32 %v1449, %v1458
        %v1463 = vld [vmem:[%s6] sm:$0xf]
        %1465 = vset.pattern.permute.xlu0 0
        %1466 = vperm.xlu0 %1465, %v1463
        %v1467 = vpop.permute.xlu0 %1466
        %v1469 = vadd.f32 %v1432, %v1467
        %v1470 = vadd.f32 %v1433, %v1467
        %v1471 = vadd.f32 %v1434, %v1467
        %v1472 = vadd.f32 %v1435, %v1467
        %v1473 = vmax.f32 %v1469, 0.0
        %v1474 = vmax.f32 %v1470, 0.0
        %v1475 = vmax.f32 %v1471, 0.0
        %v1476 = vmax.f32 %v1472, 0.0
        %v1477 = vmin.f32 %v1469, 0.0
        %v1478 = vmin.f32 %v1470, 0.0
        %v1479 = vmin.f32 %v1471, 0.0
        %v1480 = vmin.f32 %v1472, 0.0
        %v1481 = vstv %s513
        %v1482 = vmul.f32 %v1481, %v1477
        %v1483 = vmul.f32 %v1481, %v1478
        %v1484 = vmul.f32 %v1481, %v1479
        %v1485 = vmul.f32 %v1481, %v1480
        %v1486 = vadd.f32 %v1473, %v1482
        %v1487 = vadd.f32 %v1474, %v1483
        %v1488 = vadd.f32 %v1475, %v1484
        %v1489 = vadd.f32 %v1476, %v1485
        %v1490 = vld [vmem:[%s10] sm:$0xf]
        %1492 = vset.pattern.permute.xlu0 0
        %1493 = vperm.xlu0 %1492, %v1490
        %v1494 = vpop.permute.xlu0 %1493
        %v1496 = vmul.f32 %v1486, %v1494
        %v1497 = vmul.f32 %v1487, %v1494
        %v1498 = vmul.f32 %v1488, %v1494
        %v1499 = vmul.f32 %v1489, %v1494
        %vm1500 = vcmask 1043456
        %v1501 = vsel %vm1500, %v1496, 0.0
        %v1502 = vrot.slane %v1501, 4
        %v1503 = vadd.f32 %v1501, %v1502
        %v1504 = vrot.slane %v1503, 2
        %v1505 = vadd.f32 %v1503, %v1504
        %v1506 = vrot.slane %v1505, 1
        %v1507 = vadd.f32 %v1505, %v1506
        %v1508 = vsel %vm1500, %v1497, 0.0
        %v1509 = vrot.slane %v1508, 4
        %v1510 = vadd.f32 %v1508, %v1509
        %v1511 = vrot.slane %v1510, 2
        %v1512 = vadd.f32 %v1510, %v1511
        %v1513 = vrot.slane %v1512, 1
        %v1514 = vadd.f32 %v1512, %v1513
        %v1515 = vsel %vm1500, %v1498, 0.0
        %v1516 = vrot.slane %v1515, 4
        %v1517 = vadd.f32 %v1515, %v1516
        %v1518 = vrot.slane %v1517, 2
        %v1519 = vadd.f32 %v1517, %v1518
        %v1520 = vrot.slane %v1519, 1
        %v1521 = vadd.f32 %v1519, %v1520
        %v1522 = vsel %vm1500, %v1499, 0.0
        %v1523 = vrot.slane %v1522, 4
        %v1524 = vadd.f32 %v1522, %v1523
        %v1525 = vrot.slane %v1524, 2
        %v1526 = vadd.f32 %v1524, %v1525
        %v1527 = vrot.slane %v1526, 1
        %v1528 = vadd.f32 %v1526, %v1527
        %v1529 = vstv %s515
        %v1530 = vadd.f32 %v1507, %v1529
        %v1531 = vadd.f32 %v1514, %v1529
        %v1532 = vadd.f32 %v1521, %v1529
        %v1533 = vadd.f32 %v1528, %v1529
        %v1534 = vmul.f32 %v1530, 0.5
        %v1535 = vmul.f32 %v1531, 0.5
        %v1536 = vmul.f32 %v1532, 0.5
        %v1537 = vmul.f32 %v1533, 0.5
        %v1538 = vtanh.pop %v1534
        %v1539 = vtanh.pop %v1535
        %v1540 = vtanh.pop %v1536
        %v1541 = vtanh.pop %v1537
        %v1542 = vadd.f32 %v1538, 1.0
        %v1543 = vadd.f32 %v1539, 1.0
        %v1544 = vadd.f32 %v1540, 1.0
        %v1545 = vadd.f32 %v1541, 1.0
        %v1546 = vmul.f32 %v1542, 0.5
        %v1547 = vmul.f32 %v1543, 0.5
        %v1548 = vmul.f32 %v1544, 0.5
        %v1549 = vmul.f32 %v1545, 0.5
        %v1550 = vld [vmem:[%s9] sm:$0xf]
        %1551 = vrot.lane.b32.xlu0 %v1459, 17
        %v1552 = vpop.permute.xlu0 %1551
        %1553 = vrot.lane.b32.xlu0 %v1460, 17
        %v1554 = vpop.permute.xlu0 %1553
        %1555 = vrot.lane.b32.xlu0 %v1461, 17
        %v1556 = vpop.permute.xlu0 %1555
        %1557 = vrot.lane.b32.xlu0 %v1462, 17
        %v1558 = vpop.permute.xlu0 %1557
        %v1559 = vsel %vm549, %v1556, %v1558
        %v1560 = vsel %vm549, %v1554, %v1556
        %v1561 = vsel %vm549, %v1552, %v1554
        %v1562 = vsel %vm549, %v1558, %v1552
        %v1563 = vmul.f32 %v1562, %v559
        %v1564 = vmul.f32 %v1561, %v563
        %v1565 = vmul.f32 %v1560, %v567
        %v1566 = vmul.f32 %v1559, %v571
        %1567 = vst [vmem:[#allocation2] sm:$0xf] %v1563
        %1568 = vst [vmem:[#allocation2 + $0x8] sm:$0xf] %v1564
        %1569 = vst [vmem:[#allocation2 + $0x10] sm:$0xf] %v1565
        %1570 = vst [vmem:[#allocation2 + $0x18] sm:$0xf] %v1566
        %1571 = vrot.lane.b32.xlu0 %v1459, 16
        %v1572 = vpop.permute.xlu0 %1571
        %1573 = vrot.lane.b32.xlu0 %v1460, 16
        %v1574 = vpop.permute.xlu0 %1573
        %1575 = vrot.lane.b32.xlu0 %v1461, 16
        %v1576 = vpop.permute.xlu0 %1575
        %1577 = vrot.lane.b32.xlu0 %v1462, 16
        %v1578 = vpop.permute.xlu0 %1577
        %v1579 = vsel %vm648, %v1576, %v1578
        %v1580 = vsel %vm648, %v1574, %v1576
        %v1581 = vsel %vm648, %v1572, %v1574
        %v1582 = vsel %vm648, %v1578, %v1572
        %v1583 = vld [vmem:[%s653] ss:$8 sm:$0xf]
        %v1585 = vlaneseq
        %v1586 = vshrl.u32 %v1585, 7
        %v1587 = vsub.s32 0, %v1586
        %v1588 = vrot.slane %v1583, %v1587
        %v1589 = vlaneseq
        %v1590 = vshrl.u32 %v1589, 7
        %v1591 = vsub.s32 1, %v1590
        %v1592 = vrot.slane %v1583, %v1591
        %v1593 = vlaneseq
        %v1594 = vshrl.u32 %v1593, 7
        %v1595 = vsub.s32 2, %v1594
        %v1596 = vrot.slane %v1583, %v1595
        %v1597 = vlaneseq
        %v1598 = vshrl.u32 %v1597, 7
        %v1599 = vsub.s32 3, %v1598
        %v1600 = vrot.slane %v1583, %v1599
        %v1605 = vmul.f32 %v1582, %v1588
        %v1606 = vmul.f32 %v1581, %v1592
        %v1607 = vmul.f32 %v1580, %v1596
        %v1608 = vmul.f32 %v1579, %v1600
        %v1613 = vrot.slane %v1605, 4
        %v1614 = vrot.slane %v1606, 4
        %v1615 = vrot.slane %v1607, 4
        %v1616 = vrot.slane %v1608, 4
        %1621 = vst [vmem:[#allocation2] sm:$0xf0] %v1613
        %1622 = vst [vmem:[#allocation2 + $0x8] sm:$0xf0] %v1614
        %1623 = vst [vmem:[#allocation2 + $0x10] sm:$0xf0] %v1615
        %1624 = vst [vmem:[#allocation2 + $0x18] sm:$0xf0] %v1616
        %1625 = vrot.lane.b32.xlu0 %v1459, 15
        %v1626 = vpop.permute.xlu0 %1625
        %1627 = vrot.lane.b32.xlu0 %v1460, 15
        %v1628 = vpop.permute.xlu0 %1627
        %1629 = vrot.lane.b32.xlu0 %v1461, 15
        %v1630 = vpop.permute.xlu0 %1629
        %1631 = vrot.lane.b32.xlu0 %v1462, 15
        %v1632 = vpop.permute.xlu0 %1631
        %v1633 = vsel %vm748, %v1630, %v1632
        %v1634 = vsel %vm748, %v1628, %v1630
        %v1635 = vsel %vm748, %v1626, %v1628
        %v1636 = vsel %vm748, %v1632, %v1626
        %v1637 = vld [vmem:[%s753] ss:$8 sm:$0xf]
        %v1639 = vlaneseq
        %v1640 = vshrl.u32 %v1639, 7
        %v1641 = vsub.s32 0, %v1640
        %v1642 = vrot.slane %v1637, %v1641
        %v1643 = vlaneseq
        %v1644 = vshrl.u32 %v1643, 7
        %v1645 = vsub.s32 1, %v1644
        %v1646 = vrot.slane %v1637, %v1645
        %v1647 = vlaneseq
        %v1648 = vshrl.u32 %v1647, 7
        %v1649 = vsub.s32 2, %v1648
        %v1650 = vrot.slane %v1637, %v1649
        %v1651 = vlaneseq
        %v1652 = vshrl.u32 %v1651, 7
        %v1653 = vsub.s32 3, %v1652
        %v1654 = vrot.slane %v1637, %v1653
        %v1659 = vmul.f32 %v1636, %v1642
        %v1660 = vmul.f32 %v1635, %v1646
        %v1661 = vmul.f32 %v1634, %v1650
        %v1662 = vmul.f32 %v1633, %v1654
        %1663 = vst [vmem:[#allocation2 + $0x20] sm:$0xf] %v1659
        %1664 = vst [vmem:[#allocation2 + $0x28] sm:$0xf] %v1660
        %1665 = vst [vmem:[#allocation2 + $0x30] sm:$0xf] %v1661
        %1666 = vst [vmem:[#allocation2 + $0x38] sm:$0xf] %v1662
        %1667 = vrot.lane.b32.xlu0 %v1459, 1
        %v1668 = vpop.permute.xlu0 %1667
        %1669 = vrot.lane.b32.xlu0 %v1460, 1
        %v1670 = vpop.permute.xlu0 %1669
        %1671 = vrot.lane.b32.xlu0 %v1461, 1
        %v1672 = vpop.permute.xlu0 %1671
        %1673 = vrot.lane.b32.xlu0 %v1462, 1
        %v1674 = vpop.permute.xlu0 %1673
        %v1675 = vsel %vm848, %v1672, %v1674
        %v1676 = vsel %vm848, %v1670, %v1672
        %v1677 = vsel %vm848, %v1668, %v1670
        %v1678 = vsel %vm848, %v1674, %v1668
        %v1679 = vld [vmem:[%s853] ss:$8 sm:$0xf]
        %v1681 = vlaneseq
        %v1682 = vshrl.u32 %v1681, 7
        %v1683 = vsub.s32 0, %v1682
        %v1684 = vrot.slane %v1679, %v1683
        %v1685 = vlaneseq
        %v1686 = vshrl.u32 %v1685, 7
        %v1687 = vsub.s32 1, %v1686
        %v1688 = vrot.slane %v1679, %v1687
        %v1689 = vlaneseq
        %v1690 = vshrl.u32 %v1689, 7
        %v1691 = vsub.s32 2, %v1690
        %v1692 = vrot.slane %v1679, %v1691
        %v1693 = vlaneseq
        %v1694 = vshrl.u32 %v1693, 7
        %v1695 = vsub.s32 3, %v1694
        %v1696 = vrot.slane %v1679, %v1695
        %v1701 = vmul.f32 %v1678, %v1684
        %v1702 = vmul.f32 %v1677, %v1688
        %v1703 = vmul.f32 %v1676, %v1692
        %v1704 = vmul.f32 %v1675, %v1696
        %v1709 = vrot.slane %v1701, 4
        %v1710 = vrot.slane %v1702, 4
        %v1711 = vrot.slane %v1703, 4
        %v1712 = vrot.slane %v1704, 4
        %1717 = vst [vmem:[#allocation2 + $0x20] sm:$0xf0] %v1709
        %1718 = vst [vmem:[#allocation2 + $0x28] sm:$0xf0] %v1710
        %1719 = vst [vmem:[#allocation2 + $0x30] sm:$0xf0] %v1711
        %1720 = vst [vmem:[#allocation2 + $0x38] sm:$0xf0] %v1712
        %1721 = vst [vmem:[#allocation2 + $0x40] sm:$0xf] %v1459
        %1722 = vst [vmem:[#allocation2 + $0x48] sm:$0xf] %v1460
        %1723 = vst [vmem:[#allocation2 + $0x50] sm:$0xf] %v1461
        %1724 = vst [vmem:[#allocation2 + $0x58] sm:$0xf] %v1462
        %1725 = vrot.lane.b32.xlu0 %v1459, 127
        %v1726 = vpop.permute.xlu0 %1725
        %1727 = vrot.lane.b32.xlu0 %v1460, 127
        %v1728 = vpop.permute.xlu0 %1727
        %1729 = vrot.lane.b32.xlu0 %v1461, 127
        %v1730 = vpop.permute.xlu0 %1729
        %1731 = vrot.lane.b32.xlu0 %v1462, 127
        %v1732 = vpop.permute.xlu0 %1731
        %v1733 = vsel %vm1044, %v1730, %v1732
        %v1734 = vsel %vm1044, %v1728, %v1730
        %v1735 = vsel %vm1044, %v1726, %v1728
        %v1736 = vsel %vm1044, %v1732, %v1726
        %v1737 = vld [vmem:[%s1049] ss:$8 sm:$0xf]
        %v1739 = vlaneseq
        %v1740 = vshrl.u32 %v1739, 7
        %v1741 = vsub.s32 0, %v1740
        %v1742 = vrot.slane %v1737, %v1741
        %v1743 = vlaneseq
        %v1744 = vshrl.u32 %v1743, 7
        %v1745 = vsub.s32 1, %v1744
        %v1746 = vrot.slane %v1737, %v1745
        %v1747 = vlaneseq
        %v1748 = vshrl.u32 %v1747, 7
        %v1749 = vsub.s32 2, %v1748
        %v1750 = vrot.slane %v1737, %v1749
        %v1751 = vlaneseq
        %v1752 = vshrl.u32 %v1751, 7
        %v1753 = vsub.s32 3, %v1752
        %v1754 = vrot.slane %v1737, %v1753
        %v1759 = vmul.f32 %v1735, %v1742
        %v1760 = vmul.f32 %v1734, %v1746
        %v1761 = vmul.f32 %v1733, %v1750
        %v1762 = vmul.f32 %v1736, %v1754
        %v1767 = vrot.slane %v1759, 4
        %v1768 = vrot.slane %v1760, 4
        %v1769 = vrot.slane %v1761, 4
        %v1770 = vrot.slane %v1762, 4
        %1775 = vst [vmem:[#allocation2 + $0x40] sm:$0xf0] %v1767
        %1776 = vst [vmem:[#allocation2 + $0x48] sm:$0xf0] %v1768
        %1777 = vst [vmem:[#allocation2 + $0x50] sm:$0xf0] %v1769
        %1778 = vst [vmem:[#allocation2 + $0x58] sm:$0xf0] %v1770
        %1779 = vrot.lane.b32.xlu0 %v1459, 113
        %v1780 = vpop.permute.xlu0 %1779
        %1781 = vrot.lane.b32.xlu0 %v1460, 113
        %v1782 = vpop.permute.xlu0 %1781
        %1783 = vrot.lane.b32.xlu0 %v1461, 113
        %v1784 = vpop.permute.xlu0 %1783
        %1785 = vrot.lane.b32.xlu0 %v1462, 113
        %v1786 = vpop.permute.xlu0 %1785
        %v1787 = vsel %vm1144, %v1784, %v1786
        %v1788 = vsel %vm1144, %v1782, %v1784
        %v1789 = vsel %vm1144, %v1780, %v1782
        %v1790 = vsel %vm1144, %v1786, %v1780
        %v1791 = vld [vmem:[%s1149] ss:$8 sm:$0xf]
        %v1793 = vlaneseq
        %v1794 = vshrl.u32 %v1793, 7
        %v1795 = vsub.s32 0, %v1794
        %v1796 = vrot.slane %v1791, %v1795
        %v1797 = vlaneseq
        %v1798 = vshrl.u32 %v1797, 7
        %v1799 = vsub.s32 1, %v1798
        %v1800 = vrot.slane %v1791, %v1799
        %v1801 = vlaneseq
        %v1802 = vshrl.u32 %v1801, 7
        %v1803 = vsub.s32 2, %v1802
        %v1804 = vrot.slane %v1791, %v1803
        %v1805 = vlaneseq
        %v1806 = vshrl.u32 %v1805, 7
        %v1807 = vsub.s32 3, %v1806
        %v1808 = vrot.slane %v1791, %v1807
        %v1813 = vmul.f32 %v1789, %v1796
        %v1814 = vmul.f32 %v1788, %v1800
        %v1815 = vmul.f32 %v1787, %v1804
        %v1816 = vmul.f32 %v1790, %v1808
        %1817 = vst [vmem:[#allocation2 + $0x60] sm:$0xf] %v1813
        %1818 = vst [vmem:[#allocation2 + $0x68] sm:$0xf] %v1814
        %1819 = vst [vmem:[#allocation2 + $0x70] sm:$0xf] %v1815
        %1820 = vst [vmem:[#allocation2 + $0x78] sm:$0xf] %v1816
        %1821 = vrot.lane.b32.xlu0 %v1459, 112
        %v1822 = vpop.permute.xlu0 %1821
        %1823 = vrot.lane.b32.xlu0 %v1460, 112
        %v1824 = vpop.permute.xlu0 %1823
        %1825 = vrot.lane.b32.xlu0 %v1461, 112
        %v1826 = vpop.permute.xlu0 %1825
        %1827 = vrot.lane.b32.xlu0 %v1462, 112
        %v1828 = vpop.permute.xlu0 %1827
        %v1829 = vsel %vm1244, %v1826, %v1828
        %v1830 = vsel %vm1244, %v1824, %v1826
        %v1831 = vsel %vm1244, %v1822, %v1824
        %v1832 = vsel %vm1244, %v1828, %v1822
        %v1833 = vld [vmem:[%s1249] ss:$8 sm:$0xf]
        %v1835 = vlaneseq
        %v1836 = vshrl.u32 %v1835, 7
        %v1837 = vsub.s32 0, %v1836
        %v1838 = vrot.slane %v1833, %v1837
        %v1839 = vlaneseq
        %v1840 = vshrl.u32 %v1839, 7
        %v1841 = vsub.s32 1, %v1840
        %v1842 = vrot.slane %v1833, %v1841
        %v1843 = vlaneseq
        %v1844 = vshrl.u32 %v1843, 7
        %v1845 = vsub.s32 2, %v1844
        %v1846 = vrot.slane %v1833, %v1845
        %v1847 = vlaneseq
        %v1848 = vshrl.u32 %v1847, 7
        %v1849 = vsub.s32 3, %v1848
        %v1850 = vrot.slane %v1833, %v1849
        %v1855 = vmul.f32 %v1831, %v1838
        %v1856 = vmul.f32 %v1830, %v1842
        %v1857 = vmul.f32 %v1829, %v1846
        %v1858 = vmul.f32 %v1832, %v1850
        %v1863 = vrot.slane %v1855, 4
        %v1864 = vrot.slane %v1856, 4
        %v1865 = vrot.slane %v1857, 4
        %v1866 = vrot.slane %v1858, 4
        %1871 = vst [vmem:[#allocation2 + $0x60] sm:$0xf0] %v1863
        %1872 = vst [vmem:[#allocation2 + $0x68] sm:$0xf0] %v1864
        %1873 = vst [vmem:[#allocation2 + $0x70] sm:$0xf0] %v1865
        %1874 = vst [vmem:[#allocation2 + $0x78] sm:$0xf0] %v1866
        %1875 = vrot.lane.b32.xlu0 %v1459, 111
        %v1876 = vpop.permute.xlu0 %1875
        %1877 = vrot.lane.b32.xlu0 %v1460, 111
        %v1878 = vpop.permute.xlu0 %1877
        %1879 = vrot.lane.b32.xlu0 %v1461, 111
        %v1880 = vpop.permute.xlu0 %1879
        %1881 = vrot.lane.b32.xlu0 %v1462, 111
        %v1882 = vpop.permute.xlu0 %1881
        %v1883 = vsel %vm1344, %v1880, %v1882
        %v1884 = vsel %vm1344, %v1878, %v1880
        %v1885 = vsel %vm1344, %v1876, %v1878
        %v1886 = vsel %vm1344, %v1882, %v1876
        %v1887 = vld [vmem:[%s1349] ss:$8 sm:$0xf]
        %v1889 = vlaneseq
        %v1890 = vshrl.u32 %v1889, 7
        %v1891 = vsub.s32 0, %v1890
        %v1892 = vrot.slane %v1887, %v1891
        %v1893 = vlaneseq
        %v1894 = vshrl.u32 %v1893, 7
        %v1895 = vsub.s32 1, %v1894
        %v1896 = vrot.slane %v1887, %v1895
        %v1897 = vlaneseq
        %v1898 = vshrl.u32 %v1897, 7
        %v1899 = vsub.s32 2, %v1898
        %v1900 = vrot.slane %v1887, %v1899
        %v1901 = vlaneseq
        %v1902 = vshrl.u32 %v1901, 7
        %v1903 = vsub.s32 3, %v1902
        %v1904 = vrot.slane %v1887, %v1903
        %v1909 = vmul.f32 %v1885, %v1892
        %v1910 = vmul.f32 %v1884, %v1896
        %v1911 = vmul.f32 %v1883, %v1900
        %v1912 = vmul.f32 %v1886, %v1904
        %1913 = vst [vmem:[#allocation2 + $0x80] sm:$0xf] %v1909
        %1914 = vst [vmem:[#allocation2 + $0x88] sm:$0xf] %v1910
        %1915 = vst [vmem:[#allocation2 + $0x90] sm:$0xf] %v1911
        %1916 = vst [vmem:[#allocation2 + $0x98] sm:$0xf] %v1912
        %v1917 = vld [vmem:[%s8] sm:$0xf]
        %v1918 = vld [vmem:[#allocation2] sm:$0xff]
        %v1919 = vld [vmem:[#allocation2 + $0x8] sm:$0xff]
        %v1920 = vld [vmem:[#allocation2 + $0x10] sm:$0xff]
        %v1921 = vld [vmem:[#allocation2 + $0x18] sm:$0xff]
        %v1922 = vld [vmem:[#allocation2 + $0x20] sm:$0xff]
        %v1923 = vld [vmem:[#allocation2 + $0x28] sm:$0xff]
        %v1924 = vld [vmem:[#allocation2 + $0x30] sm:$0xff]
        %v1925 = vld [vmem:[#allocation2 + $0x38] sm:$0xff]
        %v1926 = vld [vmem:[#allocation2 + $0x40] sm:$0xff]
        %v1927 = vld [vmem:[#allocation2 + $0x48] sm:$0xff]
        %v1928 = vld [vmem:[#allocation2 + $0x50] sm:$0xff]
        %v1929 = vld [vmem:[#allocation2 + $0x58] sm:$0xff]
        %v1930 = vld [vmem:[#allocation2 + $0x60] sm:$0xff]
        %v1931 = vld [vmem:[#allocation2 + $0x68] sm:$0xff]
        %v1932 = vld [vmem:[#allocation2 + $0x70] sm:$0xff]
        %v1933 = vld [vmem:[#allocation2 + $0x78] sm:$0xff]
        %v1934 = vld [vmem:[#allocation2 + $0x80] sm:$0xf]
        %v1935 = vld [vmem:[#allocation2 + $0x88] sm:$0xf]
        %v1936 = vld [vmem:[#allocation2 + $0x90] sm:$0xf]
        %v1937 = vld [vmem:[#allocation2 + $0x98] sm:$0xf]
        %1939 = vset.pattern.permute.xlu0 0
        %1940 = vperm.xlu0 %1939, %v1550
        %v1941 = vpop.permute.xlu0 %1940
        %vm1943 = vcmask 293888
        %v1945 = vsel %vm1943, %v1917, 0
        %v1948 = vsel %vm1500, %v1934, 0
        %v1951 = vsel %vm1500, %v1935, 0
        %v1954 = vsel %vm1500, %v1936, 0
        %v1957 = vsel %vm1500, %v1937, 0
        %1959 = vmatprep.subr.mxu0 %v1919
        %1960 = vmatpush1.msra.mxu0 %v1918
        %1961 = vmatprep.subr.mxu0 %v1923
        %1962 = vmatpush1.msra.mxu0 %v1922
        %1963 = vmatprep.subr.mxu0 %v1927
        %1964 = vmatpush1.msra.mxu0 %v1926
        %1965 = vmatprep.subr.mxu0 %v1931
        %1966 = vmatpush1.msra.mxu0 %v1930
        %1967 = vmatprep.subr.mxu0 %v1951
        %1968 = vmatpush1.msra.mxu0 %v1948
        %1969 = vmatprep.subr.mxu0 0.0
        %1970 = vmatpush1.msra.mxu0 0.0
        %1971 = vmatprep.subr.mxu0 0.0
        %1972 = vmatpush1.msra.mxu0 0.0
        %1973 = vmatprep.subr.mxu0 0.0
        %1974 = vmatpush1.msra.mxu0 0.0
        %1975 = vmatprep.subr.mxu0 0.0
        %1976 = vmatpush1.msra.mxu0 0.0
        %1977 = vmatprep.subr.mxu0 0.0
        %1978 = vmatpush1.msra.mxu0 0.0
        %1979 = vmatprep.subr.mxu0 0.0
        %1980 = vmatpush1.msra.mxu0 0.0
        %1981 = vmatprep.subr.mxu0 0.0
        %1982 = vmatpush1.msra.mxu0 0.0
        %1983 = vmatprep.subr.mxu0 0.0
        %1984 = vmatpush1.msra.mxu0 0.0
        %1985 = vmatprep.subr.mxu0 0.0
        %1986 = vmatpush1.msra.mxu0 0.0
        %1987 = vmatprep.subr.mxu0 0.0
        %1988 = vmatpush1.msra.mxu0 0.0
        %1989 = vmatprep.subr.mxu0 0.0
        %1990 = vmatpush1.msra.mxu0 0.0
        %1991 = vmatprep.subr.mxu0 0.0
        %1992 = vmatpush1.msra.mxu0 0.0
        %1993 = vmatprep.subr.mxu0 0.0
        %1994 = vmatpush1.msra.mxu0 0.0
        %1995 = vmatprep.subr.mxu0 0.0
        %1996 = vmatpush1.msra.mxu0 0.0
        %1997 = vmatprep.subr.mxu0 0.0
        %1998 = vmatpush1.msra.mxu0 0.0
        %1999 = vmatprep.subr.mxu0 0.0
        %2000 = vmatpush1.msra.mxu0 0.0
        %2001 = vmatprep.subr.mxu0 0.0
        %2002 = vmatpush1.msra.mxu0 0.0
        %2003 = vmatprep.subr.mxu0 0.0
        %2004 = vmatpush1.msra.mxu0 0.0
        %2005 = vmatprep.subr.mxu0 0.0
        %2006 = vmatpush1.msra.mxu0 0.0
        %2007 = vmatprep.subr.mxu0 0.0
        %2008 = vmatpush1.msra.mxu0 0.0
        %2009 = vmatprep.subr.mxu0 0.0
        %2010 = vmatpush1.msra.mxu0 0.0
        %2011 = vmatprep.subr.mxu0 0.0
        %2012 = vmatpush1.msra.mxu0 0.0
        %2013 = vmatprep.subr.mxu0 0.0
        %2014 = vmatpush1.msra.mxu0 0.0
        %2015 = vmatprep.subr.mxu0 0.0
        %2016 = vmatpush1.msra.mxu0 0.0
        %2017 = vmatprep.subr.mxu0 0.0
        %2018 = vmatpush1.msra.mxu0 0.0
        %2019 = vmatprep.subr.mxu0 0.0
        %2020 = vmatpush1.msra.mxu0 0.0
        %2021 = vmatprep.subr.mxu0 0.0
        %2022 = vmatpush1.msra.mxu0 0.0
        %2023 = vmatprep.mubr.f32.mxu0 0.0
        %2024 = vmatmul.mubr.f32.gmra.mrb[0].mxu0 %v1945
        %v2025 = vpop.f32.mrb[0].mxu0
        %v2026 = vadd.f32 %v1941, %v2025
        %v2027 = vpop.f32.mrb[0].mxu0
        %v2028 = vadd.f32 %v1941, %v2027
        %2029 = vdwg.mxu0
        %2030 = vmatprep.subr.mxu0 %v1921
        %2031 = vmatpush1.msra.mxu0 %v1920
        %2032 = vmatprep.subr.mxu0 %v1925
        %2033 = vmatpush1.msra.mxu0 %v1924
        %2034 = vmatprep.subr.mxu0 %v1929
        %2035 = vmatpush1.msra.mxu0 %v1928
        %2036 = vmatprep.subr.mxu0 %v1933
        %2037 = vmatpush1.msra.mxu0 %v1932
        %2038 = vmatprep.subr.mxu0 %v1957
        %2039 = vmatpush1.msra.mxu0 %v1954
        %2040 = vmatprep.subr.mxu0 0.0
        %2041 = vmatpush1.msra.mxu0 0.0
        %2042 = vmatprep.subr.mxu0 0.0
        %2043 = vmatpush1.msra.mxu0 0.0
        %2044 = vmatprep.subr.mxu0 0.0
        %2045 = vmatpush1.msra.mxu0 0.0
        %2046 = vmatprep.subr.mxu0 0.0
        %2047 = vmatpush1.msra.mxu0 0.0
        %2048 = vmatprep.subr.mxu0 0.0
        %2049 = vmatpush1.msra.mxu0 0.0
        %2050 = vmatprep.subr.mxu0 0.0
        %2051 = vmatpush1.msra.mxu0 0.0
        %2052 = vmatprep.subr.mxu0 0.0
        %2053 = vmatpush1.msra.mxu0 0.0
        %2054 = vmatprep.subr.mxu0 0.0
        %2055 = vmatpush1.msra.mxu0 0.0
        %2056 = vmatprep.subr.mxu0 0.0
        %2057 = vmatpush1.msra.mxu0 0.0
        %2058 = vmatprep.subr.mxu0 0.0
        %2059 = vmatpush1.msra.mxu0 0.0
        %2060 = vmatprep.subr.mxu0 0.0
        %2061 = vmatpush1.msra.mxu0 0.0
        %2062 = vmatprep.subr.mxu0 0.0
        %2063 = vmatpush1.msra.mxu0 0.0
        %2064 = vmatprep.subr.mxu0 0.0
        %2065 = vmatpush1.msra.mxu0 0.0
        %2066 = vmatprep.subr.mxu0 0.0
        %2067 = vmatpush1.msra.mxu0 0.0
        %2068 = vmatprep.subr.mxu0 0.0
        %2069 = vmatpush1.msra.mxu0 0.0
        %2070 = vmatprep.subr.mxu0 0.0
        %2071 = vmatpush1.msra.mxu0 0.0
        %2072 = vmatprep.subr.mxu0 0.0
        %2073 = vmatpush1.msra.mxu0 0.0
        %2074 = vmatprep.subr.mxu0 0.0
        %2075 = vmatpush1.msra.mxu0 0.0
        %2076 = vmatprep.subr.mxu0 0.0
        %2077 = vmatpush1.msra.mxu0 0.0
        %2078 = vmatprep.subr.mxu0 0.0
        %2079 = vmatpush1.msra.mxu0 0.0
        %2080 = vmatprep.subr.mxu0 0.0
        %2081 = vmatpush1.msra.mxu0 0.0
        %2082 = vmatprep.subr.mxu0 0.0
        %2083 = vmatpush1.msra.mxu0 0.0
        %2084 = vmatprep.subr.mxu0 0.0
        %2085 = vmatpush1.msra.mxu0 0.0
        %2086 = vmatprep.subr.mxu0 0.0
        %2087 = vmatpush1.msra.mxu0 0.0
        %2088 = vmatprep.subr.mxu0 0.0
        %2089 = vmatpush1.msra.mxu0 0.0
        %2090 = vmatprep.subr.mxu0 0.0
        %2091 = vmatpush1.msra.mxu0 0.0
        %2092 = vmatprep.subr.mxu0 0.0
        %2093 = vmatpush1.msra.mxu0 0.0
        %2094 = vmatprep.mubr.f32.mxu0 0.0
        %2095 = vmatmul.mubr.f32.gmra.mrb[0].mxu0 %v1945
        %v2096 = vpop.f32.mrb[0].mxu0
        %v2097 = vadd.f32 %v1941, %v2096
        %v2098 = vpop.f32.mrb[0].mxu0
        %v2099 = vadd.f32 %v1941, %v2098
        %2100 = vdwg.mxu0
        %v2101 = vmul.f32 %v2026, 0.5
        %v2102 = vmul.f32 %v2028, 0.5
        %v2103 = vmul.f32 %v2097, 0.5
        %v2104 = vmul.f32 %v2099, 0.5
        %v2105 = vtanh.pop %v2101
        %v2106 = vtanh.pop %v2102
        %v2107 = vtanh.pop %v2103
        %v2108 = vtanh.pop %v2104
        %v2109 = vadd.f32 %v2105, 1.0
        %v2110 = vadd.f32 %v2106, 1.0
        %v2111 = vadd.f32 %v2107, 1.0
        %v2112 = vadd.f32 %v2108, 1.0
        %v2113 = vmul.f32 %v2109, 0.5
        %v2114 = vmul.f32 %v2110, 0.5
        %v2115 = vmul.f32 %v2111, 0.5
        %v2116 = vmul.f32 %v2112, 0.5
        %v2117 = vmul.f32 %v1459, %v1546
        %v2118 = vmul.f32 %v1460, %v1547
        %v2119 = vmul.f32 %v1461, %v1548
        %v2120 = vmul.f32 %v1462, %v1549
        %v2121 = vmul.f32 %v1486, %v2113
        %v2122 = vmul.f32 %v1487, %v2114
        %v2123 = vmul.f32 %v1488, %v2115
        %v2124 = vmul.f32 %v1489, %v2116
        %v2125 = vadd.f32 %v2117, %v2121
        %v2126 = vadd.f32 %v2118, %v2122
        %v2127 = vadd.f32 %v2119, %v2123
        %v2128 = vadd.f32 %v2120, %v2124
        %v2129 = vld [vmem:[%s13] sm:$0xf]
        %2130 = vrot.lane.b32.xlu0 %v2125, 17
        %v2131 = vpop.permute.xlu0 %2130
        %2132 = vrot.lane.b32.xlu0 %v2126, 17
        %v2133 = vpop.permute.xlu0 %2132
        %2134 = vrot.lane.b32.xlu0 %v2127, 17
        %v2135 = vpop.permute.xlu0 %2134
        %2136 = vrot.lane.b32.xlu0 %v2128, 17
        %v2137 = vpop.permute.xlu0 %2136
        %v2138 = vsel %vm549, %v2135, %v2137
        %v2139 = vsel %vm549, %v2133, %v2135
        %v2140 = vsel %vm549, %v2131, %v2133
        %v2141 = vsel %vm549, %v2137, %v2131
        %v2142 = vld [vmem:[#allocation7] ss:$8 sm:$0xf]
        %v2144 = vlaneseq
        %v2145 = vshrl.u32 %v2144, 7
        %v2146 = vsub.s32 0, %v2145
        %v2147 = vrot.slane %v2142, %v2146
        %v2148 = vlaneseq
        %v2149 = vshrl.u32 %v2148, 7
        %v2150 = vsub.s32 1, %v2149
        %v2151 = vrot.slane %v2142, %v2150
        %v2152 = vlaneseq
        %v2153 = vshrl.u32 %v2152, 7
        %v2154 = vsub.s32 2, %v2153
        %v2155 = vrot.slane %v2142, %v2154
        %v2156 = vlaneseq
        %v2157 = vshrl.u32 %v2156, 7
        %v2158 = vsub.s32 3, %v2157
        %v2159 = vrot.slane %v2142, %v2158
        %v2164 = vmul.f32 %v2141, %v2147
        %v2165 = vmul.f32 %v2140, %v2151
        %v2166 = vmul.f32 %v2139, %v2155
        %v2167 = vmul.f32 %v2138, %v2159
        %2168 = vst [vmem:[#allocation2] sm:$0xf] %v2164
        %2169 = vst [vmem:[#allocation2 + $0x8] sm:$0xf] %v2165
        %2170 = vst [vmem:[#allocation2 + $0x10] sm:$0xf] %v2166
        %2171 = vst [vmem:[#allocation2 + $0x18] sm:$0xf] %v2167
        %2172 = vrot.lane.b32.xlu0 %v2125, 16
        %v2173 = vpop.permute.xlu0 %2172
        %2174 = vrot.lane.b32.xlu0 %v2126, 16
        %v2175 = vpop.permute.xlu0 %2174
        %2176 = vrot.lane.b32.xlu0 %v2127, 16
        %v2177 = vpop.permute.xlu0 %2176
        %2178 = vrot.lane.b32.xlu0 %v2128, 16
        %v2179 = vpop.permute.xlu0 %2178
        %v2180 = vsel %vm648, %v2177, %v2179
        %v2181 = vsel %vm648, %v2175, %v2177
        %v2182 = vsel %vm648, %v2173, %v2175
        %v2183 = vsel %vm648, %v2179, %v2173
        %v2184 = vld [vmem:[%s653] ss:$8 sm:$0xf]
        %v2186 = vlaneseq
        %v2187 = vshrl.u32 %v2186, 7
        %v2188 = vsub.s32 0, %v2187
        %v2189 = vrot.slane %v2184, %v2188
        %v2190 = vlaneseq
        %v2191 = vshrl.u32 %v2190, 7
        %v2192 = vsub.s32 1, %v2191
        %v2193 = vrot.slane %v2184, %v2192
        %v2194 = vlaneseq
        %v2195 = vshrl.u32 %v2194, 7
        %v2196 = vsub.s32 2, %v2195
        %v2197 = vrot.slane %v2184, %v2196
        %v2198 = vlaneseq
        %v2199 = vshrl.u32 %v2198, 7
        %v2200 = vsub.s32 3, %v2199
        %v2201 = vrot.slane %v2184, %v2200
        %v2206 = vmul.f32 %v2183, %v2189
        %v2207 = vmul.f32 %v2182, %v2193
        %v2208 = vmul.f32 %v2181, %v2197
        %v2209 = vmul.f32 %v2180, %v2201
        %v2214 = vrot.slane %v2206, 4
        %v2215 = vrot.slane %v2207, 4
        %v2216 = vrot.slane %v2208, 4
        %v2217 = vrot.slane %v2209, 4
        %2222 = vst [vmem:[#allocation2] sm:$0xf0] %v2214
        %2223 = vst [vmem:[#allocation2 + $0x8] sm:$0xf0] %v2215
        %2224 = vst [vmem:[#allocation2 + $0x10] sm:$0xf0] %v2216
        %2225 = vst [vmem:[#allocation2 + $0x18] sm:$0xf0] %v2217
        %2226 = vrot.lane.b32.xlu0 %v2125, 15
        %v2227 = vpop.permute.xlu0 %2226
        %2228 = vrot.lane.b32.xlu0 %v2126, 15
        %v2229 = vpop.permute.xlu0 %2228
        %2230 = vrot.lane.b32.xlu0 %v2127, 15
        %v2231 = vpop.permute.xlu0 %2230
        %2232 = vrot.lane.b32.xlu0 %v2128, 15
        %v2233 = vpop.permute.xlu0 %2232
        %v2234 = vsel %vm748, %v2231, %v2233
        %v2235 = vsel %vm748, %v2229, %v2231
        %v2236 = vsel %vm748, %v2227, %v2229
        %v2237 = vsel %vm748, %v2233, %v2227
        %v2238 = vld [vmem:[%s753] ss:$8 sm:$0xf]
        %v2240 = vlaneseq
        %v2241 = vshrl.u32 %v2240, 7
        %v2242 = vsub.s32 0, %v2241
        %v2243 = vrot.slane %v2238, %v2242
        %v2244 = vlaneseq
        %v2245 = vshrl.u32 %v2244, 7
        %v2246 = vsub.s32 1, %v2245
        %v2247 = vrot.slane %v2238, %v2246
        %v2248 = vlaneseq
        %v2249 = vshrl.u32 %v2248, 7
        %v2250 = vsub.s32 2, %v2249
        %v2251 = vrot.slane %v2238, %v2250
        %v2252 = vlaneseq
        %v2253 = vshrl.u32 %v2252, 7
        %v2254 = vsub.s32 3, %v2253
        %v2255 = vrot.slane %v2238, %v2254
        %v2260 = vmul.f32 %v2237, %v2243
        %v2261 = vmul.f32 %v2236, %v2247
        %v2262 = vmul.f32 %v2235, %v2251
        %v2263 = vmul.f32 %v2234, %v2255
        %2264 = vst [vmem:[#allocation2 + $0x20] sm:$0xf] %v2260
        %2265 = vst [vmem:[#allocation2 + $0x28] sm:$0xf] %v2261
        %2266 = vst [vmem:[#allocation2 + $0x30] sm:$0xf] %v2262
        %2267 = vst [vmem:[#allocation2 + $0x38] sm:$0xf] %v2263
        %2268 = vrot.lane.b32.xlu0 %v2125, 1
        %v2269 = vpop.permute.xlu0 %2268
        %2270 = vrot.lane.b32.xlu0 %v2126, 1
        %v2271 = vpop.permute.xlu0 %2270
        %2272 = vrot.lane.b32.xlu0 %v2127, 1
        %v2273 = vpop.permute.xlu0 %2272
        %2274 = vrot.lane.b32.xlu0 %v2128, 1
        %v2275 = vpop.permute.xlu0 %2274
        %v2276 = vsel %vm848, %v2273, %v2275
        %v2277 = vsel %vm848, %v2271, %v2273
        %v2278 = vsel %vm848, %v2269, %v2271
        %v2279 = vsel %vm848, %v2275, %v2269
        %v2280 = vld [vmem:[%s853] ss:$8 sm:$0xf]
        %v2282 = vlaneseq
        %v2283 = vshrl.u32 %v2282, 7
        %v2284 = vsub.s32 0, %v2283
        %v2285 = vrot.slane %v2280, %v2284
        %v2286 = vlaneseq
        %v2287 = vshrl.u32 %v2286, 7
        %v2288 = vsub.s32 1, %v2287
        %v2289 = vrot.slane %v2280, %v2288
        %v2290 = vlaneseq
        %v2291 = vshrl.u32 %v2290, 7
        %v2292 = vsub.s32 2, %v2291
        %v2293 = vrot.slane %v2280, %v2292
        %v2294 = vlaneseq
        %v2295 = vshrl.u32 %v2294, 7
        %v2296 = vsub.s32 3, %v2295
        %v2297 = vrot.slane %v2280, %v2296
        %v2302 = vmul.f32 %v2279, %v2285
        %v2303 = vmul.f32 %v2278, %v2289
        %v2304 = vmul.f32 %v2277, %v2293
        %v2305 = vmul.f32 %v2276, %v2297
        %v2310 = vrot.slane %v2302, 4
        %v2311 = vrot.slane %v2303, 4
        %v2312 = vrot.slane %v2304, 4
        %v2313 = vrot.slane %v2305, 4
        %2318 = vst [vmem:[#allocation2 + $0x20] sm:$0xf0] %v2310
        %2319 = vst [vmem:[#allocation2 + $0x28] sm:$0xf0] %v2311
        %2320 = vst [vmem:[#allocation2 + $0x30] sm:$0xf0] %v2312
        %2321 = vst [vmem:[#allocation2 + $0x38] sm:$0xf0] %v2313
        %2322 = vst [vmem:[#allocation2 + $0x40] sm:$0xf] %v2125
        %2323 = vst [vmem:[#allocation2 + $0x48] sm:$0xf] %v2126
        %2324 = vst [vmem:[#allocation2 + $0x50] sm:$0xf] %v2127
        %2325 = vst [vmem:[#allocation2 + $0x58] sm:$0xf] %v2128
        %2326 = vrot.lane.b32.xlu0 %v2125, 127
        %v2327 = vpop.permute.xlu0 %2326
        %2328 = vrot.lane.b32.xlu0 %v2126, 127
        %v2329 = vpop.permute.xlu0 %2328
        %2330 = vrot.lane.b32.xlu0 %v2127, 127
        %v2331 = vpop.permute.xlu0 %2330
        %2332 = vrot.lane.b32.xlu0 %v2128, 127
        %v2333 = vpop.permute.xlu0 %2332
        %v2334 = vsel %vm1044, %v2331, %v2333
        %v2335 = vsel %vm1044, %v2329, %v2331
        %v2336 = vsel %vm1044, %v2327, %v2329
        %v2337 = vsel %vm1044, %v2333, %v2327
        %v2338 = vld [vmem:[%s1049] ss:$8 sm:$0xf]
        %v2340 = vlaneseq
        %v2341 = vshrl.u32 %v2340, 7
        %v2342 = vsub.s32 0, %v2341
        %v2343 = vrot.slane %v2338, %v2342
        %v2344 = vlaneseq
        %v2345 = vshrl.u32 %v2344, 7
        %v2346 = vsub.s32 1, %v2345
        %v2347 = vrot.slane %v2338, %v2346
        %v2348 = vlaneseq
        %v2349 = vshrl.u32 %v2348, 7
        %v2350 = vsub.s32 2, %v2349
        %v2351 = vrot.slane %v2338, %v2350
        %v2352 = vlaneseq
        %v2353 = vshrl.u32 %v2352, 7
        %v2354 = vsub.s32 3, %v2353
        %v2355 = vrot.slane %v2338, %v2354
        %v2360 = vmul.f32 %v2336, %v2343
        %v2361 = vmul.f32 %v2335, %v2347
        %v2362 = vmul.f32 %v2334, %v2351
        %v2363 = vmul.f32 %v2337, %v2355
        %v2368 = vrot.slane %v2360, 4
        %v2369 = vrot.slane %v2361, 4
        %v2370 = vrot.slane %v2362, 4
        %v2371 = vrot.slane %v2363, 4
        %2376 = vst [vmem:[#allocation2 + $0x40] sm:$0xf0] %v2368
        %2377 = vst [vmem:[#allocation2 + $0x48] sm:$0xf0] %v2369
        %2378 = vst [vmem:[#allocation2 + $0x50] sm:$0xf0] %v2370
        %2379 = vst [vmem:[#allocation2 + $0x58] sm:$0xf0] %v2371
        %2380 = vrot.lane.b32.xlu0 %v2125, 113
        %v2381 = vpop.permute.xlu0 %2380
        %2382 = vrot.lane.b32.xlu0 %v2126, 113
        %v2383 = vpop.permute.xlu0 %2382
        %2384 = vrot.lane.b32.xlu0 %v2127, 113
        %v2385 = vpop.permute.xlu0 %2384
        %2386 = vrot.lane.b32.xlu0 %v2128, 113
        %v2387 = vpop.permute.xlu0 %2386
        %v2388 = vsel %vm1144, %v2385, %v2387
        %v2389 = vsel %vm1144, %v2383, %v2385
        %v2390 = vsel %vm1144, %v2381, %v2383
        %v2391 = vsel %vm1144, %v2387, %v2381
        %v2392 = vld [vmem:[%s1149] ss:$8 sm:$0xf]
        %v2394 = vlaneseq
        %v2395 = vshrl.u32 %v2394, 7
        %v2396 = vsub.s32 0, %v2395
        %v2397 = vrot.slane %v2392, %v2396
        %v2398 = vlaneseq
        %v2399 = vshrl.u32 %v2398, 7
        %v2400 = vsub.s32 1, %v2399
        %v2401 = vrot.slane %v2392, %v2400
        %v2402 = vlaneseq
        %v2403 = vshrl.u32 %v2402, 7
        %v2404 = vsub.s32 2, %v2403
        %v2405 = vrot.slane %v2392, %v2404
        %v2406 = vlaneseq
        %v2407 = vshrl.u32 %v2406, 7
        %v2408 = vsub.s32 3, %v2407
        %v2409 = vrot.slane %v2392, %v2408
        %v2414 = vmul.f32 %v2390, %v2397
        %v2415 = vmul.f32 %v2389, %v2401
        %v2416 = vmul.f32 %v2388, %v2405
        %v2417 = vmul.f32 %v2391, %v2409
        %2418 = vst [vmem:[#allocation2 + $0x60] sm:$0xf] %v2414
        %2419 = vst [vmem:[#allocation2 + $0x68] sm:$0xf] %v2415
        %2420 = vst [vmem:[#allocation2 + $0x70] sm:$0xf] %v2416
        %2421 = vst [vmem:[#allocation2 + $0x78] sm:$0xf] %v2417
        %2422 = vrot.lane.b32.xlu0 %v2125, 112
        %v2423 = vpop.permute.xlu0 %2422
        %2424 = vrot.lane.b32.xlu0 %v2126, 112
        %v2425 = vpop.permute.xlu0 %2424
        %2426 = vrot.lane.b32.xlu0 %v2127, 112
        %v2427 = vpop.permute.xlu0 %2426
        %2428 = vrot.lane.b32.xlu0 %v2128, 112
        %v2429 = vpop.permute.xlu0 %2428
        %v2430 = vsel %vm1244, %v2427, %v2429
        %v2431 = vsel %vm1244, %v2425, %v2427
        %v2432 = vsel %vm1244, %v2423, %v2425
        %v2433 = vsel %vm1244, %v2429, %v2423
        %v2434 = vld [vmem:[%s1249] ss:$8 sm:$0xf]
        %v2436 = vlaneseq
        %v2437 = vshrl.u32 %v2436, 7
        %v2438 = vsub.s32 0, %v2437
        %v2439 = vrot.slane %v2434, %v2438
        %v2440 = vlaneseq
        %v2441 = vshrl.u32 %v2440, 7
        %v2442 = vsub.s32 1, %v2441
        %v2443 = vrot.slane %v2434, %v2442
        %v2444 = vlaneseq
        %v2445 = vshrl.u32 %v2444, 7
        %v2446 = vsub.s32 2, %v2445
        %v2447 = vrot.slane %v2434, %v2446
        %v2448 = vlaneseq
        %v2449 = vshrl.u32 %v2448, 7
        %v2450 = vsub.s32 3, %v2449
        %v2451 = vrot.slane %v2434, %v2450
        %v2456 = vmul.f32 %v2432, %v2439
        %v2457 = vmul.f32 %v2431, %v2443
        %v2458 = vmul.f32 %v2430, %v2447
        %v2459 = vmul.f32 %v2433, %v2451
        %v2464 = vrot.slane %v2456, 4
        %v2465 = vrot.slane %v2457, 4
        %v2466 = vrot.slane %v2458, 4
        %v2467 = vrot.slane %v2459, 4
        %2472 = vst [vmem:[#allocation2 + $0x60] sm:$0xf0] %v2464
        %2473 = vst [vmem:[#allocation2 + $0x68] sm:$0xf0] %v2465
        %2474 = vst [vmem:[#allocation2 + $0x70] sm:$0xf0] %v2466
        %2475 = vst [vmem:[#allocation2 + $0x78] sm:$0xf0] %v2467
        %2476 = vrot.lane.b32.xlu0 %v2125, 111
        %v2477 = vpop.permute.xlu0 %2476
        %2478 = vrot.lane.b32.xlu0 %v2126, 111
        %v2479 = vpop.permute.xlu0 %2478
        %2480 = vrot.lane.b32.xlu0 %v2127, 111
        %v2481 = vpop.permute.xlu0 %2480
        %2482 = vrot.lane.b32.xlu0 %v2128, 111
        %v2483 = vpop.permute.xlu0 %2482
        %v2484 = vsel %vm1344, %v2481, %v2483
        %v2485 = vsel %vm1344, %v2479, %v2481
        %v2486 = vsel %vm1344, %v2477, %v2479
        %v2487 = vsel %vm1344, %v2483, %v2477
        %v2488 = vld [vmem:[%s1349] ss:$8 sm:$0xf]
        %v2490 = vlaneseq
        %v2491 = vshrl.u32 %v2490, 7
        %v2492 = vsub.s32 0, %v2491
        %v2493 = vrot.slane %v2488, %v2492
        %v2494 = vlaneseq
        %v2495 = vshrl.u32 %v2494, 7
        %v2496 = vsub.s32 1, %v2495
        %v2497 = vrot.slane %v2488, %v2496
        %v2498 = vlaneseq
        %v2499 = vshrl.u32 %v2498, 7
        %v2500 = vsub.s32 2, %v2499
        %v2501 = vrot.slane %v2488, %v2500
        %v2502 = vlaneseq
        %v2503 = vshrl.u32 %v2502, 7
        %v2504 = vsub.s32 3, %v2503
        %v2505 = vrot.slane %v2488, %v2504
        %v2510 = vmul.f32 %v2486, %v2493
        %v2511 = vmul.f32 %v2485, %v2497
        %v2512 = vmul.f32 %v2484, %v2501
        %v2513 = vmul.f32 %v2487, %v2505
        %2514 = vst [vmem:[#allocation2 + $0x80] sm:$0xf] %v2510
        %2515 = vst [vmem:[#allocation2 + $0x88] sm:$0xf] %v2511
        %2516 = vst [vmem:[#allocation2 + $0x90] sm:$0xf] %v2512
        %2517 = vst [vmem:[#allocation2 + $0x98] sm:$0xf] %v2513
        %v2518 = vld [vmem:[%s12] sm:$0xf]
        %v2519 = vld [vmem:[#allocation2] sm:$0xff]
        %v2520 = vld [vmem:[#allocation2 + $0x8] sm:$0xff]
        %v2521 = vld [vmem:[#allocation2 + $0x10] sm:$0xff]
        %v2522 = vld [vmem:[#allocation2 + $0x18] sm:$0xff]
        %v2523 = vld [vmem:[#allocation2 + $0x20] sm:$0xff]
        %v2524 = vld [vmem:[#allocation2 + $0x28] sm:$0xff]
        %v2525 = vld [vmem:[#allocation2 + $0x30] sm:$0xff]
        %v2526 = vld [vmem:[#allocation2 + $0x38] sm:$0xff]
        %v2527 = vld [vmem:[#allocation2 + $0x40] sm:$0xff]
        %v2528 = vld [vmem:[#allocation2 + $0x48] sm:$0xff]
        %v2529 = vld [vmem:[#allocation2 + $0x50] sm:$0xff]
        %v2530 = vld [vmem:[#allocation2 + $0x58] sm:$0xff]
        %v2531 = vld [vmem:[#allocation2 + $0x60] sm:$0xff]
        %v2532 = vld [vmem:[#allocation2 + $0x68] sm:$0xff]
        %v2533 = vld [vmem:[#allocation2 + $0x70] sm:$0xff]
        %v2534 = vld [vmem:[#allocation2 + $0x78] sm:$0xff]
        %v2535 = vld [vmem:[#allocation2 + $0x80] sm:$0xf]
        %v2536 = vld [vmem:[#allocation2 + $0x88] sm:$0xf]
        %v2537 = vld [vmem:[#allocation2 + $0x90] sm:$0xf]
        %v2538 = vld [vmem:[#allocation2 + $0x98] sm:$0xf]
        %2540 = vset.pattern.permute.xlu0 0
        %2541 = vperm.xlu0 %2540, %v2129
        %v2542 = vpop.permute.xlu0 %2541
        %v2545 = vsel %vm1943, %v2518, 0
        %v2548 = vsel %vm1500, %v2535, 0
        %v2551 = vsel %vm1500, %v2536, 0
        %v2554 = vsel %vm1500, %v2537, 0
        %v2557 = vsel %vm1500, %v2538, 0
        %2559 = vmatprep.subr.mxu0 %v2520
        %2560 = vmatpush1.msra.mxu0 %v2519
        %2561 = vmatprep.subr.mxu0 %v2524
        %2562 = vmatpush1.msra.mxu0 %v2523
        %2563 = vmatprep.subr.mxu0 %v2528
        %2564 = vmatpush1.msra.mxu0 %v2527
        %2565 = vmatprep.subr.mxu0 %v2532
        %2566 = vmatpush1.msra.mxu0 %v2531
        %2567 = vmatprep.subr.mxu0 %v2551
        %2568 = vmatpush1.msra.mxu0 %v2548
        %2569 = vmatprep.subr.mxu0 0.0
        %2570 = vmatpush1.msra.mxu0 0.0
        %2571 = vmatprep.subr.mxu0 0.0
        %2572 = vmatpush1.msra.mxu0 0.0
        %2573 = vmatprep.subr.mxu0 0.0
        %2574 = vmatpush1.msra.mxu0 0.0
        %2575 = vmatprep.subr.mxu0 0.0
        %2576 = vmatpush1.msra.mxu0 0.0
        %2577 = vmatprep.subr.mxu0 0.0
        %2578 = vmatpush1.msra.mxu0 0.0
        %2579 = vmatprep.subr.mxu0 0.0
        %2580 = vmatpush1.msra.mxu0 0.0
        %2581 = vmatprep.subr.mxu0 0.0
        %2582 = vmatpush1.msra.mxu0 0.0
        %2583 = vmatprep.subr.mxu0 0.0
        %2584 = vmatpush1.msra.mxu0 0.0
        %2585 = vmatprep.subr.mxu0 0.0
        %2586 = vmatpush1.msra.mxu0 0.0
        %2587 = vmatprep.subr.mxu0 0.0
        %2588 = vmatpush1.msra.mxu0 0.0
        %2589 = vmatprep.subr.mxu0 0.0
        %2590 = vmatpush1.msra.mxu0 0.0
        %2591 = vmatprep.subr.mxu0 0.0
        %2592 = vmatpush1.msra.mxu0 0.0
        %2593 = vmatprep.subr.mxu0 0.0
        %2594 = vmatpush1.msra.mxu0 0.0
        %2595 = vmatprep.subr.mxu0 0.0
        %2596 = vmatpush1.msra.mxu0 0.0
        %2597 = vmatprep.subr.mxu0 0.0
        %2598 = vmatpush1.msra.mxu0 0.0
        %2599 = vmatprep.subr.mxu0 0.0
        %2600 = vmatpush1.msra.mxu0 0.0
        %2601 = vmatprep.subr.mxu0 0.0
        %2602 = vmatpush1.msra.mxu0 0.0
        %2603 = vmatprep.subr.mxu0 0.0
        %2604 = vmatpush1.msra.mxu0 0.0
        %2605 = vmatprep.subr.mxu0 0.0
        %2606 = vmatpush1.msra.mxu0 0.0
        %2607 = vmatprep.subr.mxu0 0.0
        %2608 = vmatpush1.msra.mxu0 0.0
        %2609 = vmatprep.subr.mxu0 0.0
        %2610 = vmatpush1.msra.mxu0 0.0
        %2611 = vmatprep.subr.mxu0 0.0
        %2612 = vmatpush1.msra.mxu0 0.0
        %2613 = vmatprep.subr.mxu0 0.0
        %2614 = vmatpush1.msra.mxu0 0.0
        %2615 = vmatprep.subr.mxu0 0.0
        %2616 = vmatpush1.msra.mxu0 0.0
        %2617 = vmatprep.subr.mxu0 0.0
        %2618 = vmatpush1.msra.mxu0 0.0
        %2619 = vmatprep.subr.mxu0 0.0
        %2620 = vmatpush1.msra.mxu0 0.0
        %2621 = vmatprep.subr.mxu0 0.0
        %2622 = vmatpush1.msra.mxu0 0.0
        %2623 = vmatprep.mubr.f32.mxu0 0.0
        %2624 = vmatmul.mubr.f32.gmra.mrb[0].mxu0 %v2545
        %v2625 = vpop.f32.mrb[0].mxu0
        %v2626 = vadd.f32 %v2542, %v2625
        %v2627 = vpop.f32.mrb[0].mxu0
        %v2628 = vadd.f32 %v2542, %v2627
        %2629 = vdwg.mxu0
        %2630 = vmatprep.subr.mxu0 %v2522
        %2631 = vmatpush1.msra.mxu0 %v2521
        %2632 = vmatprep.subr.mxu0 %v2526
        %2633 = vmatpush1.msra.mxu0 %v2525
        %2634 = vmatprep.subr.mxu0 %v2530
        %2635 = vmatpush1.msra.mxu0 %v2529
        %2636 = vmatprep.subr.mxu0 %v2534
        %2637 = vmatpush1.msra.mxu0 %v2533
        %2638 = vmatprep.subr.mxu0 %v2557
        %2639 = vmatpush1.msra.mxu0 %v2554
        %2640 = vmatprep.subr.mxu0 0.0
        %2641 = vmatpush1.msra.mxu0 0.0
        %2642 = vmatprep.subr.mxu0 0.0
        %2643 = vmatpush1.msra.mxu0 0.0
        %2644 = vmatprep.subr.mxu0 0.0
        %2645 = vmatpush1.msra.mxu0 0.0
        %2646 = vmatprep.subr.mxu0 0.0
        %2647 = vmatpush1.msra.mxu0 0.0
        %2648 = vmatprep.subr.mxu0 0.0
        %2649 = vmatpush1.msra.mxu0 0.0
        %2650 = vmatprep.subr.mxu0 0.0
        %2651 = vmatpush1.msra.mxu0 0.0
        %2652 = vmatprep.subr.mxu0 0.0
        %2653 = vmatpush1.msra.mxu0 0.0
        %2654 = vmatprep.subr.mxu0 0.0
        %2655 = vmatpush1.msra.mxu0 0.0
        %2656 = vmatprep.subr.mxu0 0.0
        %2657 = vmatpush1.msra.mxu0 0.0
        %2658 = vmatprep.subr.mxu0 0.0
        %2659 = vmatpush1.msra.mxu0 0.0
        %2660 = vmatprep.subr.mxu0 0.0
        %2661 = vmatpush1.msra.mxu0 0.0
        %2662 = vmatprep.subr.mxu0 0.0
        %2663 = vmatpush1.msra.mxu0 0.0
        %2664 = vmatprep.subr.mxu0 0.0
        %2665 = vmatpush1.msra.mxu0 0.0
        %2666 = vmatprep.subr.mxu0 0.0
        %2667 = vmatpush1.msra.mxu0 0.0
        %2668 = vmatprep.subr.mxu0 0.0
        %2669 = vmatpush1.msra.mxu0 0.0
        %2670 = vmatprep.subr.mxu0 0.0
        %2671 = vmatpush1.msra.mxu0 0.0
        %2672 = vmatprep.subr.mxu0 0.0
        %2673 = vmatpush1.msra.mxu0 0.0
        %2674 = vmatprep.subr.mxu0 0.0
        %2675 = vmatpush1.msra.mxu0 0.0
        %2676 = vmatprep.subr.mxu0 0.0
        %2677 = vmatpush1.msra.mxu0 0.0
        %2678 = vmatprep.subr.mxu0 0.0
        %2679 = vmatpush1.msra.mxu0 0.0
        %2680 = vmatprep.subr.mxu0 0.0
        %2681 = vmatpush1.msra.mxu0 0.0
        %2682 = vmatprep.subr.mxu0 0.0
        %2683 = vmatpush1.msra.mxu0 0.0
        %2684 = vmatprep.subr.mxu0 0.0
        %2685 = vmatpush1.msra.mxu0 0.0
        %2686 = vmatprep.subr.mxu0 0.0
        %2687 = vmatpush1.msra.mxu0 0.0
        %2688 = vmatprep.subr.mxu0 0.0
        %2689 = vmatpush1.msra.mxu0 0.0
        %2690 = vmatprep.subr.mxu0 0.0
        %2691 = vmatpush1.msra.mxu0 0.0
        %2692 = vmatprep.subr.mxu0 0.0
        %2693 = vmatpush1.msra.mxu0 0.0
        %2694 = vmatprep.mubr.f32.mxu0 0.0
        %2695 = vmatmul.mubr.f32.gmra.mrb[0].mxu0 %v2545
        %v2696 = vpop.f32.mrb[0].mxu0
        %v2697 = vadd.f32 %v2542, %v2696
        %v2698 = vpop.f32.mrb[0].mxu0
        %v2699 = vadd.f32 %v2542, %v2698
        %2700 = vdwg.mxu0
        %v2701 = vmax.f32 %v2626, 0.0
        %v2702 = vmax.f32 %v2628, 0.0
        %v2703 = vmax.f32 %v2697, 0.0
        %v2704 = vmax.f32 %v2699, 0.0
        %v2705 = vmin.f32 %v2626, 0.0
        %v2706 = vmin.f32 %v2628, 0.0
        %v2707 = vmin.f32 %v2697, 0.0
        %v2708 = vmin.f32 %v2699, 0.0
        %v2709 = vstv %s514
        %v2710 = vmul.f32 %v2709, %v2705
        %v2711 = vmul.f32 %v2709, %v2706
        %v2712 = vmul.f32 %v2709, %v2707
        %v2713 = vmul.f32 %v2709, %v2708
        %v2714 = vadd.f32 %v2701, %v2710
        %v2715 = vadd.f32 %v2702, %v2711
        %v2716 = vadd.f32 %v2703, %v2712
        %v2717 = vadd.f32 %v2704, %v2713
        %v2720 = vcombine.low %v2714, %v2715
        %2722 = vst [vmem:[%s506] sm:$0xff] %v2720
        %v2725 = vcombine.low %v2716, %v2717
        %s2727 = scalar_lea.vmem %s506, 8 [#allocation10]
        %2728 = vst [vmem:[%s2727] sm:$0xff] %v2725
        %s2729 = sand.u32 %s362, 1
        %s2730 = scalar_lea.sflag [#allocation9], %s2729
        %s2731 = sand.u32 %s362, 1
        %s2732 = smul.addr %s2731, 16
        %s2733 = scalar_lea.vmem [#allocation10], %s2732
        // Predicated region
        $region85: #{tpu_custom_call.1} parent=79 // pred_check
          %p2734 = pneg %p372
        $region86: #{tpu_custom_call.1} parent=79 // pred_check_branch
          %2736 = sbr.rel (%p2734) target = $region88
        $region87: #{tpu_custom_call.1} parent=79 // pred_region
          %s2738 = ssub.s32 256, 256
          %2739 = vsyncadd %s2730, %s2738
          %s2740 = smul.addr %s34, 4
          %s2741 = smul.addr %s2740, 64
          %s2742 = scalar_lea.hbm %s15, %s2741
          %s2743 = sshll.u32 %s2733, 4
          %s2744 = int_to_ptr.vmem [resolvable:$true] %s2743
          %2749 = dma.vmem_to_hbm [thread:$0]  %s2744, 256, %s2742, %s2730, 128, 128, 8
        $region88: #{tpu_custom_call.1} parent=79 // pred_fallthru
          _
      $region80: #{tpu_custom_call.1} parent=5 // pred_fallthru
        _
      %p2750 = scmp.le.s32.totalorder 2, %s29
      // Predicated region
      $region89: #{tpu_custom_call.1} parent=5 // pred_check
        %p2751 = pneg %p2750
      $region90: #{tpu_custom_call.1} parent=5 // pred_check_branch
        %2753 = sbr.rel (%p2751) target = $region92
      $region91: #{tpu_custom_call.1} parent=5 // pred_region
        %s2754 = ssub.s32 %s29, 2
        // Predicated region
        $region93: #{tpu_custom_call.1} parent=91 // pred_check
          %p2755 = pneg %p378
        $region94: #{tpu_custom_call.1} parent=91 // pred_check_branch
          %2757 = sbr.rel (%p2755) target = $region96
        $region95: #{tpu_custom_call.1} parent=91 // pred_region
          %s2758 = sand.u32 %s363, 1
          %s2759 = scalar_lea.sflag [#allocation9], %s2758
          %s2760 = sand.u32 %s363, 1
          %s2761 = smul.addr %s2760, 16
          %s2762 = scalar_lea.vmem [#allocation10], %s2761
          %2763 = dma.done %s2759, 256
        $region96: #{tpu_custom_call.1} parent=91 // pred_fallthru
          _
      $region92: #{tpu_custom_call.1} parent=5 // pred_fallthru
        _
    $region6: #{tpu_custom_call.1} parent=1 // loop_footer
      %s33 = sadd.s32 1, %s29
    $region7: #{tpu_custom_call.1} parent=1 // loop_footer_branch
      %28 = sbr.rel target = $region3
    $region8: #{tpu_custom_call.1} parent=1 // loop_exit
      _
    %2764 = vsyncpa [#allocation8], 1
    %s2765 = scalar_lea.sflag [#allocation8], 1
    %2766 = vsyncpa %s2765, 1
    %2767 = vsyncpa [#allocation9], 1
    %s2768 = scalar_lea.sflag [#allocation9], 1
    %2769 = vsyncpa %s2768, 1

</llo_original>
